<compile_context>
chip_gen: v5e
topology: v5e:2x2
jax: 0.10.0
libtpu: 0.0.40
codegen_flags: <defaults>
</compile_context>

<pallas_src>
import jax
import jax.numpy as jnp
from jax.experimental import pallas as pl
from jax.experimental.pallas import tpu as pltpu

_LANES = 128


def _round_up(v, m):
    return ((v + m - 1) // m) * m


def _vmem_limit_bytes():
    """Generation-aware VMEM budget (v5e/v6e: 128 MiB phys, v7x: 64 MiB/TC)."""
    try:
        phys = int(pltpu.get_tpu_info().vmem_capacity_bytes)
    except Exception:
        phys = 128 * 1024 * 1024
    if phys >= 100 * 1024 * 1024:
        return 96 * 1024 * 1024          # v5e / v6e
    return 40 * 1024 * 1024              # v7x


def _pick_row_tile(h, w_sp, cin_list, tco, out_bytes, budget_bytes):
    """Largest row tile whose per-step VMEM footprint fits the budget, then
    balanced so the last block wastes (almost) no rows."""
    cin = sum(cin_list)

    def step_bytes(t):
        inp = 2 * 2 * t * w_sp * cin            # bf16 input blocks (double buffered)
        tmp = 2 * t * w_sp * 4 * cin            # window + im2col patch temporaries
        acc = 4 * t * w_sp * tco                # f32 accumulator
        out = 2 * out_bytes * t * w_sp * tco    # output block (double buffered)
        wts = 2 * 2 * 9 * cin * tco             # resident weights (double buffered)
        return inp + tmp + acc + out + wts

    tr = max(1, min(256, h))
    while tr > 8 and step_bytes(tr) > budget_bytes:
        tr = max(8, tr // 2)
    nb = pl.cdiv(h, tr)
    return max(1, pl.cdiv(h, nb))


# ---------------------------------------------------------------------------
# Pallas kernel: fused 3x3 conv (kx folded into K) + folded-BN bias + ReLU.
# Border handling (top/bottom rows, left/right columns) is done in-kernel,
# so the HBM activations are never zero-padded.
# ---------------------------------------------------------------------------
def _make_conv_kernel(n_streams, tr, h_valid):
    def kernel(*refs):
        # refs: [x_top, x_main, x_bot] * n_streams, [w] * n_streams, b, out
        xs = refs[:3 * n_streams]
        ws = refs[3 * n_streams:4 * n_streams]
        b_ref = refs[4 * n_streams]
        o_ref = refs[4 * n_streams + 1]
        _, w_out, tco = o_ref.shape

        r0 = pl.program_id(1) * tr
        # Global row index of each row of the (tr+2)-row window; rows outside
        # [0, h_valid) act as the conv's zero padding (and hide any OOB/garbage
        # rows of the last, partially-filled block).
        row = jax.lax.broadcasted_iota(jnp.int32, (tr + 2, 1, 1), 0) + (r0 - 1)
        valid = jnp.logical_and(row >= 0, row < h_valid)

        acc = jnp.zeros((tr * w_out, tco), jnp.float32)
        for s in range(n_streams):
            xt, xm, xb = xs[3 * s], xs[3 * s + 1], xs[3 * s + 2]
            c = xm.shape[-1]
            win = jnp.concatenate([xt[...], xm[...], xb[...]], axis=0)  # (tr+2,W,C)
            win = jnp.where(valid, win, jnp.zeros_like(win))
            zc = jnp.zeros((tr + 2, 1, c), win.dtype)
            win = jnp.concatenate([zc, win, zc], axis=1)                # (tr+2,W+2,C)
            for ky in range(3):
                rows_k = win[ky:ky + tr]                                # (tr,W+2,C)
                # width-im2col: kx folded into the matmul K dimension (3C).
                patch = jnp.concatenate(
                    [rows_k[:, 0:w_out, :],
                     rows_k[:, 1:w_out + 1, :],
                     rows_k[:, 2:w_out + 2, :]], axis=-1)
                acc = acc + jnp.dot(patch.reshape(tr * w_out, 3 * c), ws[s][ky],
                                    preferred_element_type=jnp.float32)
        acc = acc + b_ref[...]
        o_ref[...] = jnp.maximum(acc, 0.0).reshape(tr, w_out, tco).astype(o_ref.dtype)

    return kernel


# ---------------------------------------------------------------------------
# Wrapper: Conv2d(k=3, pad=1, bias=False) + BatchNorm2d(eval) + ReLU, NHWC.
# `xs` is a list of input streams (their channels are implicitly concatenated
# in order), `w_parts` the matching OIHW weight slices.
# ---------------------------------------------------------------------------
def conv3x3_bn_relu_nhwc(xs, w_parts, gamma, beta, mean, var, *, eps=1e-5,
                         h_valid=None, out_dtype=jnp.bfloat16,
                         compute_dtype=jnp.bfloat16):
    n, h_phys, w_sp, _ = xs[0].shape
    h_valid = h_phys if h_valid is None else h_valid
    xs = [x.astype(compute_dtype) for x in xs]

    cout = w_parts[0].shape[0]
    coutp = _round_up(cout, _LANES)

    # Fold BN (eval mode) into conv weights / bias, in f32.
    scale = gamma / jnp.sqrt(var + eps)
    b_arr = jnp.pad(beta - mean * scale, (0, coutp - cout))
    b_arr = b_arr.reshape(1, coutp).astype(jnp.float32)

    w_folded = []
    for wp, x in zip(w_parts, xs):
        ci_x, ci_w = x.shape[-1], wp.shape[1]
        wf = wp.astype(jnp.float32) * scale[:, None, None, None]     # (Co,Ci,3,3)
        wf = jnp.transpose(wf, (2, 3, 1, 0))                          # (3,3,Ci,Co)
        wf = jnp.pad(wf, ((0, 0), (0, 0), (0, ci_x - ci_w), (0, coutp - cout)))
        w_folded.append(wf.reshape(3, 3 * ci_x, coutp).astype(compute_dtype))

    vmem_limit = _vmem_limit_bytes()
    tco_max = 512 if vmem_limit > 64 * 1024 * 1024 else 256
    tco = coutp
    if coutp > tco_max:
        tco = _LANES
        for cand in range(tco_max, _LANES - 1, -_LANES):
            if coutp % cand == 0:
                tco = cand
                break
    n_ct = coutp // tco

    out_bytes = jnp.dtype(out_dtype).itemsize
    tr = _pick_row_tile(h_valid, w_sp, [x.shape[-1] for x in xs], tco,
                        out_bytes, int(0.6 * vmem_limit))
    rb = pl.cdiv(h_valid, tr)
    rows_out = rb * tr

    in_specs = []
    for x in xs:
        c_i = x.shape[-1]
        in_specs += [
            # 1-row top halo (clamped; masked in-kernel when it maps to row<0).
            pl.BlockSpec((None, 1, w_sp, c_i),
                         lambda bi, ri, ci: (bi, jnp.maximum(ri * tr - 1, 0), 0, 0)),
            # main row block.
            pl.BlockSpec((None, tr, w_sp, c_i),
                         lambda bi, ri, ci: (bi, ri, 0, 0)),
            # 1-row bottom halo (clamped; masked in-kernel when it maps >= H).
            pl.BlockSpec((None, 1, w_sp, c_i),
                         lambda bi, ri, ci: (bi, jnp.minimum((ri + 1) * tr,
                                                             h_valid - 1), 0, 0)),
        ]
    for wf in w_folded:
        # Index-constant along (bi, ri): weights stay resident across steps.
        in_specs.append(pl.BlockSpec((3, wf.shape[1], tco),
                                     lambda bi, ri, ci: (0, 0, ci)))
    in_specs.append(pl.BlockSpec((1, tco), lambda bi, ri, ci: (0, ci)))

    out_spec = pl.BlockSpec((None, tr, w_sp, tco),
                            lambda bi, ri, ci: (bi, ri, 0, ci))

    flops = 2 * n * rows_out * w_sp * sum(9 * x.shape[-1] for x in xs) * coutp
    bytes_accessed = (sum(x.size * x.dtype.itemsize for x in xs)
                      + sum(w.size * w.dtype.itemsize for w in w_folded)
                      + n * rows_out * w_sp * coutp * out_bytes)

    args = []
    for x in xs:
        args += [x, x, x]
    args += w_folded + [b_arr]

    return pl.pallas_call(
        _make_conv_kernel(len(xs), tr, h_valid),
        out_shape=jax.ShapeDtypeStruct((n, rows_out, w_sp, coutp), out_dtype),
        grid_spec=pltpu.PrefetchScalarGridSpec(
            num_scalar_prefetch=0,
            grid=(n, rb, n_ct),
            in_specs=in_specs,
            out_specs=out_spec),
        compiler_params=pltpu.CompilerParams(
            dimension_semantics=("parallel", "parallel", "arbitrary"),
            vmem_limit_bytes=vmem_limit),
        cost_estimate=pl.CostEstimate(flops=int(flops), transcendentals=0,
                                      bytes_accessed=int(bytes_accessed)),
    )(*args)


# ---------------------------------------------------------------------------
# Gather-free bilinear 2x upsample (align_corners=True), NHWC, plain JAX.
# ---------------------------------------------------------------------------
def _interp_matrix_1d(n_in, n_out):
    if n_in == 1:
        return jnp.ones((n_out, 1), jnp.float32)
    pos = jnp.arange(n_out, dtype=jnp.float32) * ((n_in - 1) / (n_out - 1))
    lo = jnp.clip(jnp.floor(pos).astype(jnp.int32), 0, n_in - 2)
    frac = pos - lo.astype(jnp.float32)
    cols = jnp.arange(n_in, dtype=jnp.int32)[None, :]
    m = (jnp.where(cols == lo[:, None], 1.0 - frac[:, None], 0.0)
         + jnp.where(cols == lo[:, None] + 1, frac[:, None], 0.0))
    return m


def upsample2x_bilinear_align_corners_nhwc(x):
    n, h, w, c = x.shape
    my = _interp_matrix_1d(h, 2 * h)            # (2H, H)
    mx = _interp_matrix_1d(w, 2 * w)            # (2W, W)
    x = jnp.einsum('oh,nhwc->nowc', my, x)      # rows (MXU, no gathers)
    x = jnp.einsum('pw,nowc->nopc', mx, x)      # cols
    return x


# ---------------------------------------------------------------------------
# UpCorrected forward (bilinear=True): NCHW in / NCHW out.
# ---------------------------------------------------------------------------
def up_corrected_forward(params, x_up_nchw, x_skip_nchw):
    out_ch = params["w2"].shape[0]

    # Single layout change at entry; everything below stays NHWC.
    x_up = jnp.transpose(x_up_nchw, (0, 2, 3, 1))
    x_skip = jnp.transpose(x_skip_nchw, (0, 2, 3, 1))

    x_up = upsample2x_bilinear_align_corners_nhwc(x_up)

    dy = x_skip.shape[1] - x_up.shape[1]
    dx = x_skip.shape[2] - x_up.shape[2]
    if dy or dx:
        x_up = jnp.pad(x_up, ((0, 0),
                              (dy // 2, dy - dy // 2),
                              (dx // 2, dx - dx // 2),
                              (0, 0)))

    x_skip = x_skip.astype(jnp.bfloat16)
    x_up = x_up.astype(jnp.bfloat16)

    n, rows, cols, cs = x_skip.shape
    w1_skip = params["w1"][:, :cs]     # torch.cat([x_skip, x_up], dim=1) order
    w1_up = params["w1"][:, cs:]

    # conv1: fused concat (two input streams, split weights); output keeps its
    # 128-lane channel padding and bf16 dtype for a lane-dense conv2 input.
    h1 = conv3x3_bn_relu_nhwc(
        [x_skip, x_up], [w1_skip, w1_up],
        params["g1"], params["b1"], params["m1"], params["v1"],
        h_valid=rows, out_dtype=jnp.bfloat16)

    y = conv3x3_bn_relu_nhwc(
        [h1], [params["w2"]],
        params["g2"], params["b2"], params["m2"], params["v2"],
        h_valid=rows, out_dtype=jnp.float32)

    y = y[:, :rows, :, :out_ch]                 # drop row/channel padding once
    return jnp.transpose(y, (0, 3, 1, 2))       # back to NCHW once


# ---------------------------------------------------------------------------
# Params + pure-JAX f32 reference (sanity check).
# ---------------------------------------------------------------------------
def init_params(key, in_ch_up, in_ch_skip, out_ch_conv):
    cin = in_ch_up + in_ch_skip
    mid = out_ch_conv
    ks = jax.random.split(key, 10)
    return {
        "w1": jax.random.normal(ks[0], (mid, cin, 3, 3), jnp.float32) * 0.1,
        "g1": 1.0 + 0.1 * jax.random.normal(ks[1], (mid,), jnp.float32),
        "b1": 0.1 * jax.random.normal(ks[2], (mid,), jnp.float32),
        "m1": 0.1 * jax.random.normal(ks[3], (mid,), jnp.float32),
        "v1": 0.5 + jnp.abs(jax.random.normal(ks[4], (mid,), jnp.float32)),
        "w2": jax.random.normal(ks[5], (out_ch_conv, mid, 3, 3), jnp.float32) * 0.1,
        "g2": 1.0 + 0.1 * jax.random.normal(ks[6], (out_ch_conv,), jnp.float32),
        "b2": 0.1 * jax.random.normal(ks[7], (out_ch_conv,), jnp.float32),
        "m2": 0.1 * jax.random.normal(ks[8], (out_ch_conv,), jnp.float32),
        "v2": 0.5 + jnp.abs(jax.random.normal(ks[9], (out_ch_conv,), jnp.float32)),
    }


def _reference_forward(params, x_up, x_skip, eps=1e-5):
    def upsample(x):                                    # NCHW, align_corners=True
        n, c, h, w = x.shape
        def coords(ni, no):
            if ni == 1:
                return jnp.zeros((no,), jnp.float32)
            return jnp.arange(no, dtype=jnp.float32) * (ni - 1) / (no - 1)
        ys, xs = coords(h, 2 * h), coords(w, 2 * w)
        y0 = jnp.floor(ys).astype(jnp.int32); y1 = jnp.minimum(y0 + 1, h - 1)
        x0 = jnp.floor(xs).astype(jnp.int32); x1 = jnp.minimum(x0 + 1, w - 1)
        wy = (ys - y0)[None, None, :, None]
        wx = (xs - x0)[None, None, None, :]
        v = jnp.take(x, y0, axis=2) * (1 - wy) + jnp.take(x, y1, axis=2) * wy
        return jnp.take(v, x0, axis=3) * (1 - wx) + jnp.take(v, x1, axis=3) * wx

    def conv_bn_relu(x, w, g, b, m, v):                 # NCHW
        y = jax.lax.conv_general_dilated(
            x, w, (1, 1), 'SAME', dimension_numbers=('NCHW', 'OIHW', 'NCHW'))
        s = (g / jnp.sqrt(v + eps))[None, :, None, None]
        y = (y - m[None, :, None, None]) * s + b[None, :, None, None]
        return jnp.maximum(y, 0.0)

    xu = upsample(x_up)
    dy = x_skip.shape[2] - xu.shape[2]
    dx = x_skip.shape[3] - xu.shape[3]
    xu = jnp.pad(xu, ((0, 0), (0, 0),
                      (dy // 2, dy - dy // 2), (dx // 2, dx - dx // 2)))
    x = jnp.concatenate([x_skip, xu], axis=1)
    h = conv_bn_relu(x, params["w1"], params["g1"], params["b1"],
                     params["m1"], params["v1"])
    return conv_bn_relu(h, params["w2"], params["g2"], params["b2"],
                        params["m2"], params["v2"])


if __name__ == "__main__":
    key = jax.random.PRNGKey(0)
    k_up, k_skip, k_par = jax.random.split(key, 3)

    in_ch_up, in_ch_skip, out_ch_conv = 4, 4, 8
    N, H, W = 2, 8, 8                       # x_up spatial; skip is 2x

    x_up = jax.random.normal(k_up, (N, in_ch_up, H, W), jnp.float32)
    x_skip = jax.random.normal(k_skip, (N, in_ch_skip, 2 * H, 2 * W), jnp.float32)
    params = init_params(k_par, in_ch_up, in_ch_skip, out_ch_conv)

    fwd = jax.jit(up_corrected_forward)
    y = fwd(params, x_up, x_skip)
    jax.block_until_ready(y)
    assert y.shape == (N, out_ch_conv, 2 * H, 2 * W), y.shape

    # Sanity check against a pure-JAX f32 reference (loose tol: bf16 matmuls).
    y_ref = _reference_forward(params, x_up, x_skip)
    err = float(jnp.max(jnp.abs(y - y_ref)))
    assert err < 0.2, f"max abs error vs reference: {err}"

    print("KERNEL_OK")
</pallas_src>

<mosaic_0001>
module attributes {stable_mosaic.version = 11 : i64} {
  func.func @kernel(%arg0: i32, %arg1: i32, %arg2: i32, %arg3: memref<1x1x16x4xbf16, #tpu.memory_space<vmem>>, %arg4: memref<1x16x16x4xbf16, #tpu.memory_space<vmem>>, %arg5: memref<1x1x16x4xbf16, #tpu.memory_space<vmem>>, %arg6: memref<1x1x16x4xbf16, #tpu.memory_space<vmem>>, %arg7: memref<1x16x16x4xbf16, #tpu.memory_space<vmem>>, %arg8: memref<1x1x16x4xbf16, #tpu.memory_space<vmem>>, %arg9: memref<3x12x128xbf16, #tpu.memory_space<vmem>>, %arg10: memref<3x12x128xbf16, #tpu.memory_space<vmem>>, %arg11: memref<1x128xf32, #tpu.memory_space<vmem>>, %arg12: memref<1x16x16x128xbf16, #tpu.memory_space<vmem>>) attributes {dimension_semantics = [#tpu.dimension_semantics<parallel>, #tpu.dimension_semantics<parallel>, #tpu.dimension_semantics<arbitrary>], iteration_bounds = array<i64: 2, 1, 1>, scalar_prefetch = 0 : i64, scratch_operands = 0 : i64, tpu.core_type = #tpu.core_type<tc>, window_params = [{transform_indices = @transform_0, window_bounds = array<i64: 1, 1, 16, 4>}, {transform_indices = @transform_1, window_bounds = array<i64: 1, 16, 16, 4>}, {transform_indices = @transform_2, window_bounds = array<i64: 1, 1, 16, 4>}, {transform_indices = @transform_3, window_bounds = array<i64: 1, 1, 16, 4>}, {transform_indices = @transform_4, window_bounds = array<i64: 1, 16, 16, 4>}, {transform_indices = @transform_5, window_bounds = array<i64: 1, 1, 16, 4>}, {transform_indices = @transform_6, window_bounds = array<i64: 3, 12, 128>}, {transform_indices = @transform_7, window_bounds = array<i64: 3, 12, 128>}, {transform_indices = @transform_8, window_bounds = array<i64: 1, 128>}, {transform_indices = @transform_9, window_bounds = array<i64: 1, 16, 16, 128>}]} {
    %c16_i32 = arith.constant 16 : i32
    %0 = arith.muli %arg1, %c16_i32 : i32
    %1 = tpu.iota {dimensions = array<i32: 0>} : vector<18x1x1xi32>
    %c1_i32 = arith.constant 1 : i32
    %2 = arith.subi %0, %c1_i32 : i32
    %3 = vector.broadcast %2 : i32 to vector<18x1x1xi32>
    %4 = arith.addi %1, %3 : vector<18x1x1xi32>
    %c0_i32 = arith.constant 0 : i32
    %5 = vector.broadcast %c0_i32 : i32 to vector<18x1x1xi32>
    %6 = arith.cmpi sge, %4, %5 : vector<18x1x1xi32>
    %c16_i32_0 = arith.constant 16 : i32
    %7 = vector.broadcast %c16_i32_0 : i32 to vector<18x1x1xi32>
    %8 = arith.cmpi slt, %4, %7 : vector<18x1x1xi32>
    %9 = arith.andi %6, %8 : vector<18x1x1xi1>
    %cst = arith.constant 0.000000e+00 : f32
    %10 = vector.broadcast %cst : f32 to vector<256x128xf32>
    %c0 = arith.constant 0 : index
    %c0_1 = arith.constant 0 : index
    %c0_2 = arith.constant 0 : index
    %c0_3 = arith.constant 0 : index
    %11 = vector.load %arg3[%c0, %c0_1, %c0_2, %c0_3] : memref<1x1x16x4xbf16, #tpu.memory_space<vmem>>, vector<1x1x16x4xbf16>
    %12 = vector.shape_cast %11 : vector<1x1x16x4xbf16> to vector<1x16x4xbf16>
    %c0_4 = arith.constant 0 : index
    %c0_5 = arith.constant 0 : index
    %c0_6 = arith.constant 0 : index
    %c0_7 = arith.constant 0 : index
    %13 = vector.load %arg4[%c0_4, %c0_5, %c0_6, %c0_7] : memref<1x16x16x4xbf16, #tpu.memory_space<vmem>>, vector<1x16x16x4xbf16>
    %14 = vector.shape_cast %13 : vector<1x16x16x4xbf16> to vector<16x16x4xbf16>
    %c0_8 = arith.constant 0 : index
    %c0_9 = arith.constant 0 : index
    %c0_10 = arith.constant 0 : index
    %c0_11 = arith.constant 0 : index
    %15 = vector.load %arg5[%c0_8, %c0_9, %c0_10, %c0_11] : memref<1x1x16x4xbf16, #tpu.memory_space<vmem>>, vector<1x1x16x4xbf16>
    %16 = vector.shape_cast %15 : vector<1x1x16x4xbf16> to vector<1x16x4xbf16>
    %17 = tpu.concatenate %12, %14, %16 in 0 : vector<1x16x4xbf16>, vector<16x16x4xbf16>, vector<1x16x4xbf16> -> vector<18x16x4xbf16>
    %cst_12 = arith.constant 0.000000e+00 : bf16
    %18 = vector.broadcast %cst_12 : bf16 to vector<18x16x4xbf16>
    %19 = vector.shape_cast %9 : vector<18x1x1xi1> to vector<18x1x1xi1>
    %20 = vector.broadcast %19 : vector<18x1x1xi1> to vector<18x16x4xi1>
    %21 = arith.select %20, %17, %18 : vector<18x16x4xi1>, vector<18x16x4xbf16>
    %cst_13 = arith.constant 0.000000e+00 : bf16
    %22 = vector.broadcast %cst_13 : bf16 to vector<18x1x4xbf16>
    %23 = tpu.concatenate %22, %21, %22 in 1 : vector<18x1x4xbf16>, vector<18x16x4xbf16>, vector<18x1x4xbf16> -> vector<18x18x4xbf16>
    %24 = vector.extract_strided_slice %23 {offsets = [0, 0, 0], sizes = [16, 18, 4], strides = [1, 1, 1]} : vector<18x18x4xbf16> to vector<16x18x4xbf16>
    %25 = vector.extract_strided_slice %24 {offsets = [0, 0, 0], sizes = [16, 16, 4], strides = [1, 1, 1]} : vector<16x18x4xbf16> to vector<16x16x4xbf16>
    %26 = vector.extract_strided_slice %24 {offsets = [0, 1, 0], sizes = [16, 16, 4], strides = [1, 1, 1]} : vector<16x18x4xbf16> to vector<16x16x4xbf16>
    %27 = vector.extract_strided_slice %24 {offsets = [0, 2, 0], sizes = [16, 16, 4], strides = [1, 1, 1]} : vector<16x18x4xbf16> to vector<16x16x4xbf16>
    %28 = tpu.concatenate %25, %26, %27 in 2 : vector<16x16x4xbf16>, vector<16x16x4xbf16>, vector<16x16x4xbf16> -> vector<16x16x12xbf16>
    %29 = vector.shape_cast %28 : vector<16x16x12xbf16> to vector<256x12xbf16>
    %c0_14 = arith.constant 0 : index
    %c0_15 = arith.constant 0 : index
    %c0_16 = arith.constant 0 : index
    %30 = vector.load %arg9[%c0_14, %c0_15, %c0_16] : memref<3x12x128xbf16, #tpu.memory_space<vmem>>, vector<1x12x128xbf16>
    %31 = vector.shape_cast %30 : vector<1x12x128xbf16> to vector<12x128xbf16>
    %cst_17 = arith.constant dense<0.000000e+00> : vector<256x128xf32>
    %32 = tpu.matmul %29, %31, %cst_17 {dimension_numbers = #tpu.dot_dimension_numbers<[1], [0], [0], [1], [0, 0, 1, 1], [], []>} : vector<256x12xbf16>, vector<12x128xbf16>, vector<256x128xf32> -> vector<256x128xf32>
    %33 = arith.addf %10, %32 : vector<256x128xf32>
    %34 = vector.extract_strided_slice %23 {offsets = [1, 0, 0], sizes = [16, 18, 4], strides = [1, 1, 1]} : vector<18x18x4xbf16> to vector<16x18x4xbf16>
    %35 = vector.extract_strided_slice %34 {offsets = [0, 0, 0], sizes = [16, 16, 4], strides = [1, 1, 1]} : vector<16x18x4xbf16> to vector<16x16x4xbf16>
    %36 = vector.extract_strided_slice %34 {offsets = [0, 1, 0], sizes = [16, 16, 4], strides = [1, 1, 1]} : vector<16x18x4xbf16> to vector<16x16x4xbf16>
    %37 = vector.extract_strided_slice %34 {offsets = [0, 2, 0], sizes = [16, 16, 4], strides = [1, 1, 1]} : vector<16x18x4xbf16> to vector<16x16x4xbf16>
    %38 = tpu.concatenate %35, %36, %37 in 2 : vector<16x16x4xbf16>, vector<16x16x4xbf16>, vector<16x16x4xbf16> -> vector<16x16x12xbf16>
    %39 = vector.shape_cast %38 : vector<16x16x12xbf16> to vector<256x12xbf16>
    %c1 = arith.constant 1 : index
    %c0_18 = arith.constant 0 : index
    %c0_19 = arith.constant 0 : index
    %40 = vector.load %arg9[%c1, %c0_18, %c0_19] : memref<3x12x128xbf16, #tpu.memory_space<vmem>>, vector<1x12x128xbf16>
    %41 = vector.shape_cast %40 : vector<1x12x128xbf16> to vector<12x128xbf16>
    %cst_20 = arith.constant dense<0.000000e+00> : vector<256x128xf32>
    %42 = tpu.matmul %39, %41, %cst_20 {dimension_numbers = #tpu.dot_dimension_numbers<[1], [0], [0], [1], [0, 0, 1, 1], [], []>} : vector<256x12xbf16>, vector<12x128xbf16>, vector<256x128xf32> -> vector<256x128xf32>
    %43 = arith.addf %33, %42 : vector<256x128xf32>
    %44 = vector.extract_strided_slice %23 {offsets = [2, 0, 0], sizes = [16, 18, 4], strides = [1, 1, 1]} : vector<18x18x4xbf16> to vector<16x18x4xbf16>
    %45 = vector.extract_strided_slice %44 {offsets = [0, 0, 0], sizes = [16, 16, 4], strides = [1, 1, 1]} : vector<16x18x4xbf16> to vector<16x16x4xbf16>
    %46 = vector.extract_strided_slice %44 {offsets = [0, 1, 0], sizes = [16, 16, 4], strides = [1, 1, 1]} : vector<16x18x4xbf16> to vector<16x16x4xbf16>
    %47 = vector.extract_strided_slice %44 {offsets = [0, 2, 0], sizes = [16, 16, 4], strides = [1, 1, 1]} : vector<16x18x4xbf16> to vector<16x16x4xbf16>
    %48 = tpu.concatenate %45, %46, %47 in 2 : vector<16x16x4xbf16>, vector<16x16x4xbf16>, vector<16x16x4xbf16> -> vector<16x16x12xbf16>
    %49 = vector.shape_cast %48 : vector<16x16x12xbf16> to vector<256x12xbf16>
    %c2 = arith.constant 2 : index
    %c0_21 = arith.constant 0 : index
    %c0_22 = arith.constant 0 : index
    %50 = vector.load %arg9[%c2, %c0_21, %c0_22] : memref<3x12x128xbf16, #tpu.memory_space<vmem>>, vector<1x12x128xbf16>
    %51 = vector.shape_cast %50 : vector<1x12x128xbf16> to vector<12x128xbf16>
    %cst_23 = arith.constant dense<0.000000e+00> : vector<256x128xf32>
    %52 = tpu.matmul %49, %51, %cst_23 {dimension_numbers = #tpu.dot_dimension_numbers<[1], [0], [0], [1], [0, 0, 1, 1], [], []>} : vector<256x12xbf16>, vector<12x128xbf16>, vector<256x128xf32> -> vector<256x128xf32>
    %53 = arith.addf %43, %52 : vector<256x128xf32>
    %c0_24 = arith.constant 0 : index
    %c0_25 = arith.constant 0 : index
    %c0_26 = arith.constant 0 : index
    %c0_27 = arith.constant 0 : index
    %54 = vector.load %arg6[%c0_24, %c0_25, %c0_26, %c0_27] : memref<1x1x16x4xbf16, #tpu.memory_space<vmem>>, vector<1x1x16x4xbf16>
    %55 = vector.shape_cast %54 : vector<1x1x16x4xbf16> to vector<1x16x4xbf16>
    %c0_28 = arith.constant 0 : index
    %c0_29 = arith.constant 0 : index
    %c0_30 = arith.constant 0 : index
    %c0_31 = arith.constant 0 : index
    %56 = vector.load %arg7[%c0_28, %c0_29, %c0_30, %c0_31] : memref<1x16x16x4xbf16, #tpu.memory_space<vmem>>, vector<1x16x16x4xbf16>
    %57 = vector.shape_cast %56 : vector<1x16x16x4xbf16> to vector<16x16x4xbf16>
    %c0_32 = arith.constant 0 : index
    %c0_33 = arith.constant 0 : index
    %c0_34 = arith.constant 0 : index
    %c0_35 = arith.constant 0 : index
    %58 = vector.load %arg8[%c0_32, %c0_33, %c0_34, %c0_35] : memref<1x1x16x4xbf16, #tpu.memory_space<vmem>>, vector<1x1x16x4xbf16>
    %59 = vector.shape_cast %58 : vector<1x1x16x4xbf16> to vector<1x16x4xbf16>
    %60 = tpu.concatenate %55, %57, %59 in 0 : vector<1x16x4xbf16>, vector<16x16x4xbf16>, vector<1x16x4xbf16> -> vector<18x16x4xbf16>
    %cst_36 = arith.constant 0.000000e+00 : bf16
    %61 = vector.broadcast %cst_36 : bf16 to vector<18x16x4xbf16>
    %62 = vector.shape_cast %9 : vector<18x1x1xi1> to vector<18x1x1xi1>
    %63 = vector.broadcast %62 : vector<18x1x1xi1> to vector<18x16x4xi1>
    %64 = arith.select %63, %60, %61 : vector<18x16x4xi1>, vector<18x16x4xbf16>
    %cst_37 = arith.constant 0.000000e+00 : bf16
    %65 = vector.broadcast %cst_37 : bf16 to vector<18x1x4xbf16>
    %66 = tpu.concatenate %65, %64, %65 in 1 : vector<18x1x4xbf16>, vector<18x16x4xbf16>, vector<18x1x4xbf16> -> vector<18x18x4xbf16>
    %67 = vector.extract_strided_slice %66 {offsets = [0, 0, 0], sizes = [16, 18, 4], strides = [1, 1, 1]} : vector<18x18x4xbf16> to vector<16x18x4xbf16>
    %68 = vector.extract_strided_slice %67 {offsets = [0, 0, 0], sizes = [16, 16, 4], strides = [1, 1, 1]} : vector<16x18x4xbf16> to vector<16x16x4xbf16>
    %69 = vector.extract_strided_slice %67 {offsets = [0, 1, 0], sizes = [16, 16, 4], strides = [1, 1, 1]} : vector<16x18x4xbf16> to vector<16x16x4xbf16>
    %70 = vector.extract_strided_slice %67 {offsets = [0, 2, 0], sizes = [16, 16, 4], strides = [1, 1, 1]} : vector<16x18x4xbf16> to vector<16x16x4xbf16>
    %71 = tpu.concatenate %68, %69, %70 in 2 : vector<16x16x4xbf16>, vector<16x16x4xbf16>, vector<16x16x4xbf16> -> vector<16x16x12xbf16>
    %72 = vector.shape_cast %71 : vector<16x16x12xbf16> to vector<256x12xbf16>
    %c0_38 = arith.constant 0 : index
    %c0_39 = arith.constant 0 : index
    %c0_40 = arith.constant 0 : index
    %73 = vector.load %arg10[%c0_38, %c0_39, %c0_40] : memref<3x12x128xbf16, #tpu.memory_space<vmem>>, vector<1x12x128xbf16>
    %74 = vector.shape_cast %73 : vector<1x12x128xbf16> to vector<12x128xbf16>
    %cst_41 = arith.constant dense<0.000000e+00> : vector<256x128xf32>
    %75 = tpu.matmul %72, %74, %cst_41 {dimension_numbers = #tpu.dot_dimension_numbers<[1], [0], [0], [1], [0, 0, 1, 1], [], []>} : vector<256x12xbf16>, vector<12x128xbf16>, vector<256x128xf32> -> vector<256x128xf32>
    %76 = arith.addf %53, %75 : vector<256x128xf32>
    %77 = vector.extract_strided_slice %66 {offsets = [1, 0, 0], sizes = [16, 18, 4], strides = [1, 1, 1]} : vector<18x18x4xbf16> to vector<16x18x4xbf16>
    %78 = vector.extract_strided_slice %77 {offsets = [0, 0, 0], sizes = [16, 16, 4], strides = [1, 1, 1]} : vector<16x18x4xbf16> to vector<16x16x4xbf16>
    %79 = vector.extract_strided_slice %77 {offsets = [0, 1, 0], sizes = [16, 16, 4], strides = [1, 1, 1]} : vector<16x18x4xbf16> to vector<16x16x4xbf16>
    %80 = vector.extract_strided_slice %77 {offsets = [0, 2, 0], sizes = [16, 16, 4], strides = [1, 1, 1]} : vector<16x18x4xbf16> to vector<16x16x4xbf16>
    %81 = tpu.concatenate %78, %79, %80 in 2 : vector<16x16x4xbf16>, vector<16x16x4xbf16>, vector<16x16x4xbf16> -> vector<16x16x12xbf16>
    %82 = vector.shape_cast %81 : vector<16x16x12xbf16> to vector<256x12xbf16>
    %c1_42 = arith.constant 1 : index
    %c0_43 = arith.constant 0 : index
    %c0_44 = arith.constant 0 : index
    %83 = vector.load %arg10[%c1_42, %c0_43, %c0_44] : memref<3x12x128xbf16, #tpu.memory_space<vmem>>, vector<1x12x128xbf16>
    %84 = vector.shape_cast %83 : vector<1x12x128xbf16> to vector<12x128xbf16>
    %cst_45 = arith.constant dense<0.000000e+00> : vector<256x128xf32>
    %85 = tpu.matmul %82, %84, %cst_45 {dimension_numbers = #tpu.dot_dimension_numbers<[1], [0], [0], [1], [0, 0, 1, 1], [], []>} : vector<256x12xbf16>, vector<12x128xbf16>, vector<256x128xf32> -> vector<256x128xf32>
    %86 = arith.addf %76, %85 : vector<256x128xf32>
    %87 = vector.extract_strided_slice %66 {offsets = [2, 0, 0], sizes = [16, 18, 4], strides = [1, 1, 1]} : vector<18x18x4xbf16> to vector<16x18x4xbf16>
    %88 = vector.extract_strided_slice %87 {offsets = [0, 0, 0], sizes = [16, 16, 4], strides = [1, 1, 1]} : vector<16x18x4xbf16> to vector<16x16x4xbf16>
    %89 = vector.extract_strided_slice %87 {offsets = [0, 1, 0], sizes = [16, 16, 4], strides = [1, 1, 1]} : vector<16x18x4xbf16> to vector<16x16x4xbf16>
    %90 = vector.extract_strided_slice %87 {offsets = [0, 2, 0], sizes = [16, 16, 4], strides = [1, 1, 1]} : vector<16x18x4xbf16> to vector<16x16x4xbf16>
    %91 = tpu.concatenate %88, %89, %90 in 2 : vector<16x16x4xbf16>, vector<16x16x4xbf16>, vector<16x16x4xbf16> -> vector<16x16x12xbf16>
    %92 = vector.shape_cast %91 : vector<16x16x12xbf16> to vector<256x12xbf16>
    %c2_46 = arith.constant 2 : index
    %c0_47 = arith.constant 0 : index
    %c0_48 = arith.constant 0 : index
    %93 = vector.load %arg10[%c2_46, %c0_47, %c0_48] : memref<3x12x128xbf16, #tpu.memory_space<vmem>>, vector<1x12x128xbf16>
    %94 = vector.shape_cast %93 : vector<1x12x128xbf16> to vector<12x128xbf16>
    %cst_49 = arith.constant dense<0.000000e+00> : vector<256x128xf32>
    %95 = tpu.matmul %92, %94, %cst_49 {dimension_numbers = #tpu.dot_dimension_numbers<[1], [0], [0], [1], [0, 0, 1, 1], [], []>} : vector<256x12xbf16>, vector<12x128xbf16>, vector<256x128xf32> -> vector<256x128xf32>
    %96 = arith.addf %86, %95 : vector<256x128xf32>
    %c0_50 = arith.constant 0 : index
    %c0_51 = arith.constant 0 : index
    %97 = vector.load %arg11[%c0_50, %c0_51] : memref<1x128xf32, #tpu.memory_space<vmem>>, vector<1x128xf32>
    %98 = vector.broadcast %97 : vector<1x128xf32> to vector<256x128xf32>
    %99 = arith.addf %96, %98 : vector<256x128xf32>
    %cst_52 = arith.constant 0.000000e+00 : f32
    %100 = vector.broadcast %cst_52 : f32 to vector<256x128xf32>
    %101 = arith.maximumf %99, %100 : vector<256x128xf32>
    %102 = vector.shape_cast %101 : vector<256x128xf32> to vector<16x16x128xf32>
    %103 = arith.truncf %102 : vector<16x16x128xf32> to vector<16x16x128xbf16>
    %c0_53 = arith.constant 0 : index
    %c0_54 = arith.constant 0 : index
    %c0_55 = arith.constant 0 : index
    %c0_56 = arith.constant 0 : index
    %104 = vector.load %arg12[%c0_53, %c0_54, %c0_55, %c0_56] : memref<1x16x16x128xbf16, #tpu.memory_space<vmem>>, vector<1x16x16x128xbf16>
    %105 = vector.shape_cast %104 : vector<1x16x16x128xbf16> to vector<16x16x128xbf16>
    %106 = vector.shape_cast %103 : vector<16x16x128xbf16> to vector<1x16x16x128xbf16>
    tpu.vector_store %arg12[%c0_53, %c0_54, %c0_55, %c0_56], %106 {strides = array<i32>} : memref<1x16x16x128xbf16, #tpu.memory_space<vmem>>, vector<1x16x16x128xbf16>,
    return
  }
  func.func @transform_0(%arg0: i32, %arg1: i32, %arg2: i32) -> (i32, i32, i32, i32) {
    %c16_i32 = arith.constant 16 : i32
    %0 = arith.muli %arg1, %c16_i32 : i32
    %c1_i32 = arith.constant 1 : i32
    %1 = arith.subi %0, %c1_i32 : i32
    %c0_i32 = arith.constant 0 : i32
    %2 = arith.maxsi %1, %c0_i32 : i32
    %c0_i32_0 = arith.constant 0 : i32
    %c0_i32_1 = arith.constant 0 : i32
    %c0_i32_2 = arith.constant 0 : i32
    return %arg0, %2, %c0_i32_0, %c0_i32_1 : i32, i32, i32, i32
  }
  func.func @transform_1(%arg0: i32, %arg1: i32, %arg2: i32) -> (i32, i32, i32, i32) {
    %c0_i32 = arith.constant 0 : i32
    %c0_i32_0 = arith.constant 0 : i32
    %c0_i32_1 = arith.constant 0 : i32
    return %arg0, %arg1, %c0_i32, %c0_i32_0 : i32, i32, i32, i32
  }
  func.func @transform_2(%arg0: i32, %arg1: i32, %arg2: i32) -> (i32, i32, i32, i32) {
    %c1_i32 = arith.constant 1 : i32
    %0 = arith.addi %arg1, %c1_i32 : i32
    %c16_i32 = arith.constant 16 : i32
    %1 = arith.muli %0, %c16_i32 : i32
    %c15_i32 = arith.constant 15 : i32
    %2 = arith.minsi %1, %c15_i32 : i32
    %c0_i32 = arith.constant 0 : i32
    %c0_i32_0 = arith.constant 0 : i32
    %c0_i32_1 = arith.constant 0 : i32
    return %arg0, %2, %c0_i32, %c0_i32_0 : i32, i32, i32, i32
  }
  func.func @transform_3(%arg0: i32, %arg1: i32, %arg2: i32) -> (i32, i32, i32, i32) {
    %c16_i32 = arith.constant 16 : i32
    %0 = arith.muli %arg1, %c16_i32 : i32
    %c1_i32 = arith.constant 1 : i32
    %1 = arith.subi %0, %c1_i32 : i32
    %c0_i32 = arith.constant 0 : i32
    %2 = arith.maxsi %1, %c0_i32 : i32
    %c0_i32_0 = arith.constant 0 : i32
    %c0_i32_1 = arith.constant 0 : i32
    %c0_i32_2 = arith.constant 0 : i32
    return %arg0, %2, %c0_i32_0, %c0_i32_1 : i32, i32, i32, i32
  }
  func.func @transform_4(%arg0: i32, %arg1: i32, %arg2: i32) -> (i32, i32, i32, i32) {
    %c0_i32 = arith.constant 0 : i32
    %c0_i32_0 = arith.constant 0 : i32
    %c0_i32_1 = arith.constant 0 : i32
    return %arg0, %arg1, %c0_i32, %c0_i32_0 : i32, i32, i32, i32
  }
  func.func @transform_5(%arg0: i32, %arg1: i32, %arg2: i32) -> (i32, i32, i32, i32) {
    %c1_i32 = arith.constant 1 : i32
    %0 = arith.addi %arg1, %c1_i32 : i32
    %c16_i32 = arith.constant 16 : i32
    %1 = arith.muli %0, %c16_i32 : i32
    %c15_i32 = arith.constant 15 : i32
    %2 = arith.minsi %1, %c15_i32 : i32
    %c0_i32 = arith.constant 0 : i32
    %c0_i32_0 = arith.constant 0 : i32
    %c0_i32_1 = arith.constant 0 : i32
    return %arg0, %2, %c0_i32, %c0_i32_0 : i32, i32, i32, i32
  }
  func.func @transform_6(%arg0: i32, %arg1: i32, %arg2: i32) -> (i32, i32, i32) {
    %c0_i32 = arith.constant 0 : i32
    %c0_i32_0 = arith.constant 0 : i32
    %c0_i32_1 = arith.constant 0 : i32
    return %c0_i32, %c0_i32_0, %arg2 : i32, i32, i32
  }
  func.func @transform_7(%arg0: i32, %arg1: i32, %arg2: i32) -> (i32, i32, i32) {
    %c0_i32 = arith.constant 0 : i32
    %c0_i32_0 = arith.constant 0 : i32
    %c0_i32_1 = arith.constant 0 : i32
    return %c0_i32, %c0_i32_0, %arg2 : i32, i32, i32
  }
  func.func @transform_8(%arg0: i32, %arg1: i32, %arg2: i32) -> (i32, i32) {
    %c0_i32 = arith.constant 0 : i32
    %c0_i32_0 = arith.constant 0 : i32
    return %c0_i32, %arg2 : i32, i32
  }
  func.func @transform_9(%arg0: i32, %arg1: i32, %arg2: i32) -> (i32, i32, i32, i32) {
    %c0_i32 = arith.constant 0 : i32
    %c0_i32_0 = arith.constant 0 : i32
    return %arg0, %arg1, %c0_i32, %arg2 : i32, i32, i32, i32
  }
}

module attributes {stable_mosaic.version = 11 : i64} {
  func.func @kernel(%arg0: i32, %arg1: i32, %arg2: i32, %arg3: memref<1x1x16x128xbf16, #tpu.memory_space<vmem>>, %arg4: memref<1x16x16x128xbf16, #tpu.memory_space<vmem>>, %arg5: memref<1x1x16x128xbf16, #tpu.memory_space<vmem>>, %arg6: memref<3x384x128xbf16, #tpu.memory_space<vmem>>, %arg7: memref<1x128xf32, #tpu.memory_space<vmem>>, %arg8: memref<1x16x16x128xf32, #tpu.memory_space<vmem>>) attributes {dimension_semantics = [#tpu.dimension_semantics<parallel>, #tpu.dimension_semantics<parallel>, #tpu.dimension_semantics<arbitrary>], iteration_bounds = array<i64: 2, 1, 1>, scalar_prefetch = 0 : i64, scratch_operands = 0 : i64, tpu.core_type = #tpu.core_type<tc>, window_params = [{transform_indices = @transform_0, window_bounds = array<i64: 1, 1, 16, 128>}, {transform_indices = @transform_1, window_bounds = array<i64: 1, 16, 16, 128>}, {transform_indices = @transform_2, window_bounds = array<i64: 1, 1, 16, 128>}, {transform_indices = @transform_3, window_bounds = array<i64: 3, 384, 128>}, {transform_indices = @transform_4, window_bounds = array<i64: 1, 128>}, {transform_indices = @transform_5, window_bounds = array<i64: 1, 16, 16, 128>}]} {
    %c16_i32 = arith.constant 16 : i32
    %0 = arith.muli %arg1, %c16_i32 : i32
    %1 = tpu.iota {dimensions = array<i32: 0>} : vector<18x1x1xi32>
    %c1_i32 = arith.constant 1 : i32
    %2 = arith.subi %0, %c1_i32 : i32
    %3 = vector.broadcast %2 : i32 to vector<18x1x1xi32>
    %4 = arith.addi %1, %3 : vector<18x1x1xi32>
    %c0_i32 = arith.constant 0 : i32
    %5 = vector.broadcast %c0_i32 : i32 to vector<18x1x1xi32>
    %6 = arith.cmpi sge, %4, %5 : vector<18x1x1xi32>
    %c16_i32_0 = arith.constant 16 : i32
    %7 = vector.broadcast %c16_i32_0 : i32 to vector<18x1x1xi32>
    %8 = arith.cmpi slt, %4, %7 : vector<18x1x1xi32>
    %9 = arith.andi %6, %8 : vector<18x1x1xi1>
    %cst = arith.constant 0.000000e+00 : f32
    %10 = vector.broadcast %cst : f32 to vector<256x128xf32>
    %c0 = arith.constant 0 : index
    %c0_1 = arith.constant 0 : index
    %c0_2 = arith.constant 0 : index
    %c0_3 = arith.constant 0 : index
    %11 = vector.load %arg3[%c0, %c0_1, %c0_2, %c0_3] : memref<1x1x16x128xbf16, #tpu.memory_space<vmem>>, vector<1x1x16x128xbf16>
    %12 = vector.shape_cast %11 : vector<1x1x16x128xbf16> to vector<1x16x128xbf16>
    %c0_4 = arith.constant 0 : index
    %c0_5 = arith.constant 0 : index
    %c0_6 = arith.constant 0 : index
    %c0_7 = arith.constant 0 : index
    %13 = vector.load %arg4[%c0_4, %c0_5, %c0_6, %c0_7] : memref<1x16x16x128xbf16, #tpu.memory_space<vmem>>, vector<1x16x16x128xbf16>
    %14 = vector.shape_cast %13 : vector<1x16x16x128xbf16> to vector<16x16x128xbf16>
    %c0_8 = arith.constant 0 : index
    %c0_9 = arith.constant 0 : index
    %c0_10 = arith.constant 0 : index
    %c0_11 = arith.constant 0 : index
    %15 = vector.load %arg5[%c0_8, %c0_9, %c0_10, %c0_11] : memref<1x1x16x128xbf16, #tpu.memory_space<vmem>>, vector<1x1x16x128xbf16>
    %16 = vector.shape_cast %15 : vector<1x1x16x128xbf16> to vector<1x16x128xbf16>
    %17 = tpu.concatenate %12, %14, %16 in 0 : vector<1x16x128xbf16>, vector<16x16x128xbf16>, vector<1x16x128xbf16> -> vector<18x16x128xbf16>
    %cst_12 = arith.constant 0.000000e+00 : bf16
    %18 = vector.broadcast %cst_12 : bf16 to vector<18x16x128xbf16>
    %19 = vector.shape_cast %9 : vector<18x1x1xi1> to vector<18x1x1xi1>
    %20 = vector.broadcast %19 : vector<18x1x1xi1> to vector<18x16x128xi1>
    %21 = arith.select %20, %17, %18 : vector<18x16x128xi1>, vector<18x16x128xbf16>
    %cst_13 = arith.constant 0.000000e+00 : bf16
    %22 = vector.broadcast %cst_13 : bf16 to vector<18x1x128xbf16>
    %23 = tpu.concatenate %22, %21, %22 in 1 : vector<18x1x128xbf16>, vector<18x16x128xbf16>, vector<18x1x128xbf16> -> vector<18x18x128xbf16>
    %24 = vector.extract_strided_slice %23 {offsets = [0, 0, 0], sizes = [16, 18, 128], strides = [1, 1, 1]} : vector<18x18x128xbf16> to vector<16x18x128xbf16>
    %25 = vector.extract_strided_slice %24 {offsets = [0, 0, 0], sizes = [16, 16, 128], strides = [1, 1, 1]} : vector<16x18x128xbf16> to vector<16x16x128xbf16>
    %26 = vector.extract_strided_slice %24 {offsets = [0, 1, 0], sizes = [16, 16, 128], strides = [1, 1, 1]} : vector<16x18x128xbf16> to vector<16x16x128xbf16>
    %27 = vector.extract_strided_slice %24 {offsets = [0, 2, 0], sizes = [16, 16, 128], strides = [1, 1, 1]} : vector<16x18x128xbf16> to vector<16x16x128xbf16>
    %28 = tpu.concatenate %25, %26, %27 in 2 : vector<16x16x128xbf16>, vector<16x16x128xbf16>, vector<16x16x128xbf16> -> vector<16x16x384xbf16>
    %29 = vector.shape_cast %28 : vector<16x16x384xbf16> to vector<256x384xbf16>
    %c0_14 = arith.constant 0 : index
    %c0_15 = arith.constant 0 : index
    %c0_16 = arith.constant 0 : index
    %30 = vector.load %arg6[%c0_14, %c0_15, %c0_16] : memref<3x384x128xbf16, #tpu.memory_space<vmem>>, vector<1x384x128xbf16>
    %31 = vector.shape_cast %30 : vector<1x384x128xbf16> to vector<384x128xbf16>
    %cst_17 = arith.constant dense<0.000000e+00> : vector<256x128xf32>
    %32 = tpu.matmul %29, %31, %cst_17 {dimension_numbers = #tpu.dot_dimension_numbers<[1], [0], [0], [1], [0, 0, 1, 1], [], []>} : vector<256x384xbf16>, vector<384x128xbf16>, vector<256x128xf32> -> vector<256x128xf32>
    %33 = arith.addf %10, %32 : vector<256x128xf32>
    %34 = vector.extract_strided_slice %23 {offsets = [1, 0, 0], sizes = [16, 18, 128], strides = [1, 1, 1]} : vector<18x18x128xbf16> to vector<16x18x128xbf16>
    %35 = vector.extract_strided_slice %34 {offsets = [0, 0, 0], sizes = [16, 16, 128], strides = [1, 1, 1]} : vector<16x18x128xbf16> to vector<16x16x128xbf16>
    %36 = vector.extract_strided_slice %34 {offsets = [0, 1, 0], sizes = [16, 16, 128], strides = [1, 1, 1]} : vector<16x18x128xbf16> to vector<16x16x128xbf16>
    %37 = vector.extract_strided_slice %34 {offsets = [0, 2, 0], sizes = [16, 16, 128], strides = [1, 1, 1]} : vector<16x18x128xbf16> to vector<16x16x128xbf16>
    %38 = tpu.concatenate %35, %36, %37 in 2 : vector<16x16x128xbf16>, vector<16x16x128xbf16>, vector<16x16x128xbf16> -> vector<16x16x384xbf16>
    %39 = vector.shape_cast %38 : vector<16x16x384xbf16> to vector<256x384xbf16>
    %c1 = arith.constant 1 : index
    %c0_18 = arith.constant 0 : index
    %c0_19 = arith.constant 0 : index
    %40 = vector.load %arg6[%c1, %c0_18, %c0_19] : memref<3x384x128xbf16, #tpu.memory_space<vmem>>, vector<1x384x128xbf16>
    %41 = vector.shape_cast %40 : vector<1x384x128xbf16> to vector<384x128xbf16>
    %cst_20 = arith.constant dense<0.000000e+00> : vector<256x128xf32>
    %42 = tpu.matmul %39, %41, %cst_20 {dimension_numbers = #tpu.dot_dimension_numbers<[1], [0], [0], [1], [0, 0, 1, 1], [], []>} : vector<256x384xbf16>, vector<384x128xbf16>, vector<256x128xf32> -> vector<256x128xf32>
    %43 = arith.addf %33, %42 : vector<256x128xf32>
    %44 = vector.extract_strided_slice %23 {offsets = [2, 0, 0], sizes = [16, 18, 128], strides = [1, 1, 1]} : vector<18x18x128xbf16> to vector<16x18x128xbf16>
    %45 = vector.extract_strided_slice %44 {offsets = [0, 0, 0], sizes = [16, 16, 128], strides = [1, 1, 1]} : vector<16x18x128xbf16> to vector<16x16x128xbf16>
    %46 = vector.extract_strided_slice %44 {offsets = [0, 1, 0], sizes = [16, 16, 128], strides = [1, 1, 1]} : vector<16x18x128xbf16> to vector<16x16x128xbf16>
    %47 = vector.extract_strided_slice %44 {offsets = [0, 2, 0], sizes = [16, 16, 128], strides = [1, 1, 1]} : vector<16x18x128xbf16> to vector<16x16x128xbf16>
    %48 = tpu.concatenate %45, %46, %47 in 2 : vector<16x16x128xbf16>, vector<16x16x128xbf16>, vector<16x16x128xbf16> -> vector<16x16x384xbf16>
    %49 = vector.shape_cast %48 : vector<16x16x384xbf16> to vector<256x384xbf16>
    %c2 = arith.constant 2 : index
    %c0_21 = arith.constant 0 : index
    %c0_22 = arith.constant 0 : index
    %50 = vector.load %arg6[%c2, %c0_21, %c0_22] : memref<3x384x128xbf16, #tpu.memory_space<vmem>>, vector<1x384x128xbf16>
    %51 = vector.shape_cast %50 : vector<1x384x128xbf16> to vector<384x128xbf16>
    %cst_23 = arith.constant dense<0.000000e+00> : vector<256x128xf32>
    %52 = tpu.matmul %49, %51, %cst_23 {dimension_numbers = #tpu.dot_dimension_numbers<[1], [0], [0], [1], [0, 0, 1, 1], [], []>} : vector<256x384xbf16>, vector<384x128xbf16>, vector<256x128xf32> -> vector<256x128xf32>
    %53 = arith.addf %43, %52 : vector<256x128xf32>
    %c0_24 = arith.constant 0 : index
    %c0_25 = arith.constant 0 : index
    %54 = vector.load %arg7[%c0_24, %c0_25] : memref<1x128xf32, #tpu.memory_space<vmem>>, vector<1x128xf32>
    %55 = vector.broadcast %54 : vector<1x128xf32> to vector<256x128xf32>
    %56 = arith.addf %53, %55 : vector<256x128xf32>
    %cst_26 = arith.constant 0.000000e+00 : f32
    %57 = vector.broadcast %cst_26 : f32 to vector<256x128xf32>
    %58 = arith.maximumf %56, %57 : vector<256x128xf32>
    %59 = vector.shape_cast %58 : vector<256x128xf32> to vector<16x16x128xf32>
    %c0_27 = arith.constant 0 : index
    %c0_28 = arith.constant 0 : index
    %c0_29 = arith.constant 0 : index
    %c0_30 = arith.constant 0 : index
    %60 = vector.load %arg8[%c0_27, %c0_28, %c0_29, %c0_30] : memref<1x16x16x128xf32, #tpu.memory_space<vmem>>, vector<1x16x16x128xf32>
    %61 = vector.shape_cast %60 : vector<1x16x16x128xf32> to vector<16x16x128xf32>
    %62 = vector.shape_cast %59 : vector<16x16x128xf32> to vector<1x16x16x128xf32>
    tpu.vector_store %arg8[%c0_27, %c0_28, %c0_29, %c0_30], %62 {strides = array<i32>} : memref<1x16x16x128xf32, #tpu.memory_space<vmem>>, vector<1x16x16x128xf32>,
    return
  }
  func.func @transform_0(%arg0: i32, %arg1: i32, %arg2: i32) -> (i32, i32, i32, i32) {
    %c16_i32 = arith.constant 16 : i32
    %0 = arith.muli %arg1, %c16_i32 : i32
    %c1_i32 = arith.constant 1 : i32
    %1 = arith.subi %0, %c1_i32 : i32
    %c0_i32 = arith.constant 0 : i32
    %2 = arith.maxsi %1, %c0_i32 : i32
    %c0_i32_0 = arith.constant 0 : i32
    %c0_i32_1 = arith.constant 0 : i32
    %c0_i32_2 = arith.constant 0 : i32
    return %arg0, %2, %c0_i32_0, %c0_i32_1 : i32, i32, i32, i32
  }
  func.func @transform_1(%arg0: i32, %arg1: i32, %arg2: i32) -> (i32, i32, i32, i32) {
    %c0_i32 = arith.constant 0 : i32
    %c0_i32_0 = arith.constant 0 : i32
    %c0_i32_1 = arith.constant 0 : i32
    return %arg0, %arg1, %c0_i32, %c0_i32_0 : i32, i32, i32, i32
  }
  func.func @transform_2(%arg0: i32, %arg1: i32, %arg2: i32) -> (i32, i32, i32, i32) {
    %c1_i32 = arith.constant 1 : i32
    %0 = arith.addi %arg1, %c1_i32 : i32
    %c16_i32 = arith.constant 16 : i32
    %1 = arith.muli %0, %c16_i32 : i32
    %c15_i32 = arith.constant 15 : i32
    %2 = arith.minsi %1, %c15_i32 : i32
    %c0_i32 = arith.constant 0 : i32
    %c0_i32_0 = arith.constant 0 : i32
    %c0_i32_1 = arith.constant 0 : i32
    return %arg0, %2, %c0_i32, %c0_i32_0 : i32, i32, i32, i32
  }
  func.func @transform_3(%arg0: i32, %arg1: i32, %arg2: i32) -> (i32, i32, i32) {
    %c0_i32 = arith.constant 0 : i32
    %c0_i32_0 = arith.constant 0 : i32
    %c0_i32_1 = arith.constant 0 : i32
    return %c0_i32, %c0_i32_0, %arg2 : i32, i32, i32
  }
  func.func @transform_4(%arg0: i32, %arg1: i32, %arg2: i32) -> (i32, i32) {
    %c0_i32 = arith.constant 0 : i32
    %c0_i32_0 = arith.constant 0 : i32
    return %c0_i32, %arg2 : i32, i32
  }
  func.func @transform_5(%arg0: i32, %arg1: i32, %arg2: i32) -> (i32, i32, i32, i32) {
    %c0_i32 = arith.constant 0 : i32
    %c0_i32_0 = arith.constant 0 : i32
    return %arg0, %arg1, %c0_i32, %arg2 : i32, i32, i32, i32
  }
}

</mosaic_0001>

<llo_original>
// kernel: up_corrected_forward.3
$region0: #{up_corrected_forward.3}
  #allocation0 [shape = 'u32[]', space=smem, size = 0x4, offset = 0x4, fixed_abs, tag = 'smem constant byte address 0x4 - core index']
  #allocation1 [shape = 'u32[72,128]{1,0:T(1,128)}', space=vmem, size = 0x9000, scoped, tag = 'internal scratch']
  %s0 = inlined_call_operand.vmem [shape: bf16[2,16,16,128], index: 0, kind: input, shape index: {}, may-alias: {0,1,2}]
  %s1 = inlined_call_operand.vmem [shape: bf16[2,16,16,128], index: 1, kind: input, shape index: {}, may-alias: {0,1,2}]
  %s2 = inlined_call_operand.vmem [shape: bf16[2,16,16,128], index: 2, kind: input, shape index: {}, may-alias: {0,1,2}]
  %s3 = inlined_call_operand.vmem [shape: bf16[3,384,128], index: 3, kind: input, shape index: {}]
  %s4 = inlined_call_operand.vmem [shape: f32[1,128], index: 4, kind: input, shape index: {}]
  %s5 = inlined_call_operand.vmem [shape: f32[2,16,16,128], index: 5, kind: output, shape index: {}]
  %s6 = sld [smem:[#allocation0]]
  $region53: #{up_corrected_forward.3} parent=0
    _
  %s8 = ssub.s32 1, %s6
  %s9 = scalar_select 0, %s8, %s6
  loop: start=0, step=1, limit=4
  $region2: #{up_corrected_forward.3} parent=0 // loop_pre_header
    _
  $region3: #{up_corrected_forward.3} parent=0 // loop_header
    %s11 = sphi 0, %s15
    %p12 = scmp.ge.s32.totalorder %s11, 4
    %s18 = sphi 0, %s37
    %s19 = sphi 0, %s33
    %s20 = sphi 0, %s29
    %s21 = sphi 0, %s18
    %s22 = sphi 0, %s19
    %s23 = sphi 0, %s20
    %s24 = sphi 0, %s21
    %s25 = sphi 0, %s22
    %s26 = sphi 0, %s23
    %s50 = sphi 0, %s52
    %s53 = sphi 0, %s50
    %s54 = sphi 0, %s53
    %s70 = sphi 0, %s54
    %s78 = sphi 0, %s80
    %s81 = sphi 0, %s78
    %s82 = sphi 0, %s81
    %s98 = sphi 0, %s82
    %s114 = sphi 0, %s116
    %s117 = sphi 0, %s114
    %s118 = sphi 0, %s117
    %s134 = sphi 0, %s118
    %s140 = sphi 0, %s142
    %s143 = sphi 0, %s140
    %s144 = sphi 0, %s143
    %s160 = sphi 0, %s144
    %s166 = sphi 0, %s168
    %s169 = sphi 0, %s166
    %s170 = sphi 0, %s169
    %s186 = sphi 0, %s170
    %s196 = sphi 0, %s198
    %s199 = sphi 0, %s196
    %s200 = sphi 0, %s199
    %s216 = sphi 0, %s200
  $region4: #{up_corrected_forward.3} parent=0 // loop_header_branch
    %14 = sbr.rel (%p12) target = $region8
  $region5: #{up_corrected_forward.3} parent=0 // loop_body
    %s16 = ssub.s32 %s11, 1
    %s17 = ssub.s32 %s11, 2
    %s27 = sadd.s32 1, %s20
    %p28 = scmp.ge.s32.totalorder %s27, 1
    %s29 = scalar_select %p28, 0, %s27
    %s30 = sadd.s32 1, %s19
    %s31 = scalar_select %p28, %s30, %s19
    %p32 = scmp.ge.s32.totalorder %s31, 1
    %s33 = scalar_select %p32, 0, %s31
    %s34 = sadd.s32 1, %s18
    %s35 = scalar_select %p32, %s34, %s18
    %p36 = scmp.ge.s32.totalorder %s35, 2
    %s37 = scalar_select %p36, 0, %s35
    %s38 = smul.u32 %s19, 16
    %s39 = ssub.s32 %s38, 1
    %p40 = scmp.gt.s32.totalorder %s39, 0
    %s41 = scalar_select %p40, %s39, 0
    %s42 = smul.u32 %s33, 16
    %s43 = ssub.s32 %s42, 1
    %p44 = scmp.gt.s32.totalorder %s43, 0
    %s45 = scalar_select %p44, %s43, 0
    %s46 = ssub.s32 %s18, %s37
    %s47 = ssub.s32 %s41, %s45
    %s48 = sor.u32 %s46, %s47
    %p49 = scmp.eq.s32.totalorder %s48, 0
    %s51 = sadd.s32 %s50, 1
    %s52 = scalar_select %p49, %s50, %s51
    %p55 = pneg %p49
    %p56 = scmp.eq.s32.totalorder %s11, 1
    %p57 = por %p55, %p56
    %p58 = scmp.ne.s32.totalorder %s50, %s53
    %p59 = scmp.eq.s32.totalorder %s11, 0
    %p60 = por %p58, %p59
    %p61 = scmp.ne.s32.totalorder %s50, %s53
    %p62 = scmp.eq.s32.totalorder %s16, 1
    %p63 = por %p61, %p62
    %p64 = scmp.ne.s32.totalorder %s53, %s54
    %p65 = scmp.eq.s32.totalorder %s16, 0
    %p66 = por %p64, %p65
    %p67 = scmp.ne.s32.totalorder %s53, %s54
    %p68 = scmp.eq.s32.totalorder %s17, 1
    %p69 = por %p67, %p68
    %p71 = scmp.ne.s32.totalorder %s54, %s70
    %p72 = scmp.eq.s32.totalorder %s17, 0
    %p73 = por %p71, %p72
    %s74 = ssub.s32 %s18, %s37
    %s75 = ssub.s32 %s19, %s33
    %s76 = sor.u32 %s74, %s75
    %p77 = scmp.eq.s32.totalorder %s76, 0
    %s79 = sadd.s32 %s78, 1
    %s80 = scalar_select %p77, %s78, %s79
    %p83 = pneg %p77
    %p84 = scmp.eq.s32.totalorder %s11, 1
    %p85 = por %p83, %p84
    %p86 = scmp.ne.s32.totalorder %s78, %s81
    %p87 = scmp.eq.s32.totalorder %s11, 0
    %p88 = por %p86, %p87
    %p89 = scmp.ne.s32.totalorder %s78, %s81
    %p90 = scmp.eq.s32.totalorder %s16, 1
    %p91 = por %p89, %p90
    %p92 = scmp.ne.s32.totalorder %s81, %s82
    %p93 = scmp.eq.s32.totalorder %s16, 0
    %p94 = por %p92, %p93
    %p95 = scmp.ne.s32.totalorder %s81, %s82
    %p96 = scmp.eq.s32.totalorder %s17, 1
    %p97 = por %p95, %p96
    %p99 = scmp.ne.s32.totalorder %s82, %s98
    %p100 = scmp.eq.s32.totalorder %s17, 0
    %p101 = por %p99, %p100
    %s102 = sadd.s32 %s19, 1
    %s103 = smul.u32 %s102, 16
    %p104 = scmp.lt.s32.totalorder %s103, 15
    %s105 = scalar_select %p104, %s103, 15
    %s106 = sadd.s32 %s33, 1
    %s107 = smul.u32 %s106, 16
    %p108 = scmp.lt.s32.totalorder %s107, 15
    %s109 = scalar_select %p108, %s107, 15
    %s110 = ssub.s32 %s18, %s37
    %s111 = ssub.s32 %s105, %s109
    %s112 = sor.u32 %s110, %s111
    %p113 = scmp.eq.s32.totalorder %s112, 0
    %s115 = sadd.s32 %s114, 1
    %s116 = scalar_select %p113, %s114, %s115
    %p119 = pneg %p113
    %p120 = scmp.eq.s32.totalorder %s11, 1
    %p121 = por %p119, %p120
    %p122 = scmp.ne.s32.totalorder %s114, %s117
    %p123 = scmp.eq.s32.totalorder %s11, 0
    %p124 = por %p122, %p123
    %p125 = scmp.ne.s32.totalorder %s114, %s117
    %p126 = scmp.eq.s32.totalorder %s16, 1
    %p127 = por %p125, %p126
    %p128 = scmp.ne.s32.totalorder %s117, %s118
    %p129 = scmp.eq.s32.totalorder %s16, 0
    %p130 = por %p128, %p129
    %p131 = scmp.ne.s32.totalorder %s117, %s118
    %p132 = scmp.eq.s32.totalorder %s17, 1
    %p133 = por %p131, %p132
    %p135 = scmp.ne.s32.totalorder %s118, %s134
    %p136 = scmp.eq.s32.totalorder %s17, 0
    %p137 = por %p135, %p136
    %s138 = ssub.s32 %s20, %s29
    %p139 = scmp.eq.s32.totalorder %s138, 0
    %s141 = sadd.s32 %s140, 1
    %s142 = scalar_select %p139, %s140, %s141
    %p145 = pneg %p139
    %p146 = scmp.eq.s32.totalorder %s11, 1
    %p147 = por %p145, %p146
    %p148 = scmp.ne.s32.totalorder %s140, %s143
    %p149 = scmp.eq.s32.totalorder %s11, 0
    %p150 = por %p148, %p149
    %p151 = scmp.ne.s32.totalorder %s140, %s143
    %p152 = scmp.eq.s32.totalorder %s16, 1
    %p153 = por %p151, %p152
    %p154 = scmp.ne.s32.totalorder %s143, %s144
    %p155 = scmp.eq.s32.totalorder %s16, 0
    %p156 = por %p154, %p155
    %p157 = scmp.ne.s32.totalorder %s143, %s144
    %p158 = scmp.eq.s32.totalorder %s17, 1
    %p159 = por %p157, %p158
    %p161 = scmp.ne.s32.totalorder %s144, %s160
    %p162 = scmp.eq.s32.totalorder %s17, 0
    %p163 = por %p161, %p162
    %s164 = ssub.s32 %s20, %s29
    %p165 = scmp.eq.s32.totalorder %s164, 0
    %s167 = sadd.s32 %s166, 1
    %s168 = scalar_select %p165, %s166, %s167
    %p171 = pneg %p165
    %p172 = scmp.eq.s32.totalorder %s11, 1
    %p173 = por %p171, %p172
    %p174 = scmp.ne.s32.totalorder %s166, %s169
    %p175 = scmp.eq.s32.totalorder %s11, 0
    %p176 = por %p174, %p175
    %p177 = scmp.ne.s32.totalorder %s166, %s169
    %p178 = scmp.eq.s32.totalorder %s16, 1
    %p179 = por %p177, %p178
    %p180 = scmp.ne.s32.totalorder %s169, %s170
    %p181 = scmp.eq.s32.totalorder %s16, 0
    %p182 = por %p180, %p181
    %p183 = scmp.ne.s32.totalorder %s169, %s170
    %p184 = scmp.eq.s32.totalorder %s17, 1
    %p185 = por %p183, %p184
    %p187 = scmp.ne.s32.totalorder %s170, %s186
    %p188 = scmp.eq.s32.totalorder %s17, 0
    %p189 = por %p187, %p188
    %s190 = ssub.s32 %s18, %s37
    %s191 = ssub.s32 %s19, %s33
    %s192 = sor.u32 %s190, %s191
    %s193 = ssub.s32 %s20, %s29
    %s194 = sor.u32 %s192, %s193
    %p195 = scmp.eq.s32.totalorder %s194, 0
    %s197 = sadd.s32 %s196, 1
    %s198 = scalar_select %p195, %s196, %s197
    %p201 = pneg %p195
    %p202 = scmp.eq.s32.totalorder %s11, 1
    %p203 = por %p201, %p202
    %p204 = scmp.ne.s32.totalorder %s196, %s199
    %p205 = scmp.eq.s32.totalorder %s11, 0
    %p206 = por %p204, %p205
    %p207 = scmp.ne.s32.totalorder %s196, %s199
    %p208 = scmp.eq.s32.totalorder %s16, 1
    %p209 = por %p207, %p208
    %p210 = scmp.ne.s32.totalorder %s199, %s200
    %p211 = scmp.eq.s32.totalorder %s16, 0
    %p212 = por %p210, %p211
    %p213 = scmp.ne.s32.totalorder %s199, %s200
    %p214 = scmp.eq.s32.totalorder %s17, 1
    %p215 = por %p213, %p214
    %p217 = scmp.ne.s32.totalorder %s200, %s216
    %p218 = scmp.eq.s32.totalorder %s17, 0
    %p219 = por %p217, %p218
    %p220 = scmp.le.s32.totalorder 1, %s11
    %p221 = scmp.lt.s32.totalorder %s11, 3
    %p222 = pnand %p220, %p221
    %p223 = pneg %p222
    // Predicated region
    $region9: #{up_corrected_forward.3} parent=5 // pred_check
      _
    $region10: #{up_corrected_forward.3} parent=5 // pred_check_branch
      %225 = sbr.rel (%p222) target = $region12
    $region11: #{up_corrected_forward.3} parent=5 // pred_region
      %s226 = ssub.s32 %s11, 1
      // Predicated region
      $region13: #{up_corrected_forward.3} parent=11 // pred_check
        %p227 = pneg %p156
      $region14: #{up_corrected_forward.3} parent=11 // pred_check_branch
        %229 = sbr.rel (%p227) target = $region16
      $region15: #{up_corrected_forward.3} parent=11 // pred_region
        %p230 = scmp.lt.s32.totalorder %s23, 0
        %s231 = scalar_select %p230, %s23, 0
        %s232 = smul.addr %s231, 4
        %s233 = scalar_lea.vmem %s3, %s232
      $region16: #{up_corrected_forward.3} parent=11 // pred_fallthru
        _
      // Predicated region
      $region17: #{up_corrected_forward.3} parent=11 // pred_check
        %p234 = pneg %p182
      $region18: #{up_corrected_forward.3} parent=11 // pred_check_branch
        %236 = sbr.rel (%p234) target = $region20
      $region19: #{up_corrected_forward.3} parent=11 // pred_region
        %p237 = scmp.lt.s32.totalorder %s23, 0
        %s238 = scalar_select %p237, %s23, 0
        %s239 = scalar_lea.vmem %s4, %s238
      $region20: #{up_corrected_forward.3} parent=11 // pred_fallthru
        _
    $region12: #{up_corrected_forward.3} parent=5 // pred_fallthru
      _
    %p240 = scmp.lt.s32.totalorder %s11, 2
    // Predicated region
    $region21: #{up_corrected_forward.3} parent=5 // pred_check
      %p241 = pneg %p240
    $region22: #{up_corrected_forward.3} parent=5 // pred_check_branch
      %243 = sbr.rel (%p241) target = $region24
    $region23: #{up_corrected_forward.3} parent=5 // pred_region
      // Predicated region
      $region25: #{up_corrected_forward.3} parent=23 // pred_check
        %p244 = pneg %p60
      $region26: #{up_corrected_forward.3} parent=23 // pred_check_branch
        %246 = sbr.rel (%p244) target = $region28
      $region27: #{up_corrected_forward.3} parent=23 // pred_region
        %s247 = smul.u32 %s19, 16
        %s248 = ssub.s32 %s247, 1
        %p249 = scmp.gt.s32.totalorder %s248, 0
        %s250 = scalar_select %p249, %s248, 0
        %p251 = scmp.lt.s32.totalorder %s18, 1
        %s252 = scalar_select %p251, %s18, 1
        %p253 = scmp.lt.s32.totalorder %s250, 15
        %s254 = scalar_select %p253, %s250, 15
        %s255 = smul.addr %s254, 2
        %s256 = smul.addr %s252, 32
        %s257 = sadd.s32 %s255, %s256
        %s258 = smul.addr %s257, 4
        %s259 = scalar_lea.vmem %s0, %s258
        %s260 = smul.u32 %s19, 16
        %s261 = ssub.s32 %s260, 1
        %p262 = scmp.gt.s32.totalorder %s261, 0
        %s263 = scalar_select %p262, %s261, 0
      $region28: #{up_corrected_forward.3} parent=23 // pred_fallthru
        _
      // Predicated region
      $region29: #{up_corrected_forward.3} parent=23 // pred_check
        %p264 = pneg %p88
      $region30: #{up_corrected_forward.3} parent=23 // pred_check_branch
        %266 = sbr.rel (%p264) target = $region32
      $region31: #{up_corrected_forward.3} parent=23 // pred_region
        %s267 = smul.u32 16, %s19
        %p268 = scmp.lt.s32.totalorder %s18, 1
        %s269 = scalar_select %p268, %s18, 1
        %p270 = scmp.lt.s32.totalorder %s267, 15
        %s271 = scalar_select %p270, %s267, 15
        %s272 = smul.addr %s271, 2
        %s273 = smul.addr %s269, 32
        %s274 = sadd.s32 %s272, %s273
        %s275 = smul.addr %s274, 4
        %s276 = scalar_lea.vmem %s1, %s275
        %s277 = smul.u32 16, %s19
      $region32: #{up_corrected_forward.3} parent=23 // pred_fallthru
        _
      // Predicated region
      $region33: #{up_corrected_forward.3} parent=23 // pred_check
        %p278 = pneg %p124
      $region34: #{up_corrected_forward.3} parent=23 // pred_check_branch
        %280 = sbr.rel (%p278) target = $region36
      $region35: #{up_corrected_forward.3} parent=23 // pred_region
        %s281 = sadd.s32 %s19, 1
        %s282 = smul.u32 %s281, 16
        %p283 = scmp.lt.s32.totalorder %s282, 15
        %s284 = scalar_select %p283, %s282, 15
        %p285 = scmp.lt.s32.totalorder %s18, 1
        %s286 = scalar_select %p285, %s18, 1
        %p287 = scmp.lt.s32.totalorder %s284, 15
        %s288 = scalar_select %p287, %s284, 15
        %s289 = smul.addr %s288, 2
        %s290 = smul.addr %s286, 32
        %s291 = sadd.s32 %s289, %s290
        %s292 = smul.addr %s291, 4
        %s293 = scalar_lea.vmem %s2, %s292
        %s294 = sadd.s32 %s19, 1
        %s295 = smul.u32 %s294, 16
        %p296 = scmp.lt.s32.totalorder %s295, 15
        %s297 = scalar_select %p296, %s295, 15
      $region36: #{up_corrected_forward.3} parent=23 // pred_fallthru
        _
    $region24: #{up_corrected_forward.3} parent=5 // pred_fallthru
      _
    %p298 = scmp.le.s32.totalorder 1, %s11
    %p299 = scmp.lt.s32.totalorder %s11, 3
    %p300 = pnand %p298, %p299
    %p301 = pneg %p300
    // Predicated region
    $region37: #{up_corrected_forward.3} parent=5 // pred_check
      _
    $region38: #{up_corrected_forward.3} parent=5 // pred_check_branch
      %303 = sbr.rel (%p300) target = $region40
    $region39: #{up_corrected_forward.3} parent=5 // pred_region
      %s304 = ssub.s32 %s11, 1
      %s305 = smul.u32 %s22, 16
      %s306 = ssub.s32 %s305, 1
      %p307 = scmp.gt.s32.totalorder %s306, 0
      %s308 = scalar_select %p307, %s306, 0
      %p309 = scmp.lt.s32.totalorder %s21, 1
      %s310 = scalar_select %p309, %s21, 1
      %p311 = scmp.lt.s32.totalorder %s308, 15
      %s312 = scalar_select %p311, %s308, 15
      %s313 = smul.addr %s312, 2
      %s314 = smul.addr %s310, 32
      %s315 = sadd.s32 %s313, %s314
      %s316 = smul.addr %s315, 4
      %s317 = scalar_lea.vmem %s0, %s316
      %p318 = pneg %p66
      %p319 = pneg %p63
      %s320 = smul.u32 16, %s22
      %p321 = scmp.lt.s32.totalorder %s21, 1
      %s322 = scalar_select %p321, %s21, 1
      %p323 = scmp.lt.s32.totalorder %s320, 15
      %s324 = scalar_select %p323, %s320, 15
      %s325 = smul.addr %s324, 2
      %s326 = smul.addr %s322, 32
      %s327 = sadd.s32 %s325, %s326
      %s328 = smul.addr %s327, 4
      %s329 = scalar_lea.vmem %s1, %s328
      %p330 = pneg %p94
      %p331 = pneg %p91
      %s332 = sadd.s32 %s22, 1
      %s333 = smul.u32 %s332, 16
      %p334 = scmp.lt.s32.totalorder %s333, 15
      %s335 = scalar_select %p334, %s333, 15
      %p336 = scmp.lt.s32.totalorder %s21, 1
      %s337 = scalar_select %p336, %s21, 1
      %p338 = scmp.lt.s32.totalorder %s335, 15
      %s339 = scalar_select %p338, %s335, 15
      %s340 = smul.addr %s339, 2
      %s341 = smul.addr %s337, 32
      %s342 = sadd.s32 %s340, %s341
      %s343 = smul.addr %s342, 4
      %s344 = scalar_lea.vmem %s2, %s343
      %p345 = pneg %p130
      %p346 = pneg %p127
      %p347 = scmp.lt.s32.totalorder %s23, 0
      %s348 = scalar_select %p347, %s23, 0
      %s349 = smul.addr %s348, 4
      %s350 = scalar_lea.vmem %s3, %s349
      %p351 = pneg %p156
      %p352 = pneg %p153
      %p353 = scmp.lt.s32.totalorder %s23, 0
      %s354 = scalar_select %p353, %s23, 0
      %s355 = scalar_lea.vmem %s4, %s354
      %p356 = pneg %p182
      %p357 = pneg %p179
      %p358 = pneg %p212
      %p359 = pneg %p209
      %s360 = smul.u32 16, %s22
      %p361 = scmp.lt.s32.totalorder %s21, 1
      %s362 = scalar_select %p361, %s21, 1
      %p363 = scmp.lt.s32.totalorder %s360, 15
      %s364 = scalar_select %p363, %s360, 15
      %p365 = scmp.lt.s32.totalorder %s23, 0
      %s366 = scalar_select %p365, %s23, 0
      %s367 = smul.addr %s364, 2
      %s368 = sadd.s32 %s366, %s367
      %s369 = smul.addr %s362, 32
      %s370 = sadd.s32 %s368, %s369
      %s371 = smul.addr %s370, 8
      %s372 = scalar_lea.vmem %s5, %s371
      %s373 = smul.u32 %s22, 16
      %s374 = ssub.s32 %s373, 1
      %p375 = scmp.gt.s32.totalorder %s374, 0
      %s376 = scalar_select %p375, %s374, 0
      %p377 = scmp.lt.s32.totalorder %s21, 1
      %s378 = scalar_select %p377, %s21, 1
      %p379 = scmp.lt.s32.totalorder %s376, 15
      %s380 = scalar_select %p379, %s376, 15
      %s381 = smul.addr %s380, 2
      %s382 = smul.addr %s378, 32
      %s383 = sadd.s32 %s381, %s382
      %s384 = smul.addr %s383, 4
      %s385 = scalar_lea.vmem %s0, %s384
      %s386 = smul.u32 %s22, 16
      %s387 = ssub.s32 %s386, 1
      %p388 = scmp.gt.s32.totalorder %s387, 0
      %s389 = scalar_select %p388, %s387, 0
      %s390 = smul.u32 16, %s22
      %p391 = scmp.lt.s32.totalorder %s21, 1
      %s392 = scalar_select %p391, %s21, 1
      %p393 = scmp.lt.s32.totalorder %s390, 15
      %s394 = scalar_select %p393, %s390, 15
      %s395 = smul.addr %s394, 2
      %s396 = smul.addr %s392, 32
      %s397 = sadd.s32 %s395, %s396
      %s398 = smul.addr %s397, 4
      %s399 = scalar_lea.vmem %s1, %s398
      %s400 = smul.u32 16, %s22
      %s401 = sadd.s32 %s22, 1
      %s402 = smul.u32 %s401, 16
      %p403 = scmp.lt.s32.totalorder %s402, 15
      %s404 = scalar_select %p403, %s402, 15
      %p405 = scmp.lt.s32.totalorder %s21, 1
      %s406 = scalar_select %p405, %s21, 1
      %p407 = scmp.lt.s32.totalorder %s404, 15
      %s408 = scalar_select %p407, %s404, 15
      %s409 = smul.addr %s408, 2
      %s410 = smul.addr %s406, 32
      %s411 = sadd.s32 %s409, %s410
      %s412 = smul.addr %s411, 4
      %s413 = scalar_lea.vmem %s2, %s412
      %s414 = sadd.s32 %s22, 1
      %s415 = smul.u32 %s414, 16
      %p416 = scmp.lt.s32.totalorder %s415, 15
      %s417 = scalar_select %p416, %s415, 15
      %p418 = scmp.lt.s32.totalorder %s23, 0
      %s419 = scalar_select %p418, %s23, 0
      %s420 = smul.addr %s419, 4
      %s421 = scalar_lea.vmem %s3, %s420
      %p422 = scmp.lt.s32.totalorder %s23, 0
      %s423 = scalar_select %p422, %s23, 0
      %s424 = scalar_lea.vmem %s4, %s423
      %s425 = smul.u32 16, %s22
      %p426 = scmp.lt.s32.totalorder %s21, 1
      %s427 = scalar_select %p426, %s21, 1
      %p428 = scmp.lt.s32.totalorder %s425, 15
      %s429 = scalar_select %p428, %s425, 15
      %p430 = scmp.lt.s32.totalorder %s23, 0
      %s431 = scalar_select %p430, %s23, 0
      %s432 = smul.addr %s429, 2
      %s433 = sadd.s32 %s431, %s432
      %s434 = smul.addr %s427, 32
      %s435 = sadd.s32 %s433, %s434
      %s436 = smul.addr %s435, 8
      %s437 = scalar_lea.vmem %s5, %s436
      %s438 = smul.u32 16, %s22
      %s440 = smul.u32 %s22, 16
      %s441 = ssub.s32 %s440, 1
      %v442 = vstv %s441
      %v443 = vadd.s32 %v442, 1
      %v444 = vadd.s32 %v442, 2
      %v445 = vadd.s32 %v442, 3
      %v446 = vadd.s32 %v442, 4
      %v447 = vadd.s32 %v442, 5
      %v448 = vadd.s32 %v442, 6
      %v449 = vadd.s32 %v442, 7
      %v450 = vadd.s32 %v442, 8
      %v451 = vadd.s32 %v442, 9
      %v452 = vadd.s32 %v442, 10
      %v453 = vadd.s32 %v442, 11
      %v454 = vadd.s32 %v442, 12
      %v455 = vadd.s32 %v442, 13
      %v456 = vadd.s32 %v442, 14
      %v457 = vadd.s32 %v442, 15
      %v458 = vadd.s32 %v442, 16
      %v459 = vadd.s32 %v442, 17
      %vm460 = vcmp.ge.s32.totalorder %v442, 0
      %vm461 = vcmp.ge.s32.totalorder %v443, 0
      %vm462 = vcmp.ge.s32.totalorder %v444, 0
      %vm463 = vcmp.ge.s32.totalorder %v445, 0
      %vm464 = vcmp.ge.s32.totalorder %v446, 0
      %vm465 = vcmp.ge.s32.totalorder %v447, 0
      %vm466 = vcmp.ge.s32.totalorder %v448, 0
      %vm467 = vcmp.ge.s32.totalorder %v449, 0
      %vm468 = vcmp.ge.s32.totalorder %v450, 0
      %vm469 = vcmp.ge.s32.totalorder %v451, 0
      %vm470 = vcmp.ge.s32.totalorder %v452, 0
      %vm471 = vcmp.ge.s32.totalorder %v453, 0
      %vm472 = vcmp.ge.s32.totalorder %v454, 0
      %vm473 = vcmp.ge.s32.totalorder %v455, 0
      %vm474 = vcmp.ge.s32.totalorder %v456, 0
      %vm475 = vcmp.ge.s32.totalorder %v457, 0
      %vm476 = vcmp.ge.s32.totalorder %v458, 0
      %vm477 = vcmp.ge.s32.totalorder %v459, 0
      %vm478 = vcmp.lt.s32.totalorder %v442, 16
      %vm479 = vcmp.lt.s32.totalorder %v443, 16
      %vm480 = vcmp.lt.s32.totalorder %v444, 16
      %vm481 = vcmp.lt.s32.totalorder %v445, 16
      %vm482 = vcmp.lt.s32.totalorder %v446, 16
      %vm483 = vcmp.lt.s32.totalorder %v447, 16
      %vm484 = vcmp.lt.s32.totalorder %v448, 16
      %vm485 = vcmp.lt.s32.totalorder %v449, 16
      %vm486 = vcmp.lt.s32.totalorder %v450, 16
      %vm487 = vcmp.lt.s32.totalorder %v451, 16
      %vm488 = vcmp.lt.s32.totalorder %v452, 16
      %vm489 = vcmp.lt.s32.totalorder %v453, 16
      %vm490 = vcmp.lt.s32.totalorder %v454, 16
      %vm491 = vcmp.lt.s32.totalorder %v455, 16
      %vm492 = vcmp.lt.s32.totalorder %v456, 16
      %vm493 = vcmp.lt.s32.totalorder %v457, 16
      %vm494 = vcmp.lt.s32.totalorder %v458, 16
      %vm495 = vcmp.lt.s32.totalorder %v459, 16
      %vm496 = vmand %vm460, %vm478
      %vm497 = vmand %vm461, %vm479
      %vm498 = vmand %vm462, %vm480
      %vm499 = vmand %vm463, %vm481
      %vm500 = vmand %vm464, %vm482
      %vm501 = vmand %vm465, %vm483
      %vm502 = vmand %vm466, %vm484
      %vm503 = vmand %vm467, %vm485
      %vm504 = vmand %vm468, %vm486
      %vm505 = vmand %vm469, %vm487
      %vm506 = vmand %vm470, %vm488
      %vm507 = vmand %vm471, %vm489
      %vm508 = vmand %vm472, %vm490
      %vm509 = vmand %vm473, %vm491
      %vm510 = vmand %vm474, %vm492
      %vm511 = vmand %vm475, %vm493
      %vm512 = vmand %vm476, %vm494
      %vm513 = vmand %vm477, %vm495
      %v514 = vld [vmem:[%s385] sm:$0xf]
      %v515 = vld [vmem:[%s385 + $0x4] sm:$0xf]
      %v516 = vld [vmem:[%s399] sm:$0xf]
      %v517 = vld [vmem:[%s399 + $0x4] sm:$0xf]
      %v518 = vld [vmem:[%s399 + $0x8] sm:$0xf]
      %v519 = vld [vmem:[%s399 + $0xc] sm:$0xf]
      %v520 = vld [vmem:[%s399 + $0x10] sm:$0xf]
      %v521 = vld [vmem:[%s399 + $0x14] sm:$0xf]
      %v522 = vld [vmem:[%s399 + $0x18] sm:$0xf]
      %v523 = vld [vmem:[%s399 + $0x1c] sm:$0xf]
      %v524 = vld [vmem:[%s399 + $0x20] sm:$0xf]
      %v525 = vld [vmem:[%s399 + $0x24] sm:$0xf]
      %v526 = vld [vmem:[%s399 + $0x28] sm:$0xf]
      %v527 = vld [vmem:[%s399 + $0x2c] sm:$0xf]
      %v528 = vld [vmem:[%s399 + $0x30] sm:$0xf]
      %v529 = vld [vmem:[%s399 + $0x34] sm:$0xf]
      %v530 = vld [vmem:[%s399 + $0x38] sm:$0xf]
      %v531 = vld [vmem:[%s399 + $0x3c] sm:$0xf]
      %v532 = vld [vmem:[%s399 + $0x40] sm:$0xf]
      %v533 = vld [vmem:[%s399 + $0x44] sm:$0xf]
      %v534 = vld [vmem:[%s399 + $0x48] sm:$0xf]
      %v535 = vld [vmem:[%s399 + $0x4c] sm:$0xf]
      %v536 = vld [vmem:[%s399 + $0x50] sm:$0xf]
      %v537 = vld [vmem:[%s399 + $0x54] sm:$0xf]
      %v538 = vld [vmem:[%s399 + $0x58] sm:$0xf]
      %v539 = vld [vmem:[%s399 + $0x5c] sm:$0xf]
      %v540 = vld [vmem:[%s399 + $0x60] sm:$0xf]
      %v541 = vld [vmem:[%s399 + $0x64] sm:$0xf]
      %v542 = vld [vmem:[%s399 + $0x68] sm:$0xf]
      %v543 = vld [vmem:[%s399 + $0x6c] sm:$0xf]
      %v544 = vld [vmem:[%s399 + $0x70] sm:$0xf]
      %v545 = vld [vmem:[%s399 + $0x74] sm:$0xf]
      %v546 = vld [vmem:[%s399 + $0x78] sm:$0xf]
      %v547 = vld [vmem:[%s399 + $0x7c] sm:$0xf]
      %v548 = vld [vmem:[%s413] sm:$0xf]
      %v549 = vld [vmem:[%s413 + $0x4] sm:$0xf]
      %v550 = vsel %vm496, 1, 0
      %v551 = vsel %vm497, 1, 0
      %v552 = vsel %vm498, 1, 0
      %v553 = vsel %vm499, 1, 0
      %v554 = vsel %vm500, 1, 0
      %v555 = vsel %vm501, 1, 0
      %v556 = vsel %vm502, 1, 0
      %v557 = vsel %vm503, 1, 0
      %v558 = vsel %vm504, 1, 0
      %v559 = vsel %vm505, 1, 0
      %v560 = vsel %vm506, 1, 0
      %v561 = vsel %vm507, 1, 0
      %v562 = vsel %vm508, 1, 0
      %v563 = vsel %vm509, 1, 0
      %v564 = vsel %vm510, 1, 0
      %v565 = vsel %vm511, 1, 0
      %v566 = vsel %vm512, 1, 0
      %v567 = vsel %vm513, 1, 0
      %vm568 = vcmp.eq.s32.totalorder %v550, 1
      %vm569 = vcmp.eq.s32.totalorder %v551, 1
      %vm570 = vcmp.eq.s32.totalorder %v552, 1
      %vm571 = vcmp.eq.s32.totalorder %v553, 1
      %vm572 = vcmp.eq.s32.totalorder %v554, 1
      %vm573 = vcmp.eq.s32.totalorder %v555, 1
      %vm574 = vcmp.eq.s32.totalorder %v556, 1
      %vm575 = vcmp.eq.s32.totalorder %v557, 1
      %vm576 = vcmp.eq.s32.totalorder %v558, 1
      %vm577 = vcmp.eq.s32.totalorder %v559, 1
      %vm578 = vcmp.eq.s32.totalorder %v560, 1
      %vm579 = vcmp.eq.s32.totalorder %v561, 1
      %vm580 = vcmp.eq.s32.totalorder %v562, 1
      %vm581 = vcmp.eq.s32.totalorder %v563, 1
      %vm582 = vcmp.eq.s32.totalorder %v564, 1
      %vm583 = vcmp.eq.s32.totalorder %v565, 1
      %vm584 = vcmp.eq.s32.totalorder %v566, 1
      %vm585 = vcmp.eq.s32.totalorder %v567, 1
      %v586 = vsel %vm568, %v514, 0
      %v587 = vsel %vm568, %v515, 0
      %v588 = vsel %vm569, %v516, 0
      %v589 = vsel %vm569, %v517, 0
      %v590 = vsel %vm570, %v518, 0
      %v591 = vsel %vm570, %v519, 0
      %v592 = vsel %vm571, %v520, 0
      %v593 = vsel %vm571, %v521, 0
      %v594 = vsel %vm572, %v522, 0
      %v595 = vsel %vm572, %v523, 0
      %v596 = vsel %vm573, %v524, 0
      %v597 = vsel %vm573, %v525, 0
      %v598 = vsel %vm574, %v526, 0
      %v599 = vsel %vm574, %v527, 0
      %v600 = vsel %vm575, %v528, 0
      %v601 = vsel %vm575, %v529, 0
      %v602 = vsel %vm576, %v530, 0
      %v603 = vsel %vm576, %v531, 0
      %v604 = vsel %vm577, %v532, 0
      %v605 = vsel %vm577, %v533, 0
      %v606 = vsel %vm578, %v534, 0
      %v607 = vsel %vm578, %v535, 0
      %v608 = vsel %vm579, %v536, 0
      %v609 = vsel %vm579, %v537, 0
      %v610 = vsel %vm580, %v538, 0
      %v611 = vsel %vm580, %v539, 0
      %v612 = vsel %vm581, %v540, 0
      %v613 = vsel %vm581, %v541, 0
      %v614 = vsel %vm582, %v542, 0
      %v615 = vsel %vm582, %v543, 0
      %v616 = vsel %vm583, %v544, 0
      %v617 = vsel %vm583, %v545, 0
      %v618 = vsel %vm584, %v546, 0
      %v619 = vsel %vm584, %v547, 0
      %v620 = vsel %vm585, %v548, 0
      %v621 = vsel %vm585, %v549, 0
      %v658 = vunpack.c.l.b16 %v586
      %v659 = vunpack.c.l.b16 %v587
      %v660 = vunpack.c.l.b16 %v588
      %v661 = vunpack.c.l.b16 %v589
      %v662 = vunpack.c.l.b16 %v590
      %v663 = vunpack.c.l.b16 %v591
      %v664 = vunpack.c.l.b16 %v592
      %v665 = vunpack.c.l.b16 %v593
      %v666 = vunpack.c.l.b16 %v594
      %v667 = vunpack.c.l.b16 %v595
      %v668 = vunpack.c.l.b16 %v596
      %v669 = vunpack.c.l.b16 %v597
      %v670 = vunpack.c.l.b16 %v598
      %v671 = vunpack.c.l.b16 %v599
      %v672 = vunpack.c.l.b16 %v600
      %v673 = vunpack.c.l.b16 %v601
      %v674 = vunpack.c.l.b16 %v602
      %v675 = vunpack.c.l.b16 %v603
      %v676 = vunpack.c.l.b16 %v604
      %v677 = vunpack.c.l.b16 %v605
      %v678 = vunpack.c.l.b16 %v606
      %v679 = vunpack.c.l.b16 %v607
      %v680 = vunpack.c.l.b16 %v608
      %v681 = vunpack.c.l.b16 %v609
      %v682 = vunpack.c.l.b16 %v610
      %v683 = vunpack.c.l.b16 %v611
      %v684 = vunpack.c.l.b16 %v612
      %v685 = vunpack.c.l.b16 %v613
      %v686 = vunpack.c.l.b16 %v614
      %v687 = vunpack.c.l.b16 %v615
      %v688 = vunpack.c.l.b16 %v616
      %v689 = vunpack.c.l.b16 %v617
      %v690 = vunpack.c.l.b16 %v618
      %v691 = vunpack.c.l.b16 %v619
      %v692 = vunpack.c.l.b16 %v620
      %v693 = vunpack.c.l.b16 %v621
      %v694 = vpack.c.b16 %v659, %v658
      %v695 = vpack.c.b16 %v661, %v660
      %v696 = vpack.c.b16 %v663, %v662
      %v697 = vpack.c.b16 %v665, %v664
      %v698 = vpack.c.b16 %v667, %v666
      %v699 = vpack.c.b16 %v669, %v668
      %v700 = vpack.c.b16 %v671, %v670
      %v701 = vpack.c.b16 %v673, %v672
      %v702 = vpack.c.b16 %v675, %v674
      %v703 = vpack.c.b16 %v677, %v676
      %v704 = vpack.c.b16 %v679, %v678
      %v705 = vpack.c.b16 %v681, %v680
      %v706 = vpack.c.b16 %v683, %v682
      %v707 = vpack.c.b16 %v685, %v684
      %v708 = vpack.c.b16 %v687, %v686
      %v709 = vpack.c.b16 %v689, %v688
      %v710 = vpack.c.b16 %v691, %v690
      %v711 = vpack.c.b16 %v693, %v692
      %v713 = vshrl.u32 %v694, 16
      %v715 = vrot.slane %v713, 7
      %v716 = vshll.u32 %v694, 16
      %v718 = vor.u32 %v715, %v716
      %v720 = vshrl.u32 %v695, 16
      %v722 = vrot.slane %v720, 7
      %v723 = vshll.u32 %v695, 16
      %v725 = vor.u32 %v722, %v723
      %v727 = vshrl.u32 %v696, 16
      %v729 = vrot.slane %v727, 7
      %v730 = vshll.u32 %v696, 16
      %v732 = vor.u32 %v729, %v730
      %v734 = vshrl.u32 %v697, 16
      %v736 = vrot.slane %v734, 7
      %v737 = vshll.u32 %v697, 16
      %v739 = vor.u32 %v736, %v737
      %v741 = vshrl.u32 %v698, 16
      %v743 = vrot.slane %v741, 7
      %v744 = vshll.u32 %v698, 16
      %v746 = vor.u32 %v743, %v744
      %v748 = vshrl.u32 %v699, 16
      %v750 = vrot.slane %v748, 7
      %v751 = vshll.u32 %v699, 16
      %v753 = vor.u32 %v750, %v751
      %v755 = vshrl.u32 %v700, 16
      %v757 = vrot.slane %v755, 7
      %v758 = vshll.u32 %v700, 16
      %v760 = vor.u32 %v757, %v758
      %v762 = vshrl.u32 %v701, 16
      %v764 = vrot.slane %v762, 7
      %v765 = vshll.u32 %v701, 16
      %v767 = vor.u32 %v764, %v765
      %v769 = vshrl.u32 %v702, 16
      %v771 = vrot.slane %v769, 7
      %v772 = vshll.u32 %v702, 16
      %v774 = vor.u32 %v771, %v772
      %v776 = vshrl.u32 %v703, 16
      %v778 = vrot.slane %v776, 7
      %v779 = vshll.u32 %v703, 16
      %v781 = vor.u32 %v778, %v779
      %v783 = vshrl.u32 %v704, 16
      %v785 = vrot.slane %v783, 7
      %v786 = vshll.u32 %v704, 16
      %v788 = vor.u32 %v785, %v786
      %v790 = vshrl.u32 %v705, 16
      %v792 = vrot.slane %v790, 7
      %v793 = vshll.u32 %v705, 16
      %v795 = vor.u32 %v792, %v793
      %v797 = vshrl.u32 %v706, 16
      %v799 = vrot.slane %v797, 7
      %v800 = vshll.u32 %v706, 16
      %v802 = vor.u32 %v799, %v800
      %v804 = vshrl.u32 %v707, 16
      %v806 = vrot.slane %v804, 7
      %v807 = vshll.u32 %v707, 16
      %v809 = vor.u32 %v806, %v807
      %v811 = vshrl.u32 %v708, 16
      %v813 = vrot.slane %v811, 7
      %v814 = vshll.u32 %v708, 16
      %v816 = vor.u32 %v813, %v814
      %v818 = vshrl.u32 %v709, 16
      %v820 = vrot.slane %v818, 7
      %v821 = vshll.u32 %v709, 16
      %v823 = vor.u32 %v820, %v821
      %v825 = vshrl.u32 %v710, 16
      %v827 = vrot.slane %v825, 7
      %v828 = vshll.u32 %v710, 16
      %v830 = vor.u32 %v827, %v828
      %v832 = vshrl.u32 %v711, 16
      %v834 = vrot.slane %v832, 7
      %v835 = vshll.u32 %v711, 16
      %v837 = vor.u32 %v834, %v835
      %vm874 = vcmask 1040384
      %vm875 = vsmask.f32 256
      %vm876 = vmand %vm874, %vm875
      %v877 = vsel %vm876, 0, %v718
      %v878 = vsel %vm876, 0, %v725
      %v879 = vsel %vm876, 0, %v732
      %v880 = vsel %vm876, 0, %v739
      %v881 = vsel %vm876, 0, %v746
      %v882 = vsel %vm876, 0, %v753
      %v883 = vsel %vm876, 0, %v760
      %v884 = vsel %vm876, 0, %v767
      %v885 = vsel %vm876, 0, %v774
      %v886 = vsel %vm876, 0, %v781
      %v887 = vsel %vm876, 0, %v788
      %v888 = vsel %vm876, 0, %v795
      %v889 = vsel %vm876, 0, %v802
      %v890 = vsel %vm876, 0, %v809
      %v891 = vsel %vm876, 0, %v816
      %v892 = vsel %vm876, 0, %v823
      %v893 = vsel %vm876, 0, %v830
      %v894 = vsel %vm876, 0, %v837
      %v895 = vsel %vm876, %v715, 0
      %v896 = vsel %vm876, %v722, 0
      %v897 = vsel %vm876, %v729, 0
      %v898 = vsel %vm876, %v736, 0
      %v899 = vsel %vm876, %v743, 0
      %v900 = vsel %vm876, %v750, 0
      %v901 = vsel %vm876, %v757, 0
      %v902 = vsel %vm876, %v764, 0
      %v903 = vsel %vm876, %v771, 0
      %v904 = vsel %vm876, %v778, 0
      %v905 = vsel %vm876, %v785, 0
      %v906 = vsel %vm876, %v792, 0
      %v907 = vsel %vm876, %v799, 0
      %v908 = vsel %vm876, %v806, 0
      %v909 = vsel %vm876, %v813, 0
      %v910 = vsel %vm876, %v820, 0
      %v911 = vsel %vm876, %v827, 0
      %v912 = vsel %vm876, %v834, 0
      %vm913 = vsmask.f32 7424
      %v915 = vshrl.u32 %v877, 16
      %v917 = vshll.u32 %v877, 16
      %v919 = vrot.slane %v917, 1
      %v920 = vor.u32 %v915, %v919
      %v922 = vshll.u32 %v895, 16
      %v924 = vrot.slane %v922, 1
      %v925 = vsel %vm913, %v920, %v924
      %v927 = vshrl.u32 %v878, 16
      %v929 = vshll.u32 %v878, 16
      %v931 = vrot.slane %v929, 1
      %v932 = vor.u32 %v927, %v931
      %v934 = vshll.u32 %v896, 16
      %v936 = vrot.slane %v934, 1
      %v937 = vsel %vm913, %v932, %v936
      %v939 = vshrl.u32 %v879, 16
      %v941 = vshll.u32 %v879, 16
      %v943 = vrot.slane %v941, 1
      %v944 = vor.u32 %v939, %v943
      %v946 = vshll.u32 %v897, 16
      %v948 = vrot.slane %v946, 1
      %v949 = vsel %vm913, %v944, %v948
      %v951 = vshrl.u32 %v880, 16
      %v953 = vshll.u32 %v880, 16
      %v955 = vrot.slane %v953, 1
      %v956 = vor.u32 %v951, %v955
      %v958 = vshll.u32 %v898, 16
      %v960 = vrot.slane %v958, 1
      %v961 = vsel %vm913, %v956, %v960
      %v963 = vshrl.u32 %v881, 16
      %v965 = vshll.u32 %v881, 16
      %v967 = vrot.slane %v965, 1
      %v968 = vor.u32 %v963, %v967
      %v970 = vshll.u32 %v899, 16
      %v972 = vrot.slane %v970, 1
      %v973 = vsel %vm913, %v968, %v972
      %v975 = vshrl.u32 %v882, 16
      %v977 = vshll.u32 %v882, 16
      %v979 = vrot.slane %v977, 1
      %v980 = vor.u32 %v975, %v979
      %v982 = vshll.u32 %v900, 16
      %v984 = vrot.slane %v982, 1
      %v985 = vsel %vm913, %v980, %v984
      %v987 = vshrl.u32 %v883, 16
      %v989 = vshll.u32 %v883, 16
      %v991 = vrot.slane %v989, 1
      %v992 = vor.u32 %v987, %v991
      %v994 = vshll.u32 %v901, 16
      %v996 = vrot.slane %v994, 1
      %v997 = vsel %vm913, %v992, %v996
      %v999 = vshrl.u32 %v884, 16
      %v1001 = vshll.u32 %v884, 16
      %v1003 = vrot.slane %v1001, 1
      %v1004 = vor.u32 %v999, %v1003
      %v1006 = vshll.u32 %v902, 16
      %v1008 = vrot.slane %v1006, 1
      %v1009 = vsel %vm913, %v1004, %v1008
      %v1011 = vshrl.u32 %v885, 16
      %v1013 = vshll.u32 %v885, 16
      %v1015 = vrot.slane %v1013, 1
      %v1016 = vor.u32 %v1011, %v1015
      %v1018 = vshll.u32 %v903, 16
      %v1020 = vrot.slane %v1018, 1
      %v1021 = vsel %vm913, %v1016, %v1020
      %v1023 = vshrl.u32 %v886, 16
      %v1025 = vshll.u32 %v886, 16
      %v1027 = vrot.slane %v1025, 1
      %v1028 = vor.u32 %v1023, %v1027
      %v1030 = vshll.u32 %v904, 16
      %v1032 = vrot.slane %v1030, 1
      %v1033 = vsel %vm913, %v1028, %v1032
      %v1035 = vshrl.u32 %v887, 16
      %v1037 = vshll.u32 %v887, 16
      %v1039 = vrot.slane %v1037, 1
      %v1040 = vor.u32 %v1035, %v1039
      %v1042 = vshll.u32 %v905, 16
      %v1044 = vrot.slane %v1042, 1
      %v1045 = vsel %vm913, %v1040, %v1044
      %v1047 = vshrl.u32 %v888, 16
      %v1049 = vshll.u32 %v888, 16
      %v1051 = vrot.slane %v1049, 1
      %v1052 = vor.u32 %v1047, %v1051
      %v1054 = vshll.u32 %v906, 16
      %v1056 = vrot.slane %v1054, 1
      %v1057 = vsel %vm913, %v1052, %v1056
      %v1059 = vshrl.u32 %v889, 16
      %v1061 = vshll.u32 %v889, 16
      %v1063 = vrot.slane %v1061, 1
      %v1064 = vor.u32 %v1059, %v1063
      %v1066 = vshll.u32 %v907, 16
      %v1068 = vrot.slane %v1066, 1
      %v1069 = vsel %vm913, %v1064, %v1068
      %v1071 = vshrl.u32 %v890, 16
      %v1073 = vshll.u32 %v890, 16
      %v1075 = vrot.slane %v1073, 1
      %v1076 = vor.u32 %v1071, %v1075
      %v1078 = vshll.u32 %v908, 16
      %v1080 = vrot.slane %v1078, 1
      %v1081 = vsel %vm913, %v1076, %v1080
      %v1083 = vshrl.u32 %v891, 16
      %v1085 = vshll.u32 %v891, 16
      %v1087 = vrot.slane %v1085, 1
      %v1088 = vor.u32 %v1083, %v1087
      %v1090 = vshll.u32 %v909, 16
      %v1092 = vrot.slane %v1090, 1
      %v1093 = vsel %vm913, %v1088, %v1092
      %v1095 = vshrl.u32 %v892, 16
      %v1097 = vshll.u32 %v892, 16
      %v1099 = vrot.slane %v1097, 1
      %v1100 = vor.u32 %v1095, %v1099
      %v1102 = vshll.u32 %v910, 16
      %v1104 = vrot.slane %v1102, 1
      %v1105 = vsel %vm913, %v1100, %v1104
      %vm1154 = vcmask 1046528
      %v1155 = vrot.slane %v877, 1
      %v1156 = vrot.slane %v895, 1
      %v1157 = vsel %vm1154, %v1155, %v1156
      %v1158 = vrot.slane %v878, 1
      %v1159 = vrot.slane %v896, 1
      %v1160 = vsel %vm1154, %v1158, %v1159
      %v1161 = vrot.slane %v879, 1
      %v1162 = vrot.slane %v897, 1
      %v1163 = vsel %vm1154, %v1161, %v1162
      %v1164 = vrot.slane %v880, 1
      %v1165 = vrot.slane %v898, 1
      %v1166 = vsel %vm1154, %v1164, %v1165
      %v1167 = vrot.slane %v881, 1
      %v1168 = vrot.slane %v899, 1
      %v1169 = vsel %vm1154, %v1167, %v1168
      %v1170 = vrot.slane %v882, 1
      %v1171 = vrot.slane %v900, 1
      %v1172 = vsel %vm1154, %v1170, %v1171
      %v1173 = vrot.slane %v883, 1
      %v1174 = vrot.slane %v901, 1
      %v1175 = vsel %vm1154, %v1173, %v1174
      %v1176 = vrot.slane %v884, 1
      %v1177 = vrot.slane %v902, 1
      %v1178 = vsel %vm1154, %v1176, %v1177
      %v1179 = vrot.slane %v885, 1
      %v1180 = vrot.slane %v903, 1
      %v1181 = vsel %vm1154, %v1179, %v1180
      %v1182 = vrot.slane %v886, 1
      %v1183 = vrot.slane %v904, 1
      %v1184 = vsel %vm1154, %v1182, %v1183
      %v1185 = vrot.slane %v887, 1
      %v1186 = vrot.slane %v905, 1
      %v1187 = vsel %vm1154, %v1185, %v1186
      %v1188 = vrot.slane %v888, 1
      %v1189 = vrot.slane %v906, 1
      %v1190 = vsel %vm1154, %v1188, %v1189
      %v1191 = vrot.slane %v889, 1
      %v1192 = vrot.slane %v907, 1
      %v1193 = vsel %vm1154, %v1191, %v1192
      %v1194 = vrot.slane %v890, 1
      %v1195 = vrot.slane %v908, 1
      %v1196 = vsel %vm1154, %v1194, %v1195
      %v1197 = vrot.slane %v891, 1
      %v1198 = vrot.slane %v909, 1
      %v1199 = vsel %vm1154, %v1197, %v1198
      %v1200 = vrot.slane %v892, 1
      %v1201 = vrot.slane %v910, 1
      %v1202 = vsel %vm1154, %v1200, %v1201
      %v1219 = vld [vmem:[%s421] sm:$0xf]
      %v1220 = vld [vmem:[%s421 + $0x4] sm:$0xf]
      %v1221 = vld [vmem:[%s421 + $0x8] sm:$0xf]
      %v1222 = vld [vmem:[%s421 + $0xc] sm:$0xf]
      %v1223 = vld [vmem:[%s421 + $0x10] sm:$0xf]
      %v1224 = vld [vmem:[%s421 + $0x14] sm:$0xf]
      %v1225 = vld [vmem:[%s421 + $0x18] sm:$0xf]
      %v1226 = vld [vmem:[%s421 + $0x1c] sm:$0xf]
      %v1227 = vld [vmem:[%s421 + $0x20] sm:$0xf]
      %v1228 = vld [vmem:[%s421 + $0x24] sm:$0xf]
      %v1229 = vld [vmem:[%s421 + $0x28] sm:$0xf]
      %v1230 = vld [vmem:[%s421 + $0x2c] sm:$0xf]
      %v1231 = vld [vmem:[%s421 + $0x30] sm:$0xf]
      %v1232 = vld [vmem:[%s421 + $0x34] sm:$0xf]
      %v1233 = vld [vmem:[%s421 + $0x38] sm:$0xf]
      %v1234 = vld [vmem:[%s421 + $0x3c] sm:$0xf]
      %v1235 = vld [vmem:[%s421 + $0x40] sm:$0xf]
      %v1236 = vld [vmem:[%s421 + $0x44] sm:$0xf]
      %v1237 = vld [vmem:[%s421 + $0x48] sm:$0xf]
      %v1238 = vld [vmem:[%s421 + $0x4c] sm:$0xf]
      %v1239 = vld [vmem:[%s421 + $0x50] sm:$0xf]
      %v1240 = vld [vmem:[%s421 + $0x54] sm:$0xf]
      %v1241 = vld [vmem:[%s421 + $0x58] sm:$0xf]
      %v1242 = vld [vmem:[%s421 + $0x5c] sm:$0xf]
      %v1243 = vld [vmem:[%s421 + $0x60] sm:$0xf]
      %v1244 = vld [vmem:[%s421 + $0x64] sm:$0xf]
      %v1245 = vld [vmem:[%s421 + $0x68] sm:$0xf]
      %v1246 = vld [vmem:[%s421 + $0x6c] sm:$0xf]
      %v1247 = vld [vmem:[%s421 + $0x70] sm:$0xf]
      %v1248 = vld [vmem:[%s421 + $0x74] sm:$0xf]
      %v1249 = vld [vmem:[%s421 + $0x78] sm:$0xf]
      %v1250 = vld [vmem:[%s421 + $0x7c] sm:$0xf]
      %v1251 = vld [vmem:[%s421 + $0x80] sm:$0xf]
      %v1252 = vld [vmem:[%s421 + $0x84] sm:$0xf]
      %v1253 = vld [vmem:[%s421 + $0x88] sm:$0xf]
      %v1254 = vld [vmem:[%s421 + $0x8c] sm:$0xf]
      %v1255 = vld [vmem:[%s421 + $0x90] sm:$0xf]
      %v1256 = vld [vmem:[%s421 + $0x94] sm:$0xf]
      %v1257 = vld [vmem:[%s421 + $0x98] sm:$0xf]
      %v1258 = vld [vmem:[%s421 + $0x9c] sm:$0xf]
      %v1259 = vld [vmem:[%s421 + $0xa0] sm:$0xf]
      %v1260 = vld [vmem:[%s421 + $0xa4] sm:$0xf]
      %v1261 = vld [vmem:[%s421 + $0xa8] sm:$0xf]
      %v1262 = vld [vmem:[%s421 + $0xac] sm:$0xf]
      %v1263 = vld [vmem:[%s421 + $0xb0] sm:$0xf]
      %v1264 = vld [vmem:[%s421 + $0xb4] sm:$0xf]
      %v1265 = vld [vmem:[%s421 + $0xb8] sm:$0xf]
      %v1266 = vld [vmem:[%s421 + $0xbc] sm:$0xf]
      %v1268 = vshrl.u32 %v893, 16
      %v1270 = vshll.u32 %v893, 16
      %v1272 = vrot.slane %v1270, 1
      %v1273 = vor.u32 %v1268, %v1272
      %v1275 = vshll.u32 %v911, 16
      %v1277 = vrot.slane %v1275, 1
      %v1278 = vsel %vm913, %v1273, %v1277
      %v1282 = vrot.slane %v893, 1
      %v1283 = vrot.slane %v911, 1
      %v1284 = vsel %vm1154, %v1282, %v1283
      %s1286 = scalar_lea.vmem %s421, 192
      %v1287 = vld [vmem:[%s1286] sm:$0xf]
      %v1288 = vld [vmem:[%s1286 + $0x4] sm:$0xf]
      %v1289 = vld [vmem:[%s1286 + $0x8] sm:$0xf]
      %v1290 = vld [vmem:[%s1286 + $0xc] sm:$0xf]
      %v1291 = vld [vmem:[%s1286 + $0x10] sm:$0xf]
      %v1292 = vld [vmem:[%s1286 + $0x14] sm:$0xf]
      %v1293 = vld [vmem:[%s1286 + $0x18] sm:$0xf]
      %v1294 = vld [vmem:[%s1286 + $0x1c] sm:$0xf]
      %v1295 = vld [vmem:[%s1286 + $0x20] sm:$0xf]
      %v1296 = vld [vmem:[%s1286 + $0x24] sm:$0xf]
      %v1297 = vld [vmem:[%s1286 + $0x28] sm:$0xf]
      %v1298 = vld [vmem:[%s1286 + $0x2c] sm:$0xf]
      %v1299 = vld [vmem:[%s1286 + $0x30] sm:$0xf]
      %v1300 = vld [vmem:[%s1286 + $0x34] sm:$0xf]
      %v1301 = vld [vmem:[%s1286 + $0x38] sm:$0xf]
      %v1302 = vld [vmem:[%s1286 + $0x3c] sm:$0xf]
      %v1303 = vld [vmem:[%s1286 + $0x40] sm:$0xf]
      %v1304 = vld [vmem:[%s1286 + $0x44] sm:$0xf]
      %v1305 = vld [vmem:[%s1286 + $0x48] sm:$0xf]
      %v1306 = vld [vmem:[%s1286 + $0x4c] sm:$0xf]
      %v1307 = vld [vmem:[%s1286 + $0x50] sm:$0xf]
      %v1308 = vld [vmem:[%s1286 + $0x54] sm:$0xf]
      %v1309 = vld [vmem:[%s1286 + $0x58] sm:$0xf]
      %v1310 = vld [vmem:[%s1286 + $0x5c] sm:$0xf]
      %v1311 = vld [vmem:[%s1286 + $0x60] sm:$0xf]
      %v1312 = vld [vmem:[%s1286 + $0x64] sm:$0xf]
      %v1313 = vld [vmem:[%s1286 + $0x68] sm:$0xf]
      %v1314 = vld [vmem:[%s1286 + $0x6c] sm:$0xf]
      %v1315 = vld [vmem:[%s1286 + $0x70] sm:$0xf]
      %v1316 = vld [vmem:[%s1286 + $0x74] sm:$0xf]
      %v1317 = vld [vmem:[%s1286 + $0x78] sm:$0xf]
      %v1318 = vld [vmem:[%s1286 + $0x7c] sm:$0xf]
      %v1319 = vld [vmem:[%s1286 + $0x80] sm:$0xf]
      %v1320 = vld [vmem:[%s1286 + $0x84] sm:$0xf]
      %v1321 = vld [vmem:[%s1286 + $0x88] sm:$0xf]
      %v1322 = vld [vmem:[%s1286 + $0x8c] sm:$0xf]
      %v1323 = vld [vmem:[%s1286 + $0x90] sm:$0xf]
      %v1324 = vld [vmem:[%s1286 + $0x94] sm:$0xf]
      %v1325 = vld [vmem:[%s1286 + $0x98] sm:$0xf]
      %v1326 = vld [vmem:[%s1286 + $0x9c] sm:$0xf]
      %v1327 = vld [vmem:[%s1286 + $0xa0] sm:$0xf]
      %v1328 = vld [vmem:[%s1286 + $0xa4] sm:$0xf]
      %v1329 = vld [vmem:[%s1286 + $0xa8] sm:$0xf]
      %v1330 = vld [vmem:[%s1286 + $0xac] sm:$0xf]
      %v1331 = vld [vmem:[%s1286 + $0xb0] sm:$0xf]
      %v1332 = vld [vmem:[%s1286 + $0xb4] sm:$0xf]
      %v1333 = vld [vmem:[%s1286 + $0xb8] sm:$0xf]
      %v1334 = vld [vmem:[%s1286 + $0xbc] sm:$0xf]
      %v1383 = vunpack.c.l.b16 %v1287
      %v1384 = vunpack.c.l.b16 %v1288
      %v1385 = vunpack.c.l.b16 %v1289
      %v1386 = vunpack.c.l.b16 %v1290
      %v1387 = vunpack.c.l.b16 %v1291
      %v1388 = vunpack.c.l.b16 %v1292
      %v1389 = vunpack.c.l.b16 %v1293
      %v1390 = vunpack.c.l.b16 %v1294
      %v1391 = vunpack.c.l.b16 %v1295
      %v1392 = vunpack.c.l.b16 %v1296
      %v1393 = vunpack.c.l.b16 %v1297
      %v1394 = vunpack.c.l.b16 %v1298
      %v1395 = vunpack.c.l.b16 %v1299
      %v1396 = vunpack.c.l.b16 %v1300
      %v1397 = vunpack.c.l.b16 %v1301
      %v1398 = vunpack.c.l.b16 %v1302
      %v1399 = vunpack.c.l.b16 %v1303
      %v1400 = vunpack.c.l.b16 %v1304
      %v1401 = vunpack.c.l.b16 %v1305
      %v1402 = vunpack.c.l.b16 %v1306
      %v1403 = vunpack.c.l.b16 %v1307
      %v1404 = vunpack.c.l.b16 %v1308
      %v1405 = vunpack.c.l.b16 %v1309
      %v1406 = vunpack.c.l.b16 %v1310
      %v1407 = vunpack.c.l.b16 %v1311
      %v1408 = vunpack.c.l.b16 %v1312
      %v1409 = vunpack.c.l.b16 %v1313
      %v1410 = vunpack.c.l.b16 %v1314
      %v1411 = vunpack.c.l.b16 %v1315
      %v1412 = vunpack.c.l.b16 %v1316
      %v1413 = vunpack.c.l.b16 %v1317
      %v1414 = vunpack.c.l.b16 %v1318
      %v1415 = vunpack.c.l.b16 %v1319
      %v1416 = vunpack.c.l.b16 %v1320
      %v1417 = vunpack.c.l.b16 %v1321
      %v1418 = vunpack.c.l.b16 %v1322
      %v1419 = vunpack.c.l.b16 %v1323
      %v1420 = vunpack.c.l.b16 %v1324
      %v1421 = vunpack.c.l.b16 %v1325
      %v1422 = vunpack.c.l.b16 %v1326
      %v1423 = vunpack.c.l.b16 %v1327
      %v1424 = vunpack.c.l.b16 %v1328
      %v1425 = vunpack.c.l.b16 %v1329
      %v1426 = vunpack.c.l.b16 %v1330
      %v1427 = vunpack.c.l.b16 %v1331
      %v1428 = vunpack.c.l.b16 %v1332
      %v1429 = vunpack.c.l.b16 %v1333
      %v1430 = vunpack.c.l.b16 %v1334
      %v1431 = vpack.c.b16 %v1384, %v1383
      %v1432 = vpack.c.b16 %v1386, %v1385
      %v1433 = vpack.c.b16 %v1388, %v1387
      %v1434 = vpack.c.b16 %v1390, %v1389
      %v1435 = vpack.c.b16 %v1392, %v1391
      %v1436 = vpack.c.b16 %v1394, %v1393
      %v1437 = vpack.c.b16 %v1396, %v1395
      %v1438 = vpack.c.b16 %v1398, %v1397
      %v1439 = vpack.c.b16 %v1400, %v1399
      %v1440 = vpack.c.b16 %v1402, %v1401
      %v1441 = vpack.c.b16 %v1404, %v1403
      %v1442 = vpack.c.b16 %v1406, %v1405
      %v1443 = vpack.c.b16 %v1408, %v1407
      %v1444 = vpack.c.b16 %v1410, %v1409
      %v1445 = vpack.c.b16 %v1412, %v1411
      %v1446 = vpack.c.b16 %v1414, %v1413
      %v1447 = vpack.c.b16 %v1416, %v1415
      %v1448 = vpack.c.b16 %v1418, %v1417
      %v1449 = vpack.c.b16 %v1420, %v1419
      %v1450 = vpack.c.b16 %v1422, %v1421
      %v1451 = vpack.c.b16 %v1424, %v1423
      %v1452 = vpack.c.b16 %v1426, %v1425
      %v1453 = vpack.c.b16 %v1428, %v1427
      %v1454 = vpack.c.b16 %v1430, %v1429
      %1479 = vmatpush.bf16.msra.mxu0 %v1438
      %1480 = vmatpush.bf16.msra.mxu0 %v1437
      %1481 = vmatpush.bf16.msra.mxu0 %v1436
      %1482 = vmatpush.bf16.msra.mxu0 %v1435
      %1483 = vmatpush.bf16.msra.mxu0 %v1434
      %1484 = vmatpush.bf16.msra.mxu0 %v1433
      %1485 = vmatpush.bf16.msra.mxu0 %v1432
      %1486 = vmatpush.bf16.msra.mxu0 %v1431
      %1487 = vmatmul.bf16.gmra.mxu0 %v878
      %v1488 = vpop.f32.mrf.mxu0
      %v1489 = vadd.f32 0.0, %v1488
      %v1490 = vpop.f32.mrf.mxu0
      %v1491 = vadd.f32 0.0, %v1490
      %1492 = vmatmul.bf16.gmra.mxu0 %v879
      %v1493 = vpop.f32.mrf.mxu0
      %v1494 = vadd.f32 0.0, %v1493
      %v1495 = vpop.f32.mrf.mxu0
      %v1496 = vadd.f32 0.0, %v1495
      %1497 = vmatmul.bf16.gmra.mxu0 %v880
      %v1498 = vpop.f32.mrf.mxu0
      %v1499 = vadd.f32 0.0, %v1498
      %v1500 = vpop.f32.mrf.mxu0
      %v1501 = vadd.f32 0.0, %v1500
      %1502 = vmatmul.bf16.gmra.mxu0 %v881
      %v1503 = vpop.f32.mrf.mxu0
      %v1504 = vadd.f32 0.0, %v1503
      %v1505 = vpop.f32.mrf.mxu0
      %v1506 = vadd.f32 0.0, %v1505
      %1507 = vmatmul.bf16.gmra.mxu0 %v882
      %v1508 = vpop.f32.mrf.mxu0
      %v1509 = vadd.f32 0.0, %v1508
      %v1510 = vpop.f32.mrf.mxu0
      %v1511 = vadd.f32 0.0, %v1510
      %1512 = vmatmul.bf16.gmra.mxu0 %v883
      %v1513 = vpop.f32.mrf.mxu0
      %v1514 = vadd.f32 0.0, %v1513
      %v1515 = vpop.f32.mrf.mxu0
      %v1516 = vadd.f32 0.0, %v1515
      %1517 = vmatmul.bf16.gmra.mxu0 %v884
      %v1518 = vpop.f32.mrf.mxu0
      %v1519 = vadd.f32 0.0, %v1518
      %v1520 = vpop.f32.mrf.mxu0
      %v1521 = vadd.f32 0.0, %v1520
      %1522 = vmatmul.bf16.gmra.mxu0 %v885
      %v1523 = vpop.f32.mrf.mxu0
      %v1524 = vadd.f32 0.0, %v1523
      %v1525 = vpop.f32.mrf.mxu0
      %v1526 = vadd.f32 0.0, %v1525
      %1527 = vmatmul.bf16.gmra.mxu0 %v886
      %v1528 = vpop.f32.mrf.mxu0
      %v1529 = vadd.f32 0.0, %v1528
      %v1530 = vpop.f32.mrf.mxu0
      %v1531 = vadd.f32 0.0, %v1530
      %1532 = vmatmul.bf16.gmra.mxu0 %v887
      %v1533 = vpop.f32.mrf.mxu0
      %v1534 = vadd.f32 0.0, %v1533
      %v1535 = vpop.f32.mrf.mxu0
      %v1536 = vadd.f32 0.0, %v1535
      %1537 = vmatmul.bf16.gmra.mxu0 %v888
      %v1538 = vpop.f32.mrf.mxu0
      %v1539 = vadd.f32 0.0, %v1538
      %v1540 = vpop.f32.mrf.mxu0
      %v1541 = vadd.f32 0.0, %v1540
      %1542 = vmatmul.bf16.gmra.mxu0 %v889
      %v1543 = vpop.f32.mrf.mxu0
      %v1544 = vadd.f32 0.0, %v1543
      %v1545 = vpop.f32.mrf.mxu0
      %v1546 = vadd.f32 0.0, %v1545
      %1547 = vmatmul.bf16.gmra.mxu0 %v890
      %v1548 = vpop.f32.mrf.mxu0
      %v1549 = vadd.f32 0.0, %v1548
      %v1550 = vpop.f32.mrf.mxu0
      %v1551 = vadd.f32 0.0, %v1550
      %1552 = vmatmul.bf16.gmra.mxu0 %v891
      %v1553 = vpop.f32.mrf.mxu0
      %v1554 = vadd.f32 0.0, %v1553
      %v1555 = vpop.f32.mrf.mxu0
      %v1556 = vadd.f32 0.0, %v1555
      %1557 = vmatmul.bf16.gmra.mxu0 %v892
      %v1558 = vpop.f32.mrf.mxu0
      %v1559 = vadd.f32 0.0, %v1558
      %v1560 = vpop.f32.mrf.mxu0
      %v1561 = vadd.f32 0.0, %v1560
      %1562 = vmatmul.bf16.gmra.mxu0 %v893
      %v1563 = vpop.f32.mrf.mxu0
      %v1564 = vadd.f32 0.0, %v1563
      %v1565 = vpop.f32.mrf.mxu0
      %v1566 = vadd.f32 0.0, %v1565
      %1567 = vdwg.mxu0
      %1568 = vmatpush.bf16.msra.mxu0 %v1446
      %1569 = vmatpush.bf16.msra.mxu0 %v1445
      %1570 = vmatpush.bf16.msra.mxu0 %v1444
      %1571 = vmatpush.bf16.msra.mxu0 %v1443
      %1572 = vmatpush.bf16.msra.mxu0 %v1442
      %1573 = vmatpush.bf16.msra.mxu0 %v1441
      %1574 = vmatpush.bf16.msra.mxu0 %v1440
      %1575 = vmatpush.bf16.msra.mxu0 %v1439
      %1576 = vmatmul.bf16.gmra.mxu0 %v937
      %v1577 = vpop.f32.mrf.mxu0
      %v1578 = vadd.f32 %v1489, %v1577
      %v1579 = vpop.f32.mrf.mxu0
      %v1580 = vadd.f32 %v1491, %v1579
      %1581 = vmatmul.bf16.gmra.mxu0 %v949
      %v1582 = vpop.f32.mrf.mxu0
      %v1583 = vadd.f32 %v1494, %v1582
      %v1584 = vpop.f32.mrf.mxu0
      %v1585 = vadd.f32 %v1496, %v1584
      %1586 = vmatmul.bf16.gmra.mxu0 %v961
      %v1587 = vpop.f32.mrf.mxu0
      %v1588 = vadd.f32 %v1499, %v1587
      %v1589 = vpop.f32.mrf.mxu0
      %v1590 = vadd.f32 %v1501, %v1589
      %1591 = vmatmul.bf16.gmra.mxu0 %v973
      %v1592 = vpop.f32.mrf.mxu0
      %v1593 = vadd.f32 %v1504, %v1592
      %v1594 = vpop.f32.mrf.mxu0
      %v1595 = vadd.f32 %v1506, %v1594
      %1596 = vmatmul.bf16.gmra.mxu0 %v985
      %v1597 = vpop.f32.mrf.mxu0
      %v1598 = vadd.f32 %v1509, %v1597
      %v1599 = vpop.f32.mrf.mxu0
      %v1600 = vadd.f32 %v1511, %v1599
      %1601 = vmatmul.bf16.gmra.mxu0 %v997
      %v1602 = vpop.f32.mrf.mxu0
      %v1603 = vadd.f32 %v1514, %v1602
      %v1604 = vpop.f32.mrf.mxu0
      %v1605 = vadd.f32 %v1516, %v1604
      %1606 = vmatmul.bf16.gmra.mxu0 %v1009
      %v1607 = vpop.f32.mrf.mxu0
      %v1608 = vadd.f32 %v1519, %v1607
      %v1609 = vpop.f32.mrf.mxu0
      %v1610 = vadd.f32 %v1521, %v1609
      %1611 = vmatmul.bf16.gmra.mxu0 %v1021
      %v1612 = vpop.f32.mrf.mxu0
      %v1613 = vadd.f32 %v1524, %v1612
      %v1614 = vpop.f32.mrf.mxu0
      %v1615 = vadd.f32 %v1526, %v1614
      %1616 = vmatmul.bf16.gmra.mxu0 %v1033
      %v1617 = vpop.f32.mrf.mxu0
      %v1618 = vadd.f32 %v1529, %v1617
      %v1619 = vpop.f32.mrf.mxu0
      %v1620 = vadd.f32 %v1531, %v1619
      %1621 = vmatmul.bf16.gmra.mxu0 %v1045
      %v1622 = vpop.f32.mrf.mxu0
      %v1623 = vadd.f32 %v1534, %v1622
      %v1624 = vpop.f32.mrf.mxu0
      %v1625 = vadd.f32 %v1536, %v1624
      %1626 = vmatmul.bf16.gmra.mxu0 %v1057
      %v1627 = vpop.f32.mrf.mxu0
      %v1628 = vadd.f32 %v1539, %v1627
      %v1629 = vpop.f32.mrf.mxu0
      %v1630 = vadd.f32 %v1541, %v1629
      %1631 = vmatmul.bf16.gmra.mxu0 %v1069
      %v1632 = vpop.f32.mrf.mxu0
      %v1633 = vadd.f32 %v1544, %v1632
      %v1634 = vpop.f32.mrf.mxu0
      %v1635 = vadd.f32 %v1546, %v1634
      %1636 = vmatmul.bf16.gmra.mxu0 %v1081
      %v1637 = vpop.f32.mrf.mxu0
      %v1638 = vadd.f32 %v1549, %v1637
      %v1639 = vpop.f32.mrf.mxu0
      %v1640 = vadd.f32 %v1551, %v1639
      %1641 = vmatmul.bf16.gmra.mxu0 %v1093
      %v1642 = vpop.f32.mrf.mxu0
      %v1643 = vadd.f32 %v1554, %v1642
      %v1644 = vpop.f32.mrf.mxu0
      %v1645 = vadd.f32 %v1556, %v1644
      %1646 = vmatmul.bf16.gmra.mxu0 %v1105
      %v1647 = vpop.f32.mrf.mxu0
      %v1648 = vadd.f32 %v1559, %v1647
      %v1649 = vpop.f32.mrf.mxu0
      %v1650 = vadd.f32 %v1561, %v1649
      %1651 = vmatmul.bf16.gmra.mxu0 %v1278
      %v1652 = vpop.f32.mrf.mxu0
      %v1653 = vadd.f32 %v1564, %v1652
      %v1654 = vpop.f32.mrf.mxu0
      %v1655 = vadd.f32 %v1566, %v1654
      %1656 = vdwg.mxu0
      %1657 = vmatpush.bf16.msra.mxu0 %v1454
      %1658 = vmatpush.bf16.msra.mxu0 %v1453
      %1659 = vmatpush.bf16.msra.mxu0 %v1452
      %1660 = vmatpush.bf16.msra.mxu0 %v1451
      %1661 = vmatpush.bf16.msra.mxu0 %v1450
      %1662 = vmatpush.bf16.msra.mxu0 %v1449
      %1663 = vmatpush.bf16.msra.mxu0 %v1448
      %1664 = vmatpush.bf16.msra.mxu0 %v1447
      %1665 = vmatmul.bf16.gmra.mxu0 %v1160
      %v1666 = vpop.f32.mrf.mxu0
      %v1667 = vadd.f32 %v1578, %v1666
      %v1668 = vpop.f32.mrf.mxu0
      %v1669 = vadd.f32 %v1580, %v1668
      %1670 = vmatmul.bf16.gmra.mxu0 %v1163
      %v1671 = vpop.f32.mrf.mxu0
      %v1672 = vadd.f32 %v1583, %v1671
      %v1673 = vpop.f32.mrf.mxu0
      %v1674 = vadd.f32 %v1585, %v1673
      %1675 = vmatmul.bf16.gmra.mxu0 %v1166
      %v1676 = vpop.f32.mrf.mxu0
      %v1677 = vadd.f32 %v1588, %v1676
      %v1678 = vpop.f32.mrf.mxu0
      %v1679 = vadd.f32 %v1590, %v1678
      %1680 = vmatmul.bf16.gmra.mxu0 %v1169
      %v1681 = vpop.f32.mrf.mxu0
      %v1682 = vadd.f32 %v1593, %v1681
      %v1683 = vpop.f32.mrf.mxu0
      %v1684 = vadd.f32 %v1595, %v1683
      %1685 = vmatmul.bf16.gmra.mxu0 %v1172
      %v1686 = vpop.f32.mrf.mxu0
      %v1687 = vadd.f32 %v1598, %v1686
      %v1688 = vpop.f32.mrf.mxu0
      %v1689 = vadd.f32 %v1600, %v1688
      %1690 = vmatmul.bf16.gmra.mxu0 %v1175
      %v1691 = vpop.f32.mrf.mxu0
      %v1692 = vadd.f32 %v1603, %v1691
      %v1693 = vpop.f32.mrf.mxu0
      %v1694 = vadd.f32 %v1605, %v1693
      %1695 = vmatmul.bf16.gmra.mxu0 %v1178
      %v1696 = vpop.f32.mrf.mxu0
      %v1697 = vadd.f32 %v1608, %v1696
      %v1698 = vpop.f32.mrf.mxu0
      %v1699 = vadd.f32 %v1610, %v1698
      %1700 = vmatmul.bf16.gmra.mxu0 %v1181
      %v1701 = vpop.f32.mrf.mxu0
      %v1702 = vadd.f32 %v1613, %v1701
      %v1703 = vpop.f32.mrf.mxu0
      %v1704 = vadd.f32 %v1615, %v1703
      %1705 = vmatmul.bf16.gmra.mxu0 %v1184
      %v1706 = vpop.f32.mrf.mxu0
      %v1707 = vadd.f32 %v1618, %v1706
      %v1708 = vpop.f32.mrf.mxu0
      %v1709 = vadd.f32 %v1620, %v1708
      %1710 = vmatmul.bf16.gmra.mxu0 %v1187
      %v1711 = vpop.f32.mrf.mxu0
      %v1712 = vadd.f32 %v1623, %v1711
      %v1713 = vpop.f32.mrf.mxu0
      %v1714 = vadd.f32 %v1625, %v1713
      %1715 = vmatmul.bf16.gmra.mxu0 %v1190
      %v1716 = vpop.f32.mrf.mxu0
      %v1717 = vadd.f32 %v1628, %v1716
      %v1718 = vpop.f32.mrf.mxu0
      %v1719 = vadd.f32 %v1630, %v1718
      %1720 = vmatmul.bf16.gmra.mxu0 %v1193
      %v1721 = vpop.f32.mrf.mxu0
      %v1722 = vadd.f32 %v1633, %v1721
      %v1723 = vpop.f32.mrf.mxu0
      %v1724 = vadd.f32 %v1635, %v1723
      %1725 = vmatmul.bf16.gmra.mxu0 %v1196
      %v1726 = vpop.f32.mrf.mxu0
      %v1727 = vadd.f32 %v1638, %v1726
      %v1728 = vpop.f32.mrf.mxu0
      %v1729 = vadd.f32 %v1640, %v1728
      %1730 = vmatmul.bf16.gmra.mxu0 %v1199
      %v1731 = vpop.f32.mrf.mxu0
      %v1732 = vadd.f32 %v1643, %v1731
      %v1733 = vpop.f32.mrf.mxu0
      %v1734 = vadd.f32 %v1645, %v1733
      %1735 = vmatmul.bf16.gmra.mxu0 %v1202
      %v1736 = vpop.f32.mrf.mxu0
      %v1737 = vadd.f32 %v1648, %v1736
      %v1738 = vpop.f32.mrf.mxu0
      %v1739 = vadd.f32 %v1650, %v1738
      %1740 = vmatmul.bf16.gmra.mxu0 %v1284
      %v1741 = vpop.f32.mrf.mxu0
      %v1742 = vadd.f32 %v1653, %v1741
      %v1743 = vpop.f32.mrf.mxu0
      %v1744 = vadd.f32 %v1655, %v1743
      %1745 = vdwg.mxu0
      %v1794 = vunpack.c.l.b16 %v1219
      %v1795 = vunpack.c.l.b16 %v1220
      %v1796 = vunpack.c.l.b16 %v1221
      %v1797 = vunpack.c.l.b16 %v1222
      %v1798 = vunpack.c.l.b16 %v1223
      %v1799 = vunpack.c.l.b16 %v1224
      %v1800 = vunpack.c.l.b16 %v1225
      %v1801 = vunpack.c.l.b16 %v1226
      %v1802 = vunpack.c.l.b16 %v1227
      %v1803 = vunpack.c.l.b16 %v1228
      %v1804 = vunpack.c.l.b16 %v1229
      %v1805 = vunpack.c.l.b16 %v1230
      %v1806 = vunpack.c.l.b16 %v1231
      %v1807 = vunpack.c.l.b16 %v1232
      %v1808 = vunpack.c.l.b16 %v1233
      %v1809 = vunpack.c.l.b16 %v1234
      %v1810 = vunpack.c.l.b16 %v1235
      %v1811 = vunpack.c.l.b16 %v1236
      %v1812 = vunpack.c.l.b16 %v1237
      %v1813 = vunpack.c.l.b16 %v1238
      %v1814 = vunpack.c.l.b16 %v1239
      %v1815 = vunpack.c.l.b16 %v1240
      %v1816 = vunpack.c.l.b16 %v1241
      %v1817 = vunpack.c.l.b16 %v1242
      %v1818 = vunpack.c.l.b16 %v1243
      %v1819 = vunpack.c.l.b16 %v1244
      %v1820 = vunpack.c.l.b16 %v1245
      %v1821 = vunpack.c.l.b16 %v1246
      %v1822 = vunpack.c.l.b16 %v1247
      %v1823 = vunpack.c.l.b16 %v1248
      %v1824 = vunpack.c.l.b16 %v1249
      %v1825 = vunpack.c.l.b16 %v1250
      %v1826 = vunpack.c.l.b16 %v1251
      %v1827 = vunpack.c.l.b16 %v1252
      %v1828 = vunpack.c.l.b16 %v1253
      %v1829 = vunpack.c.l.b16 %v1254
      %v1830 = vunpack.c.l.b16 %v1255
      %v1831 = vunpack.c.l.b16 %v1256
      %v1832 = vunpack.c.l.b16 %v1257
      %v1833 = vunpack.c.l.b16 %v1258
      %v1834 = vunpack.c.l.b16 %v1259
      %v1835 = vunpack.c.l.b16 %v1260
      %v1836 = vunpack.c.l.b16 %v1261
      %v1837 = vunpack.c.l.b16 %v1262
      %v1838 = vunpack.c.l.b16 %v1263
      %v1839 = vunpack.c.l.b16 %v1264
      %v1840 = vunpack.c.l.b16 %v1265
      %v1841 = vunpack.c.l.b16 %v1266
      %v1842 = vpack.c.b16 %v1795, %v1794
      %v1843 = vpack.c.b16 %v1797, %v1796
      %v1844 = vpack.c.b16 %v1799, %v1798
      %v1845 = vpack.c.b16 %v1801, %v1800
      %v1846 = vpack.c.b16 %v1803, %v1802
      %v1847 = vpack.c.b16 %v1805, %v1804
      %v1848 = vpack.c.b16 %v1807, %v1806
      %v1849 = vpack.c.b16 %v1809, %v1808
      %v1850 = vpack.c.b16 %v1811, %v1810
      %v1851 = vpack.c.b16 %v1813, %v1812
      %v1852 = vpack.c.b16 %v1815, %v1814
      %v1853 = vpack.c.b16 %v1817, %v1816
      %v1854 = vpack.c.b16 %v1819, %v1818
      %v1855 = vpack.c.b16 %v1821, %v1820
      %v1856 = vpack.c.b16 %v1823, %v1822
      %v1857 = vpack.c.b16 %v1825, %v1824
      %v1858 = vpack.c.b16 %v1827, %v1826
      %v1859 = vpack.c.b16 %v1829, %v1828
      %v1860 = vpack.c.b16 %v1831, %v1830
      %v1861 = vpack.c.b16 %v1833, %v1832
      %v1862 = vpack.c.b16 %v1835, %v1834
      %v1863 = vpack.c.b16 %v1837, %v1836
      %v1864 = vpack.c.b16 %v1839, %v1838
      %v1865 = vpack.c.b16 %v1841, %v1840
      %1890 = vmatpush.bf16.msra.mxu0 %v1849
      %1891 = vmatpush.bf16.msra.mxu0 %v1848
      %1892 = vmatpush.bf16.msra.mxu0 %v1847
      %1893 = vmatpush.bf16.msra.mxu0 %v1846
      %1894 = vmatpush.bf16.msra.mxu0 %v1845
      %1895 = vmatpush.bf16.msra.mxu0 %v1844
      %1896 = vmatpush.bf16.msra.mxu0 %v1843
      %1897 = vmatpush.bf16.msra.mxu0 %v1842
      %1898 = vmatmul.bf16.gmra.mxu0 %v877
      %v1899 = vpop.f32.mrf.mxu0
      %v1900 = vadd.f32 %v1667, %v1899
      %v1901 = vpop.f32.mrf.mxu0
      %v1902 = vadd.f32 %v1669, %v1901
      %1903 = vmatmul.bf16.gmra.mxu0 %v878
      %v1904 = vpop.f32.mrf.mxu0
      %v1905 = vadd.f32 %v1672, %v1904
      %v1906 = vpop.f32.mrf.mxu0
      %v1907 = vadd.f32 %v1674, %v1906
      %1908 = vmatmul.bf16.gmra.mxu0 %v879
      %v1909 = vpop.f32.mrf.mxu0
      %v1910 = vadd.f32 %v1677, %v1909
      %v1911 = vpop.f32.mrf.mxu0
      %v1912 = vadd.f32 %v1679, %v1911
      %1913 = vmatmul.bf16.gmra.mxu0 %v880
      %v1914 = vpop.f32.mrf.mxu0
      %v1915 = vadd.f32 %v1682, %v1914
      %v1916 = vpop.f32.mrf.mxu0
      %v1917 = vadd.f32 %v1684, %v1916
      %1918 = vmatmul.bf16.gmra.mxu0 %v881
      %v1919 = vpop.f32.mrf.mxu0
      %v1920 = vadd.f32 %v1687, %v1919
      %v1921 = vpop.f32.mrf.mxu0
      %v1922 = vadd.f32 %v1689, %v1921
      %1923 = vmatmul.bf16.gmra.mxu0 %v882
      %v1924 = vpop.f32.mrf.mxu0
      %v1925 = vadd.f32 %v1692, %v1924
      %v1926 = vpop.f32.mrf.mxu0
      %v1927 = vadd.f32 %v1694, %v1926
      %1928 = vmatmul.bf16.gmra.mxu0 %v883
      %v1929 = vpop.f32.mrf.mxu0
      %v1930 = vadd.f32 %v1697, %v1929
      %v1931 = vpop.f32.mrf.mxu0
      %v1932 = vadd.f32 %v1699, %v1931
      %1933 = vmatmul.bf16.gmra.mxu0 %v884
      %v1934 = vpop.f32.mrf.mxu0
      %v1935 = vadd.f32 %v1702, %v1934
      %v1936 = vpop.f32.mrf.mxu0
      %v1937 = vadd.f32 %v1704, %v1936
      %1938 = vmatmul.bf16.gmra.mxu0 %v885
      %v1939 = vpop.f32.mrf.mxu0
      %v1940 = vadd.f32 %v1707, %v1939
      %v1941 = vpop.f32.mrf.mxu0
      %v1942 = vadd.f32 %v1709, %v1941
      %1943 = vmatmul.bf16.gmra.mxu0 %v886
      %v1944 = vpop.f32.mrf.mxu0
      %v1945 = vadd.f32 %v1712, %v1944
      %v1946 = vpop.f32.mrf.mxu0
      %v1947 = vadd.f32 %v1714, %v1946
      %1948 = vmatmul.bf16.gmra.mxu0 %v887
      %v1949 = vpop.f32.mrf.mxu0
      %v1950 = vadd.f32 %v1717, %v1949
      %v1951 = vpop.f32.mrf.mxu0
      %v1952 = vadd.f32 %v1719, %v1951
      %1953 = vmatmul.bf16.gmra.mxu0 %v888
      %v1954 = vpop.f32.mrf.mxu0
      %v1955 = vadd.f32 %v1722, %v1954
      %v1956 = vpop.f32.mrf.mxu0
      %v1957 = vadd.f32 %v1724, %v1956
      %1958 = vmatmul.bf16.gmra.mxu0 %v889
      %v1959 = vpop.f32.mrf.mxu0
      %v1960 = vadd.f32 %v1727, %v1959
      %v1961 = vpop.f32.mrf.mxu0
      %v1962 = vadd.f32 %v1729, %v1961
      %1963 = vmatmul.bf16.gmra.mxu0 %v890
      %v1964 = vpop.f32.mrf.mxu0
      %v1965 = vadd.f32 %v1732, %v1964
      %v1966 = vpop.f32.mrf.mxu0
      %v1967 = vadd.f32 %v1734, %v1966
      %1968 = vmatmul.bf16.gmra.mxu0 %v891
      %v1969 = vpop.f32.mrf.mxu0
      %v1970 = vadd.f32 %v1737, %v1969
      %v1971 = vpop.f32.mrf.mxu0
      %v1972 = vadd.f32 %v1739, %v1971
      %1973 = vmatmul.bf16.gmra.mxu0 %v892
      %v1974 = vpop.f32.mrf.mxu0
      %v1975 = vadd.f32 %v1742, %v1974
      %v1976 = vpop.f32.mrf.mxu0
      %v1977 = vadd.f32 %v1744, %v1976
      %1978 = vdwg.mxu0
      %1979 = vmatpush.bf16.msra.mxu0 %v1857
      %1980 = vmatpush.bf16.msra.mxu0 %v1856
      %1981 = vmatpush.bf16.msra.mxu0 %v1855
      %1982 = vmatpush.bf16.msra.mxu0 %v1854
      %1983 = vmatpush.bf16.msra.mxu0 %v1853
      %1984 = vmatpush.bf16.msra.mxu0 %v1852
      %1985 = vmatpush.bf16.msra.mxu0 %v1851
      %1986 = vmatpush.bf16.msra.mxu0 %v1850
      %1987 = vmatmul.bf16.gmra.mxu0 %v925
      %v1988 = vpop.f32.mrf.mxu0
      %v1989 = vadd.f32 %v1900, %v1988
      %v1990 = vpop.f32.mrf.mxu0
      %v1991 = vadd.f32 %v1902, %v1990
      %1992 = vmatmul.bf16.gmra.mxu0 %v937
      %v1993 = vpop.f32.mrf.mxu0
      %v1994 = vadd.f32 %v1905, %v1993
      %v1995 = vpop.f32.mrf.mxu0
      %v1996 = vadd.f32 %v1907, %v1995
      %1997 = vmatmul.bf16.gmra.mxu0 %v949
      %v1998 = vpop.f32.mrf.mxu0
      %v1999 = vadd.f32 %v1910, %v1998
      %v2000 = vpop.f32.mrf.mxu0
      %v2001 = vadd.f32 %v1912, %v2000
      %2002 = vmatmul.bf16.gmra.mxu0 %v961
      %v2003 = vpop.f32.mrf.mxu0
      %v2004 = vadd.f32 %v1915, %v2003
      %v2005 = vpop.f32.mrf.mxu0
      %v2006 = vadd.f32 %v1917, %v2005
      %2007 = vmatmul.bf16.gmra.mxu0 %v973
      %v2008 = vpop.f32.mrf.mxu0
      %v2009 = vadd.f32 %v1920, %v2008
      %v2010 = vpop.f32.mrf.mxu0
      %v2011 = vadd.f32 %v1922, %v2010
      %2012 = vmatmul.bf16.gmra.mxu0 %v985
      %v2013 = vpop.f32.mrf.mxu0
      %v2014 = vadd.f32 %v1925, %v2013
      %v2015 = vpop.f32.mrf.mxu0
      %v2016 = vadd.f32 %v1927, %v2015
      %2017 = vmatmul.bf16.gmra.mxu0 %v997
      %v2018 = vpop.f32.mrf.mxu0
      %v2019 = vadd.f32 %v1930, %v2018
      %v2020 = vpop.f32.mrf.mxu0
      %v2021 = vadd.f32 %v1932, %v2020
      %2022 = vmatmul.bf16.gmra.mxu0 %v1009
      %v2023 = vpop.f32.mrf.mxu0
      %v2024 = vadd.f32 %v1935, %v2023
      %v2025 = vpop.f32.mrf.mxu0
      %v2026 = vadd.f32 %v1937, %v2025
      %2027 = vmatmul.bf16.gmra.mxu0 %v1021
      %v2028 = vpop.f32.mrf.mxu0
      %v2029 = vadd.f32 %v1940, %v2028
      %v2030 = vpop.f32.mrf.mxu0
      %v2031 = vadd.f32 %v1942, %v2030
      %2032 = vmatmul.bf16.gmra.mxu0 %v1033
      %v2033 = vpop.f32.mrf.mxu0
      %v2034 = vadd.f32 %v1945, %v2033
      %v2035 = vpop.f32.mrf.mxu0
      %v2036 = vadd.f32 %v1947, %v2035
      %2037 = vmatmul.bf16.gmra.mxu0 %v1045
      %v2038 = vpop.f32.mrf.mxu0
      %v2039 = vadd.f32 %v1950, %v2038
      %v2040 = vpop.f32.mrf.mxu0
      %v2041 = vadd.f32 %v1952, %v2040
      %2042 = vmatmul.bf16.gmra.mxu0 %v1057
      %v2043 = vpop.f32.mrf.mxu0
      %v2044 = vadd.f32 %v1955, %v2043
      %v2045 = vpop.f32.mrf.mxu0
      %v2046 = vadd.f32 %v1957, %v2045
      %2047 = vmatmul.bf16.gmra.mxu0 %v1069
      %v2048 = vpop.f32.mrf.mxu0
      %v2049 = vadd.f32 %v1960, %v2048
      %v2050 = vpop.f32.mrf.mxu0
      %v2051 = vadd.f32 %v1962, %v2050
      %2052 = vmatmul.bf16.gmra.mxu0 %v1081
      %v2053 = vpop.f32.mrf.mxu0
      %v2054 = vadd.f32 %v1965, %v2053
      %v2055 = vpop.f32.mrf.mxu0
      %v2056 = vadd.f32 %v1967, %v2055
      %2057 = vmatmul.bf16.gmra.mxu0 %v1093
      %v2058 = vpop.f32.mrf.mxu0
      %v2059 = vadd.f32 %v1970, %v2058
      %v2060 = vpop.f32.mrf.mxu0
      %v2061 = vadd.f32 %v1972, %v2060
      %2062 = vmatmul.bf16.gmra.mxu0 %v1105
      %v2063 = vpop.f32.mrf.mxu0
      %v2064 = vadd.f32 %v1975, %v2063
      %v2065 = vpop.f32.mrf.mxu0
      %v2066 = vadd.f32 %v1977, %v2065
      %2067 = vdwg.mxu0
      %2068 = vmatpush.bf16.msra.mxu0 %v1865
      %2069 = vmatpush.bf16.msra.mxu0 %v1864
      %2070 = vmatpush.bf16.msra.mxu0 %v1863
      %2071 = vmatpush.bf16.msra.mxu0 %v1862
      %2072 = vmatpush.bf16.msra.mxu0 %v1861
      %2073 = vmatpush.bf16.msra.mxu0 %v1860
      %2074 = vmatpush.bf16.msra.mxu0 %v1859
      %2075 = vmatpush.bf16.msra.mxu0 %v1858
      %2076 = vmatmul.bf16.gmra.mxu0 %v1157
      %v2077 = vpop.f32.mrf.mxu0
      %v2078 = vadd.f32 %v1989, %v2077
      %v2079 = vpop.f32.mrf.mxu0
      %v2080 = vadd.f32 %v1991, %v2079
      %2081 = vmatmul.bf16.gmra.mxu0 %v1160
      %v2082 = vpop.f32.mrf.mxu0
      %v2083 = vadd.f32 %v1994, %v2082
      %v2084 = vpop.f32.mrf.mxu0
      %v2085 = vadd.f32 %v1996, %v2084
      %2086 = vmatmul.bf16.gmra.mxu0 %v1163
      %v2087 = vpop.f32.mrf.mxu0
      %v2088 = vadd.f32 %v1999, %v2087
      %v2089 = vpop.f32.mrf.mxu0
      %v2090 = vadd.f32 %v2001, %v2089
      %2091 = vmatmul.bf16.gmra.mxu0 %v1166
      %v2092 = vpop.f32.mrf.mxu0
      %v2093 = vadd.f32 %v2004, %v2092
      %v2094 = vpop.f32.mrf.mxu0
      %v2095 = vadd.f32 %v2006, %v2094
      %2096 = vmatmul.bf16.gmra.mxu0 %v1169
      %v2097 = vpop.f32.mrf.mxu0
      %v2098 = vadd.f32 %v2009, %v2097
      %v2099 = vpop.f32.mrf.mxu0
      %v2100 = vadd.f32 %v2011, %v2099
      %2101 = vmatmul.bf16.gmra.mxu0 %v1172
      %v2102 = vpop.f32.mrf.mxu0
      %v2103 = vadd.f32 %v2014, %v2102
      %v2104 = vpop.f32.mrf.mxu0
      %v2105 = vadd.f32 %v2016, %v2104
      %2106 = vmatmul.bf16.gmra.mxu0 %v1175
      %v2107 = vpop.f32.mrf.mxu0
      %v2108 = vadd.f32 %v2019, %v2107
      %v2109 = vpop.f32.mrf.mxu0
      %v2110 = vadd.f32 %v2021, %v2109
      %2111 = vmatmul.bf16.gmra.mxu0 %v1178
      %v2112 = vpop.f32.mrf.mxu0
      %v2113 = vadd.f32 %v2024, %v2112
      %v2114 = vpop.f32.mrf.mxu0
      %v2115 = vadd.f32 %v2026, %v2114
      %2116 = vmatmul.bf16.gmra.mxu0 %v1181
      %v2117 = vpop.f32.mrf.mxu0
      %v2118 = vadd.f32 %v2029, %v2117
      %v2119 = vpop.f32.mrf.mxu0
      %v2120 = vadd.f32 %v2031, %v2119
      %2121 = vmatmul.bf16.gmra.mxu0 %v1184
      %v2122 = vpop.f32.mrf.mxu0
      %v2123 = vadd.f32 %v2034, %v2122
      %v2124 = vpop.f32.mrf.mxu0
      %v2125 = vadd.f32 %v2036, %v2124
      %2126 = vmatmul.bf16.gmra.mxu0 %v1187
      %v2127 = vpop.f32.mrf.mxu0
      %v2128 = vadd.f32 %v2039, %v2127
      %v2129 = vpop.f32.mrf.mxu0
      %v2130 = vadd.f32 %v2041, %v2129
      %2131 = vmatmul.bf16.gmra.mxu0 %v1190
      %v2132 = vpop.f32.mrf.mxu0
      %v2133 = vadd.f32 %v2044, %v2132
      %v2134 = vpop.f32.mrf.mxu0
      %v2135 = vadd.f32 %v2046, %v2134
      %2136 = vmatmul.bf16.gmra.mxu0 %v1193
      %v2137 = vpop.f32.mrf.mxu0
      %v2138 = vadd.f32 %v2049, %v2137
      %v2139 = vpop.f32.mrf.mxu0
      %v2140 = vadd.f32 %v2051, %v2139
      %2141 = vmatmul.bf16.gmra.mxu0 %v1196
      %v2142 = vpop.f32.mrf.mxu0
      %v2143 = vadd.f32 %v2054, %v2142
      %v2144 = vpop.f32.mrf.mxu0
      %v2145 = vadd.f32 %v2056, %v2144
      %2146 = vmatmul.bf16.gmra.mxu0 %v1199
      %v2147 = vpop.f32.mrf.mxu0
      %v2148 = vadd.f32 %v2059, %v2147
      %v2149 = vpop.f32.mrf.mxu0
      %v2150 = vadd.f32 %v2061, %v2149
      %2151 = vmatmul.bf16.gmra.mxu0 %v1202
      %v2152 = vpop.f32.mrf.mxu0
      %v2153 = vadd.f32 %v2064, %v2152
      %v2154 = vpop.f32.mrf.mxu0
      %v2155 = vadd.f32 %v2066, %v2154
      %2156 = vdwg.mxu0
      %v2158 = vshrl.u32 %v894, 16
      %v2160 = vshll.u32 %v894, 16
      %v2162 = vrot.slane %v2160, 1
      %v2163 = vor.u32 %v2158, %v2162
      %v2165 = vshll.u32 %v912, 16
      %v2167 = vrot.slane %v2165, 1
      %v2168 = vsel %vm913, %v2163, %v2167
      %v2172 = vrot.slane %v894, 1
      %v2173 = vrot.slane %v912, 1
      %v2174 = vsel %vm1154, %v2172, %v2173
      %s2176 = scalar_lea.vmem %s421, 384
      %v2177 = vld [vmem:[%s2176] sm:$0xf]
      %v2178 = vld [vmem:[%s2176 + $0x4] sm:$0xf]
      %v2179 = vld [vmem:[%s2176 + $0x8] sm:$0xf]
      %v2180 = vld [vmem:[%s2176 + $0xc] sm:$0xf]
      %v2181 = vld [vmem:[%s2176 + $0x10] sm:$0xf]
      %v2182 = vld [vmem:[%s2176 + $0x14] sm:$0xf]
      %v2183 = vld [vmem:[%s2176 + $0x18] sm:$0xf]
      %v2184 = vld [vmem:[%s2176 + $0x1c] sm:$0xf]
      %v2185 = vld [vmem:[%s2176 + $0x20] sm:$0xf]
      %v2186 = vld [vmem:[%s2176 + $0x24] sm:$0xf]
      %v2187 = vld [vmem:[%s2176 + $0x28] sm:$0xf]
      %v2188 = vld [vmem:[%s2176 + $0x2c] sm:$0xf]
      %v2189 = vld [vmem:[%s2176 + $0x30] sm:$0xf]
      %v2190 = vld [vmem:[%s2176 + $0x34] sm:$0xf]
      %v2191 = vld [vmem:[%s2176 + $0x38] sm:$0xf]
      %v2192 = vld [vmem:[%s2176 + $0x3c] sm:$0xf]
      %v2193 = vld [vmem:[%s2176 + $0x40] sm:$0xf]
      %v2194 = vld [vmem:[%s2176 + $0x44] sm:$0xf]
      %v2195 = vld [vmem:[%s2176 + $0x48] sm:$0xf]
      %v2196 = vld [vmem:[%s2176 + $0x4c] sm:$0xf]
      %v2197 = vld [vmem:[%s2176 + $0x50] sm:$0xf]
      %v2198 = vld [vmem:[%s2176 + $0x54] sm:$0xf]
      %v2199 = vld [vmem:[%s2176 + $0x58] sm:$0xf]
      %v2200 = vld [vmem:[%s2176 + $0x5c] sm:$0xf]
      %v2201 = vld [vmem:[%s2176 + $0x60] sm:$0xf]
      %v2202 = vld [vmem:[%s2176 + $0x64] sm:$0xf]
      %v2203 = vld [vmem:[%s2176 + $0x68] sm:$0xf]
      %v2204 = vld [vmem:[%s2176 + $0x6c] sm:$0xf]
      %v2205 = vld [vmem:[%s2176 + $0x70] sm:$0xf]
      %v2206 = vld [vmem:[%s2176 + $0x74] sm:$0xf]
      %v2207 = vld [vmem:[%s2176 + $0x78] sm:$0xf]
      %v2208 = vld [vmem:[%s2176 + $0x7c] sm:$0xf]
      %v2209 = vld [vmem:[%s2176 + $0x80] sm:$0xf]
      %v2210 = vld [vmem:[%s2176 + $0x84] sm:$0xf]
      %v2211 = vld [vmem:[%s2176 + $0x88] sm:$0xf]
      %v2212 = vld [vmem:[%s2176 + $0x8c] sm:$0xf]
      %v2213 = vld [vmem:[%s2176 + $0x90] sm:$0xf]
      %v2214 = vld [vmem:[%s2176 + $0x94] sm:$0xf]
      %v2215 = vld [vmem:[%s2176 + $0x98] sm:$0xf]
      %v2216 = vld [vmem:[%s2176 + $0x9c] sm:$0xf]
      %v2217 = vld [vmem:[%s2176 + $0xa0] sm:$0xf]
      %v2218 = vld [vmem:[%s2176 + $0xa4] sm:$0xf]
      %v2219 = vld [vmem:[%s2176 + $0xa8] sm:$0xf]
      %v2220 = vld [vmem:[%s2176 + $0xac] sm:$0xf]
      %v2221 = vld [vmem:[%s2176 + $0xb0] sm:$0xf]
      %v2222 = vld [vmem:[%s2176 + $0xb4] sm:$0xf]
      %v2223 = vld [vmem:[%s2176 + $0xb8] sm:$0xf]
      %v2224 = vld [vmem:[%s2176 + $0xbc] sm:$0xf]
      %v2273 = vunpack.c.l.b16 %v2177
      %v2274 = vunpack.c.l.b16 %v2178
      %v2275 = vunpack.c.l.b16 %v2179
      %v2276 = vunpack.c.l.b16 %v2180
      %v2277 = vunpack.c.l.b16 %v2181
      %v2278 = vunpack.c.l.b16 %v2182
      %v2279 = vunpack.c.l.b16 %v2183
      %v2280 = vunpack.c.l.b16 %v2184
      %v2281 = vunpack.c.l.b16 %v2185
      %v2282 = vunpack.c.l.b16 %v2186
      %v2283 = vunpack.c.l.b16 %v2187
      %v2284 = vunpack.c.l.b16 %v2188
      %v2285 = vunpack.c.l.b16 %v2189
      %v2286 = vunpack.c.l.b16 %v2190
      %v2287 = vunpack.c.l.b16 %v2191
      %v2288 = vunpack.c.l.b16 %v2192
      %v2289 = vunpack.c.l.b16 %v2193
      %v2290 = vunpack.c.l.b16 %v2194
      %v2291 = vunpack.c.l.b16 %v2195
      %v2292 = vunpack.c.l.b16 %v2196
      %v2293 = vunpack.c.l.b16 %v2197
      %v2294 = vunpack.c.l.b16 %v2198
      %v2295 = vunpack.c.l.b16 %v2199
      %v2296 = vunpack.c.l.b16 %v2200
      %v2297 = vunpack.c.l.b16 %v2201
      %v2298 = vunpack.c.l.b16 %v2202
      %v2299 = vunpack.c.l.b16 %v2203
      %v2300 = vunpack.c.l.b16 %v2204
      %v2301 = vunpack.c.l.b16 %v2205
      %v2302 = vunpack.c.l.b16 %v2206
      %v2303 = vunpack.c.l.b16 %v2207
      %v2304 = vunpack.c.l.b16 %v2208
      %v2305 = vunpack.c.l.b16 %v2209
      %v2306 = vunpack.c.l.b16 %v2210
      %v2307 = vunpack.c.l.b16 %v2211
      %v2308 = vunpack.c.l.b16 %v2212
      %v2309 = vunpack.c.l.b16 %v2213
      %v2310 = vunpack.c.l.b16 %v2214
      %v2311 = vunpack.c.l.b16 %v2215
      %v2312 = vunpack.c.l.b16 %v2216
      %v2313 = vunpack.c.l.b16 %v2217
      %v2314 = vunpack.c.l.b16 %v2218
      %v2315 = vunpack.c.l.b16 %v2219
      %v2316 = vunpack.c.l.b16 %v2220
      %v2317 = vunpack.c.l.b16 %v2221
      %v2318 = vunpack.c.l.b16 %v2222
      %v2319 = vunpack.c.l.b16 %v2223
      %v2320 = vunpack.c.l.b16 %v2224
      %v2321 = vpack.c.b16 %v2274, %v2273
      %v2322 = vpack.c.b16 %v2276, %v2275
      %v2323 = vpack.c.b16 %v2278, %v2277
      %v2324 = vpack.c.b16 %v2280, %v2279
      %v2325 = vpack.c.b16 %v2282, %v2281
      %v2326 = vpack.c.b16 %v2284, %v2283
      %v2327 = vpack.c.b16 %v2286, %v2285
      %v2328 = vpack.c.b16 %v2288, %v2287
      %v2329 = vpack.c.b16 %v2290, %v2289
      %v2330 = vpack.c.b16 %v2292, %v2291
      %v2331 = vpack.c.b16 %v2294, %v2293
      %v2332 = vpack.c.b16 %v2296, %v2295
      %v2333 = vpack.c.b16 %v2298, %v2297
      %v2334 = vpack.c.b16 %v2300, %v2299
      %v2335 = vpack.c.b16 %v2302, %v2301
      %v2336 = vpack.c.b16 %v2304, %v2303
      %v2337 = vpack.c.b16 %v2306, %v2305
      %v2338 = vpack.c.b16 %v2308, %v2307
      %v2339 = vpack.c.b16 %v2310, %v2309
      %v2340 = vpack.c.b16 %v2312, %v2311
      %v2341 = vpack.c.b16 %v2314, %v2313
      %v2342 = vpack.c.b16 %v2316, %v2315
      %v2343 = vpack.c.b16 %v2318, %v2317
      %v2344 = vpack.c.b16 %v2320, %v2319
      %2369 = vmatpush.bf16.msra.mxu0 %v2328
      %2370 = vmatpush.bf16.msra.mxu0 %v2327
      %2371 = vmatpush.bf16.msra.mxu0 %v2326
      %2372 = vmatpush.bf16.msra.mxu0 %v2325
      %2373 = vmatpush.bf16.msra.mxu0 %v2324
      %2374 = vmatpush.bf16.msra.mxu0 %v2323
      %2375 = vmatpush.bf16.msra.mxu0 %v2322
      %2376 = vmatpush.bf16.msra.mxu0 %v2321
      %2377 = vmatmul.bf16.gmra.mxu0 %v879
      %v2378 = vpop.f32.mrf.mxu0
      %v2379 = vadd.f32 0.0, %v2378
      %v2380 = vpop.f32.mrf.mxu0
      %v2381 = vadd.f32 0.0, %v2380
      %2382 = vmatmul.bf16.gmra.mxu0 %v880
      %v2383 = vpop.f32.mrf.mxu0
      %v2384 = vadd.f32 0.0, %v2383
      %v2385 = vpop.f32.mrf.mxu0
      %v2386 = vadd.f32 0.0, %v2385
      %2387 = vmatmul.bf16.gmra.mxu0 %v881
      %v2388 = vpop.f32.mrf.mxu0
      %v2389 = vadd.f32 0.0, %v2388
      %v2390 = vpop.f32.mrf.mxu0
      %v2391 = vadd.f32 0.0, %v2390
      %2392 = vmatmul.bf16.gmra.mxu0 %v882
      %v2393 = vpop.f32.mrf.mxu0
      %v2394 = vadd.f32 0.0, %v2393
      %v2395 = vpop.f32.mrf.mxu0
      %v2396 = vadd.f32 0.0, %v2395
      %2397 = vmatmul.bf16.gmra.mxu0 %v883
      %v2398 = vpop.f32.mrf.mxu0
      %v2399 = vadd.f32 0.0, %v2398
      %v2400 = vpop.f32.mrf.mxu0
      %v2401 = vadd.f32 0.0, %v2400
      %2402 = vmatmul.bf16.gmra.mxu0 %v884
      %v2403 = vpop.f32.mrf.mxu0
      %v2404 = vadd.f32 0.0, %v2403
      %v2405 = vpop.f32.mrf.mxu0
      %v2406 = vadd.f32 0.0, %v2405
      %2407 = vmatmul.bf16.gmra.mxu0 %v885
      %v2408 = vpop.f32.mrf.mxu0
      %v2409 = vadd.f32 0.0, %v2408
      %v2410 = vpop.f32.mrf.mxu0
      %v2411 = vadd.f32 0.0, %v2410
      %2412 = vmatmul.bf16.gmra.mxu0 %v886
      %v2413 = vpop.f32.mrf.mxu0
      %v2414 = vadd.f32 0.0, %v2413
      %v2415 = vpop.f32.mrf.mxu0
      %v2416 = vadd.f32 0.0, %v2415
      %2417 = vmatmul.bf16.gmra.mxu0 %v887
      %v2418 = vpop.f32.mrf.mxu0
      %v2419 = vadd.f32 0.0, %v2418
      %v2420 = vpop.f32.mrf.mxu0
      %v2421 = vadd.f32 0.0, %v2420
      %2422 = vmatmul.bf16.gmra.mxu0 %v888
      %v2423 = vpop.f32.mrf.mxu0
      %v2424 = vadd.f32 0.0, %v2423
      %v2425 = vpop.f32.mrf.mxu0
      %v2426 = vadd.f32 0.0, %v2425
      %2427 = vmatmul.bf16.gmra.mxu0 %v889
      %v2428 = vpop.f32.mrf.mxu0
      %v2429 = vadd.f32 0.0, %v2428
      %v2430 = vpop.f32.mrf.mxu0
      %v2431 = vadd.f32 0.0, %v2430
      %2432 = vmatmul.bf16.gmra.mxu0 %v890
      %v2433 = vpop.f32.mrf.mxu0
      %v2434 = vadd.f32 0.0, %v2433
      %v2435 = vpop.f32.mrf.mxu0
      %v2436 = vadd.f32 0.0, %v2435
      %2437 = vmatmul.bf16.gmra.mxu0 %v891
      %v2438 = vpop.f32.mrf.mxu0
      %v2439 = vadd.f32 0.0, %v2438
      %v2440 = vpop.f32.mrf.mxu0
      %v2441 = vadd.f32 0.0, %v2440
      %2442 = vmatmul.bf16.gmra.mxu0 %v892
      %v2443 = vpop.f32.mrf.mxu0
      %v2444 = vadd.f32 0.0, %v2443
      %v2445 = vpop.f32.mrf.mxu0
      %v2446 = vadd.f32 0.0, %v2445
      %2447 = vmatmul.bf16.gmra.mxu0 %v893
      %v2448 = vpop.f32.mrf.mxu0
      %v2449 = vadd.f32 0.0, %v2448
      %v2450 = vpop.f32.mrf.mxu0
      %v2451 = vadd.f32 0.0, %v2450
      %2452 = vmatmul.bf16.gmra.mxu0 %v894
      %v2453 = vpop.f32.mrf.mxu0
      %v2454 = vadd.f32 0.0, %v2453
      %v2455 = vpop.f32.mrf.mxu0
      %v2456 = vadd.f32 0.0, %v2455
      %2457 = vdwg.mxu0
      %2458 = vmatpush.bf16.msra.mxu0 %v2336
      %2459 = vmatpush.bf16.msra.mxu0 %v2335
      %2460 = vmatpush.bf16.msra.mxu0 %v2334
      %2461 = vmatpush.bf16.msra.mxu0 %v2333
      %2462 = vmatpush.bf16.msra.mxu0 %v2332
      %2463 = vmatpush.bf16.msra.mxu0 %v2331
      %2464 = vmatpush.bf16.msra.mxu0 %v2330
      %2465 = vmatpush.bf16.msra.mxu0 %v2329
      %2466 = vmatmul.bf16.gmra.mxu0 %v949
      %v2467 = vpop.f32.mrf.mxu0
      %v2468 = vadd.f32 %v2379, %v2467
      %v2469 = vpop.f32.mrf.mxu0
      %v2470 = vadd.f32 %v2381, %v2469
      %2471 = vmatmul.bf16.gmra.mxu0 %v961
      %v2472 = vpop.f32.mrf.mxu0
      %v2473 = vadd.f32 %v2384, %v2472
      %v2474 = vpop.f32.mrf.mxu0
      %v2475 = vadd.f32 %v2386, %v2474
      %2476 = vmatmul.bf16.gmra.mxu0 %v973
      %v2477 = vpop.f32.mrf.mxu0
      %v2478 = vadd.f32 %v2389, %v2477
      %v2479 = vpop.f32.mrf.mxu0
      %v2480 = vadd.f32 %v2391, %v2479
      %2481 = vmatmul.bf16.gmra.mxu0 %v985
      %v2482 = vpop.f32.mrf.mxu0
      %v2483 = vadd.f32 %v2394, %v2482
      %v2484 = vpop.f32.mrf.mxu0
      %v2485 = vadd.f32 %v2396, %v2484
      %2486 = vmatmul.bf16.gmra.mxu0 %v997
      %v2487 = vpop.f32.mrf.mxu0
      %v2488 = vadd.f32 %v2399, %v2487
      %v2489 = vpop.f32.mrf.mxu0
      %v2490 = vadd.f32 %v2401, %v2489
      %2491 = vmatmul.bf16.gmra.mxu0 %v1009
      %v2492 = vpop.f32.mrf.mxu0
      %v2493 = vadd.f32 %v2404, %v2492
      %v2494 = vpop.f32.mrf.mxu0
      %v2495 = vadd.f32 %v2406, %v2494
      %2496 = vmatmul.bf16.gmra.mxu0 %v1021
      %v2497 = vpop.f32.mrf.mxu0
      %v2498 = vadd.f32 %v2409, %v2497
      %v2499 = vpop.f32.mrf.mxu0
      %v2500 = vadd.f32 %v2411, %v2499
      %2501 = vmatmul.bf16.gmra.mxu0 %v1033
      %v2502 = vpop.f32.mrf.mxu0
      %v2503 = vadd.f32 %v2414, %v2502
      %v2504 = vpop.f32.mrf.mxu0
      %v2505 = vadd.f32 %v2416, %v2504
      %2506 = vmatmul.bf16.gmra.mxu0 %v1045
      %v2507 = vpop.f32.mrf.mxu0
      %v2508 = vadd.f32 %v2419, %v2507
      %v2509 = vpop.f32.mrf.mxu0
      %v2510 = vadd.f32 %v2421, %v2509
      %2511 = vmatmul.bf16.gmra.mxu0 %v1057
      %v2512 = vpop.f32.mrf.mxu0
      %v2513 = vadd.f32 %v2424, %v2512
      %v2514 = vpop.f32.mrf.mxu0
      %v2515 = vadd.f32 %v2426, %v2514
      %2516 = vmatmul.bf16.gmra.mxu0 %v1069
      %v2517 = vpop.f32.mrf.mxu0
      %v2518 = vadd.f32 %v2429, %v2517
      %v2519 = vpop.f32.mrf.mxu0
      %v2520 = vadd.f32 %v2431, %v2519
      %2521 = vmatmul.bf16.gmra.mxu0 %v1081
      %v2522 = vpop.f32.mrf.mxu0
      %v2523 = vadd.f32 %v2434, %v2522
      %v2524 = vpop.f32.mrf.mxu0
      %v2525 = vadd.f32 %v2436, %v2524
      %2526 = vmatmul.bf16.gmra.mxu0 %v1093
      %v2527 = vpop.f32.mrf.mxu0
      %v2528 = vadd.f32 %v2439, %v2527
      %v2529 = vpop.f32.mrf.mxu0
      %v2530 = vadd.f32 %v2441, %v2529
      %2531 = vmatmul.bf16.gmra.mxu0 %v1105
      %v2532 = vpop.f32.mrf.mxu0
      %v2533 = vadd.f32 %v2444, %v2532
      %v2534 = vpop.f32.mrf.mxu0
      %v2535 = vadd.f32 %v2446, %v2534
      %2536 = vmatmul.bf16.gmra.mxu0 %v1278
      %v2537 = vpop.f32.mrf.mxu0
      %v2538 = vadd.f32 %v2449, %v2537
      %v2539 = vpop.f32.mrf.mxu0
      %v2540 = vadd.f32 %v2451, %v2539
      %2541 = vmatmul.bf16.gmra.mxu0 %v2168
      %v2542 = vpop.f32.mrf.mxu0
      %v2543 = vadd.f32 %v2454, %v2542
      %v2544 = vpop.f32.mrf.mxu0
      %v2545 = vadd.f32 %v2456, %v2544
      %2546 = vdwg.mxu0
      %2547 = vmatpush.bf16.msra.mxu0 %v2344
      %2548 = vmatpush.bf16.msra.mxu0 %v2343
      %2549 = vmatpush.bf16.msra.mxu0 %v2342
      %2550 = vmatpush.bf16.msra.mxu0 %v2341
      %2551 = vmatpush.bf16.msra.mxu0 %v2340
      %2552 = vmatpush.bf16.msra.mxu0 %v2339
      %2553 = vmatpush.bf16.msra.mxu0 %v2338
      %2554 = vmatpush.bf16.msra.mxu0 %v2337
      %2555 = vmatmul.bf16.gmra.mxu0 %v1163
      %v2556 = vpop.f32.mrf.mxu0
      %v2557 = vadd.f32 %v2468, %v2556
      %v2558 = vpop.f32.mrf.mxu0
      %v2559 = vadd.f32 %v2470, %v2558
      %2560 = vmatmul.bf16.gmra.mxu0 %v1166
      %v2561 = vpop.f32.mrf.mxu0
      %v2562 = vadd.f32 %v2473, %v2561
      %v2563 = vpop.f32.mrf.mxu0
      %v2564 = vadd.f32 %v2475, %v2563
      %2565 = vmatmul.bf16.gmra.mxu0 %v1169
      %v2566 = vpop.f32.mrf.mxu0
      %v2567 = vadd.f32 %v2478, %v2566
      %v2568 = vpop.f32.mrf.mxu0
      %v2569 = vadd.f32 %v2480, %v2568
      %2570 = vmatmul.bf16.gmra.mxu0 %v1172
      %v2571 = vpop.f32.mrf.mxu0
      %v2572 = vadd.f32 %v2483, %v2571
      %v2573 = vpop.f32.mrf.mxu0
      %v2574 = vadd.f32 %v2485, %v2573
      %2575 = vmatmul.bf16.gmra.mxu0 %v1175
      %v2576 = vpop.f32.mrf.mxu0
      %v2577 = vadd.f32 %v2488, %v2576
      %v2578 = vpop.f32.mrf.mxu0
      %v2579 = vadd.f32 %v2490, %v2578
      %2580 = vmatmul.bf16.gmra.mxu0 %v1178
      %v2581 = vpop.f32.mrf.mxu0
      %v2582 = vadd.f32 %v2493, %v2581
      %v2583 = vpop.f32.mrf.mxu0
      %v2584 = vadd.f32 %v2495, %v2583
      %2585 = vmatmul.bf16.gmra.mxu0 %v1181
      %v2586 = vpop.f32.mrf.mxu0
      %v2587 = vadd.f32 %v2498, %v2586
      %v2588 = vpop.f32.mrf.mxu0
      %v2589 = vadd.f32 %v2500, %v2588
      %2590 = vmatmul.bf16.gmra.mxu0 %v1184
      %v2591 = vpop.f32.mrf.mxu0
      %v2592 = vadd.f32 %v2503, %v2591
      %v2593 = vpop.f32.mrf.mxu0
      %v2594 = vadd.f32 %v2505, %v2593
      %2595 = vmatmul.bf16.gmra.mxu0 %v1187
      %v2596 = vpop.f32.mrf.mxu0
      %v2597 = vadd.f32 %v2508, %v2596
      %v2598 = vpop.f32.mrf.mxu0
      %v2599 = vadd.f32 %v2510, %v2598
      %2600 = vmatmul.bf16.gmra.mxu0 %v1190
      %v2601 = vpop.f32.mrf.mxu0
      %v2602 = vadd.f32 %v2513, %v2601
      %v2603 = vpop.f32.mrf.mxu0
      %v2604 = vadd.f32 %v2515, %v2603
      %2605 = vmatmul.bf16.gmra.mxu0 %v1193
      %v2606 = vpop.f32.mrf.mxu0
      %v2607 = vadd.f32 %v2518, %v2606
      %v2608 = vpop.f32.mrf.mxu0
      %v2609 = vadd.f32 %v2520, %v2608
      %2610 = vmatmul.bf16.gmra.mxu0 %v1196
      %v2611 = vpop.f32.mrf.mxu0
      %v2612 = vadd.f32 %v2523, %v2611
      %v2613 = vpop.f32.mrf.mxu0
      %v2614 = vadd.f32 %v2525, %v2613
      %2615 = vmatmul.bf16.gmra.mxu0 %v1199
      %v2616 = vpop.f32.mrf.mxu0
      %v2617 = vadd.f32 %v2528, %v2616
      %v2618 = vpop.f32.mrf.mxu0
      %v2619 = vadd.f32 %v2530, %v2618
      %2620 = vmatmul.bf16.gmra.mxu0 %v1202
      %v2621 = vpop.f32.mrf.mxu0
      %v2622 = vadd.f32 %v2533, %v2621
      %v2623 = vpop.f32.mrf.mxu0
      %v2624 = vadd.f32 %v2535, %v2623
      %2625 = vmatmul.bf16.gmra.mxu0 %v1284
      %v2626 = vpop.f32.mrf.mxu0
      %v2627 = vadd.f32 %v2538, %v2626
      %v2628 = vpop.f32.mrf.mxu0
      %v2629 = vadd.f32 %v2540, %v2628
      %2630 = vmatmul.bf16.gmra.mxu0 %v2174
      %v2631 = vpop.f32.mrf.mxu0
      %v2632 = vadd.f32 %v2543, %v2631
      %v2633 = vpop.f32.mrf.mxu0
      %v2634 = vadd.f32 %v2545, %v2633
      %2635 = vdwg.mxu0
      %v2636 = vadd.f32 %v2078, %v2557
      %v2637 = vadd.f32 %v2080, %v2559
      %v2638 = vadd.f32 %v2083, %v2562
      %v2639 = vadd.f32 %v2085, %v2564
      %v2640 = vadd.f32 %v2088, %v2567
      %v2641 = vadd.f32 %v2090, %v2569
      %v2642 = vadd.f32 %v2093, %v2572
      %v2643 = vadd.f32 %v2095, %v2574
      %v2644 = vadd.f32 %v2098, %v2577
      %v2645 = vadd.f32 %v2100, %v2579
      %v2646 = vadd.f32 %v2103, %v2582
      %v2647 = vadd.f32 %v2105, %v2584
      %v2648 = vadd.f32 %v2108, %v2587
      %v2649 = vadd.f32 %v2110, %v2589
      %v2650 = vadd.f32 %v2113, %v2592
      %v2651 = vadd.f32 %v2115, %v2594
      %v2652 = vadd.f32 %v2118, %v2597
      %v2653 = vadd.f32 %v2120, %v2599
      %v2654 = vadd.f32 %v2123, %v2602
      %v2655 = vadd.f32 %v2125, %v2604
      %v2656 = vadd.f32 %v2128, %v2607
      %v2657 = vadd.f32 %v2130, %v2609
      %v2658 = vadd.f32 %v2133, %v2612
      %v2659 = vadd.f32 %v2135, %v2614
      %v2660 = vadd.f32 %v2138, %v2617
      %v2661 = vadd.f32 %v2140, %v2619
      %v2662 = vadd.f32 %v2143, %v2622
      %v2663 = vadd.f32 %v2145, %v2624
      %v2664 = vadd.f32 %v2148, %v2627
      %v2665 = vadd.f32 %v2150, %v2629
      %v2666 = vadd.f32 %v2153, %v2632
      %v2667 = vadd.f32 %v2155, %v2634
      %v2668 = vld [vmem:[%s424] sm:$0x1]
      %v2670 = vperm.slane %v2668, 0
      %v2672 = vadd.f32 %v2636, %v2670
      %v2673 = vadd.f32 %v2637, %v2670
      %v2674 = vadd.f32 %v2638, %v2670
      %v2675 = vadd.f32 %v2639, %v2670
      %v2676 = vadd.f32 %v2640, %v2670
      %v2677 = vadd.f32 %v2641, %v2670
      %v2678 = vadd.f32 %v2642, %v2670
      %v2679 = vadd.f32 %v2643, %v2670
      %v2680 = vadd.f32 %v2644, %v2670
      %v2681 = vadd.f32 %v2645, %v2670
      %v2682 = vadd.f32 %v2646, %v2670
      %v2683 = vadd.f32 %v2647, %v2670
      %v2684 = vadd.f32 %v2648, %v2670
      %v2685 = vadd.f32 %v2649, %v2670
      %v2686 = vadd.f32 %v2650, %v2670
      %v2687 = vadd.f32 %v2651, %v2670
      %v2688 = vadd.f32 %v2652, %v2670
      %v2689 = vadd.f32 %v2653, %v2670
      %v2690 = vadd.f32 %v2654, %v2670
      %v2691 = vadd.f32 %v2655, %v2670
      %v2692 = vadd.f32 %v2656, %v2670
      %v2693 = vadd.f32 %v2657, %v2670
      %v2694 = vadd.f32 %v2658, %v2670
      %v2695 = vadd.f32 %v2659, %v2670
      %v2696 = vadd.f32 %v2660, %v2670
      %v2697 = vadd.f32 %v2661, %v2670
      %v2698 = vadd.f32 %v2662, %v2670
      %v2699 = vadd.f32 %v2663, %v2670
      %v2700 = vadd.f32 %v2664, %v2670
      %v2701 = vadd.f32 %v2665, %v2670
      %v2702 = vadd.f32 %v2666, %v2670
      %v2703 = vadd.f32 %v2667, %v2670
      %v2704 = vmax.f32 %v2672, 0.0
      %v2705 = vmax.f32 %v2673, 0.0
      %v2706 = vmax.f32 %v2674, 0.0
      %v2707 = vmax.f32 %v2675, 0.0
      %v2708 = vmax.f32 %v2676, 0.0
      %v2709 = vmax.f32 %v2677, 0.0
      %v2710 = vmax.f32 %v2678, 0.0
      %v2711 = vmax.f32 %v2679, 0.0
      %v2712 = vmax.f32 %v2680, 0.0
      %v2713 = vmax.f32 %v2681, 0.0
      %v2714 = vmax.f32 %v2682, 0.0
      %v2715 = vmax.f32 %v2683, 0.0
      %v2716 = vmax.f32 %v2684, 0.0
      %v2717 = vmax.f32 %v2685, 0.0
      %v2718 = vmax.f32 %v2686, 0.0
      %v2719 = vmax.f32 %v2687, 0.0
      %v2720 = vmax.f32 %v2688, 0.0
      %v2721 = vmax.f32 %v2689, 0.0
      %v2722 = vmax.f32 %v2690, 0.0
      %v2723 = vmax.f32 %v2691, 0.0
      %v2724 = vmax.f32 %v2692, 0.0
      %v2725 = vmax.f32 %v2693, 0.0
      %v2726 = vmax.f32 %v2694, 0.0
      %v2727 = vmax.f32 %v2695, 0.0
      %v2728 = vmax.f32 %v2696, 0.0
      %v2729 = vmax.f32 %v2697, 0.0
      %v2730 = vmax.f32 %v2698, 0.0
      %v2731 = vmax.f32 %v2699, 0.0
      %v2732 = vmax.f32 %v2700, 0.0
      %v2733 = vmax.f32 %v2701, 0.0
      %v2734 = vmax.f32 %v2702, 0.0
      %v2735 = vmax.f32 %v2703, 0.0
      %2736 = vst [vmem:[%s437] sm:$0xff] %v2704
      %2737 = vst [vmem:[%s437 + $0x8] sm:$0xff] %v2705
      %2738 = vst [vmem:[%s437 + $0x10] sm:$0xff] %v2706
      %2739 = vst [vmem:[%s437 + $0x18] sm:$0xff] %v2707
      %2740 = vst [vmem:[%s437 + $0x20] sm:$0xff] %v2708
      %2741 = vst [vmem:[%s437 + $0x28] sm:$0xff] %v2709
      %2742 = vst [vmem:[%s437 + $0x30] sm:$0xff] %v2710
      %2743 = vst [vmem:[%s437 + $0x38] sm:$0xff] %v2711
      %2744 = vst [vmem:[%s437 + $0x40] sm:$0xff] %v2712
      %2745 = vst [vmem:[%s437 + $0x48] sm:$0xff] %v2713
      %2746 = vst [vmem:[%s437 + $0x50] sm:$0xff] %v2714
      %2747 = vst [vmem:[%s437 + $0x58] sm:$0xff] %v2715
      %2748 = vst [vmem:[%s437 + $0x60] sm:$0xff] %v2716
      %2749 = vst [vmem:[%s437 + $0x68] sm:$0xff] %v2717
      %2750 = vst [vmem:[%s437 + $0x70] sm:$0xff] %v2718
      %2751 = vst [vmem:[%s437 + $0x78] sm:$0xff] %v2719
      %2752 = vst [vmem:[%s437 + $0x80] sm:$0xff] %v2720
      %2753 = vst [vmem:[%s437 + $0x88] sm:$0xff] %v2721
      %2754 = vst [vmem:[%s437 + $0x90] sm:$0xff] %v2722
      %2755 = vst [vmem:[%s437 + $0x98] sm:$0xff] %v2723
      %2756 = vst [vmem:[%s437 + $0xa0] sm:$0xff] %v2724
      %2757 = vst [vmem:[%s437 + $0xa8] sm:$0xff] %v2725
      %2758 = vst [vmem:[%s437 + $0xb0] sm:$0xff] %v2726
      %2759 = vst [vmem:[%s437 + $0xb8] sm:$0xff] %v2727
      %2760 = vst [vmem:[%s437 + $0xc0] sm:$0xff] %v2728
      %2761 = vst [vmem:[%s437 + $0xc8] sm:$0xff] %v2729
      %2762 = vst [vmem:[%s437 + $0xd0] sm:$0xff] %v2730
      %2763 = vst [vmem:[%s437 + $0xd8] sm:$0xff] %v2731
      %2764 = vst [vmem:[%s437 + $0xe0] sm:$0xff] %v2732
      %2765 = vst [vmem:[%s437 + $0xe8] sm:$0xff] %v2733
      %2766 = vst [vmem:[%s437 + $0xf0] sm:$0xff] %v2734
      %2767 = vst [vmem:[%s437 + $0xf8] sm:$0xff] %v2735
      %s2768 = smul.u32 16, %s22
      %p2769 = scmp.lt.s32.totalorder %s21, 1
      %s2770 = scalar_select %p2769, %s21, 1
      %p2771 = scmp.lt.s32.totalorder %s2768, 15
      %s2772 = scalar_select %p2771, %s2768, 15
      %p2773 = scmp.lt.s32.totalorder %s23, 0
      %s2774 = scalar_select %p2773, %s23, 0
      %s2775 = smul.addr %s2772, 2
      %s2776 = sadd.s32 %s2774, %s2775
      %s2777 = smul.addr %s2770, 32
      %s2778 = sadd.s32 %s2776, %s2777
      %s2779 = smul.addr %s2778, 8
      %s2780 = scalar_lea.vmem %s5, %s2779
      // Predicated region
      $region41: #{up_corrected_forward.3} parent=39 // pred_check
        %p2781 = pneg %p209
      $region42: #{up_corrected_forward.3} parent=39 // pred_check_branch
        %2783 = sbr.rel (%p2781) target = $region44
      $region43: #{up_corrected_forward.3} parent=39 // pred_region
        %s2784 = smul.u32 16, %s22
      $region44: #{up_corrected_forward.3} parent=39 // pred_fallthru
        _
    $region40: #{up_corrected_forward.3} parent=5 // pred_fallthru
      _
    %p2785 = scmp.le.s32.totalorder 2, %s11
    // Predicated region
    $region45: #{up_corrected_forward.3} parent=5 // pred_check
      %p2786 = pneg %p2785
    $region46: #{up_corrected_forward.3} parent=5 // pred_check_branch
      %2788 = sbr.rel (%p2786) target = $region48
    $region47: #{up_corrected_forward.3} parent=5 // pred_region
      %s2789 = ssub.s32 %s11, 2
      // Predicated region
      $region49: #{up_corrected_forward.3} parent=47 // pred_check
        %p2790 = pneg %p215
      $region50: #{up_corrected_forward.3} parent=47 // pred_check_branch
        %2792 = sbr.rel (%p2790) target = $region52
      $region51: #{up_corrected_forward.3} parent=47 // pred_region
        %s2793 = smul.u32 16, %s25
        %p2794 = scmp.lt.s32.totalorder %s24, 1
        %s2795 = scalar_select %p2794, %s24, 1
        %p2796 = scmp.lt.s32.totalorder %s2793, 15
        %s2797 = scalar_select %p2796, %s2793, 15
        %p2798 = scmp.lt.s32.totalorder %s26, 0
        %s2799 = scalar_select %p2798, %s26, 0
        %s2800 = smul.addr %s2797, 2
        %s2801 = sadd.s32 %s2799, %s2800
        %s2802 = smul.addr %s2795, 32
        %s2803 = sadd.s32 %s2801, %s2802
        %s2804 = smul.addr %s2803, 8
        %s2805 = scalar_lea.vmem %s5, %s2804
      $region52: #{up_corrected_forward.3} parent=47 // pred_fallthru
        _
    $region48: #{up_corrected_forward.3} parent=5 // pred_fallthru
      _
  $region6: #{up_corrected_forward.3} parent=0 // loop_footer
    %s15 = sadd.s32 1, %s11
  $region7: #{up_corrected_forward.3} parent=0 // loop_footer_branch
    %10 = sbr.rel target = $region3
  $region8: #{up_corrected_forward.3} parent=0 // loop_exit
    _

// kernel: up_corrected_forward.2
$region0: #{up_corrected_forward.2}
  #allocation0 [shape = 'u32[]', space=smem, size = 0x4, offset = 0x4, fixed_abs, tag = 'smem constant byte address 0x4 - core index']
  #allocation1 [shape = 'u32[72,128]{1,0:T(1,128)}', space=vmem, size = 0x9000, scoped, tag = 'internal scratch']
  %s0 = inlined_call_operand.vmem [shape: bf16[2,16,16,4], index: 0, kind: input, shape index: {}, may-alias: {0,1,2}]
  %s1 = inlined_call_operand.vmem [shape: bf16[2,16,16,4], index: 1, kind: input, shape index: {}, may-alias: {0,1,2}]
  %s2 = inlined_call_operand.vmem [shape: bf16[2,16,16,4], index: 2, kind: input, shape index: {}, may-alias: {0,1,2}]
  %s3 = inlined_call_operand.vmem [shape: bf16[2,16,16,4], index: 3, kind: input, shape index: {}, may-alias: {3,4,5}]
  %s4 = inlined_call_operand.vmem [shape: bf16[2,16,16,4], index: 4, kind: input, shape index: {}, may-alias: {3,4,5}]
  %s5 = inlined_call_operand.vmem [shape: bf16[2,16,16,4], index: 5, kind: input, shape index: {}, may-alias: {3,4,5}]
  %s6 = inlined_call_operand.vmem [shape: bf16[3,12,128], index: 6, kind: input, shape index: {}]
  %s7 = inlined_call_operand.vmem [shape: bf16[3,12,128], index: 7, kind: input, shape index: {}]
  %s8 = inlined_call_operand.vmem [shape: f32[1,128], index: 8, kind: input, shape index: {}]
  %s9 = inlined_call_operand.vmem [shape: bf16[2,16,16,128], index: 9, kind: output, shape index: {}]
  %s10 = sld [smem:[#allocation0]]
  $region69: #{up_corrected_forward.2} parent=0
    _
  %s12 = ssub.s32 1, %s10
  %s13 = scalar_select 0, %s12, %s10
  loop: start=0, step=1, limit=4
  $region2: #{up_corrected_forward.2} parent=0 // loop_pre_header
    _
  $region3: #{up_corrected_forward.2} parent=0 // loop_header
    %s15 = sphi 0, %s19
    %p16 = scmp.ge.s32.totalorder %s15, 4
    %s22 = sphi 0, %s41
    %s23 = sphi 0, %s37
    %s24 = sphi 0, %s33
    %s25 = sphi 0, %s22
    %s26 = sphi 0, %s23
    %s27 = sphi 0, %s24
    %s28 = sphi 0, %s25
    %s29 = sphi 0, %s26
    %s30 = sphi 0, %s27
    %s54 = sphi 0, %s56
    %s57 = sphi 0, %s54
    %s58 = sphi 0, %s57
    %s74 = sphi 0, %s58
    %s82 = sphi 0, %s84
    %s85 = sphi 0, %s82
    %s86 = sphi 0, %s85
    %s102 = sphi 0, %s86
    %s118 = sphi 0, %s120
    %s121 = sphi 0, %s118
    %s122 = sphi 0, %s121
    %s138 = sphi 0, %s122
    %s154 = sphi 0, %s156
    %s157 = sphi 0, %s154
    %s158 = sphi 0, %s157
    %s174 = sphi 0, %s158
    %s182 = sphi 0, %s184
    %s185 = sphi 0, %s182
    %s186 = sphi 0, %s185
    %s202 = sphi 0, %s186
    %s218 = sphi 0, %s220
    %s221 = sphi 0, %s218
    %s222 = sphi 0, %s221
    %s238 = sphi 0, %s222
    %s244 = sphi 0, %s246
    %s247 = sphi 0, %s244
    %s248 = sphi 0, %s247
    %s264 = sphi 0, %s248
    %s270 = sphi 0, %s272
    %s273 = sphi 0, %s270
    %s274 = sphi 0, %s273
    %s290 = sphi 0, %s274
    %s296 = sphi 0, %s298
    %s299 = sphi 0, %s296
    %s300 = sphi 0, %s299
    %s316 = sphi 0, %s300
    %s326 = sphi 0, %s328
    %s329 = sphi 0, %s326
    %s330 = sphi 0, %s329
    %s346 = sphi 0, %s330
  $region4: #{up_corrected_forward.2} parent=0 // loop_header_branch
    %18 = sbr.rel (%p16) target = $region8
  $region5: #{up_corrected_forward.2} parent=0 // loop_body
    %s20 = ssub.s32 %s15, 1
    %s21 = ssub.s32 %s15, 2
    %s31 = sadd.s32 1, %s24
    %p32 = scmp.ge.s32.totalorder %s31, 1
    %s33 = scalar_select %p32, 0, %s31
    %s34 = sadd.s32 1, %s23
    %s35 = scalar_select %p32, %s34, %s23
    %p36 = scmp.ge.s32.totalorder %s35, 1
    %s37 = scalar_select %p36, 0, %s35
    %s38 = sadd.s32 1, %s22
    %s39 = scalar_select %p36, %s38, %s22
    %p40 = scmp.ge.s32.totalorder %s39, 2
    %s41 = scalar_select %p40, 0, %s39
    %s42 = smul.u32 %s23, 16
    %s43 = ssub.s32 %s42, 1
    %p44 = scmp.gt.s32.totalorder %s43, 0
    %s45 = scalar_select %p44, %s43, 0
    %s46 = smul.u32 %s37, 16
    %s47 = ssub.s32 %s46, 1
    %p48 = scmp.gt.s32.totalorder %s47, 0
    %s49 = scalar_select %p48, %s47, 0
    %s50 = ssub.s32 %s22, %s41
    %s51 = ssub.s32 %s45, %s49
    %s52 = sor.u32 %s50, %s51
    %p53 = scmp.eq.s32.totalorder %s52, 0
    %s55 = sadd.s32 %s54, 1
    %s56 = scalar_select %p53, %s54, %s55
    %p59 = pneg %p53
    %p60 = scmp.eq.s32.totalorder %s15, 1
    %p61 = por %p59, %p60
    %p62 = scmp.ne.s32.totalorder %s54, %s57
    %p63 = scmp.eq.s32.totalorder %s15, 0
    %p64 = por %p62, %p63
    %p65 = scmp.ne.s32.totalorder %s54, %s57
    %p66 = scmp.eq.s32.totalorder %s20, 1
    %p67 = por %p65, %p66
    %p68 = scmp.ne.s32.totalorder %s57, %s58
    %p69 = scmp.eq.s32.totalorder %s20, 0
    %p70 = por %p68, %p69
    %p71 = scmp.ne.s32.totalorder %s57, %s58
    %p72 = scmp.eq.s32.totalorder %s21, 1
    %p73 = por %p71, %p72
    %p75 = scmp.ne.s32.totalorder %s58, %s74
    %p76 = scmp.eq.s32.totalorder %s21, 0
    %p77 = por %p75, %p76
    %s78 = ssub.s32 %s22, %s41
    %s79 = ssub.s32 %s23, %s37
    %s80 = sor.u32 %s78, %s79
    %p81 = scmp.eq.s32.totalorder %s80, 0
    %s83 = sadd.s32 %s82, 1
    %s84 = scalar_select %p81, %s82, %s83
    %p87 = pneg %p81
    %p88 = scmp.eq.s32.totalorder %s15, 1
    %p89 = por %p87, %p88
    %p90 = scmp.ne.s32.totalorder %s82, %s85
    %p91 = scmp.eq.s32.totalorder %s15, 0
    %p92 = por %p90, %p91
    %p93 = scmp.ne.s32.totalorder %s82, %s85
    %p94 = scmp.eq.s32.totalorder %s20, 1
    %p95 = por %p93, %p94
    %p96 = scmp.ne.s32.totalorder %s85, %s86
    %p97 = scmp.eq.s32.totalorder %s20, 0
    %p98 = por %p96, %p97
    %p99 = scmp.ne.s32.totalorder %s85, %s86
    %p100 = scmp.eq.s32.totalorder %s21, 1
    %p101 = por %p99, %p100
    %p103 = scmp.ne.s32.totalorder %s86, %s102
    %p104 = scmp.eq.s32.totalorder %s21, 0
    %p105 = por %p103, %p104
    %s106 = sadd.s32 %s23, 1
    %s107 = smul.u32 %s106, 16
    %p108 = scmp.lt.s32.totalorder %s107, 15
    %s109 = scalar_select %p108, %s107, 15
    %s110 = sadd.s32 %s37, 1
    %s111 = smul.u32 %s110, 16
    %p112 = scmp.lt.s32.totalorder %s111, 15
    %s113 = scalar_select %p112, %s111, 15
    %s114 = ssub.s32 %s22, %s41
    %s115 = ssub.s32 %s109, %s113
    %s116 = sor.u32 %s114, %s115
    %p117 = scmp.eq.s32.totalorder %s116, 0
    %s119 = sadd.s32 %s118, 1
    %s120 = scalar_select %p117, %s118, %s119
    %p123 = pneg %p117
    %p124 = scmp.eq.s32.totalorder %s15, 1
    %p125 = por %p123, %p124
    %p126 = scmp.ne.s32.totalorder %s118, %s121
    %p127 = scmp.eq.s32.totalorder %s15, 0
    %p128 = por %p126, %p127
    %p129 = scmp.ne.s32.totalorder %s118, %s121
    %p130 = scmp.eq.s32.totalorder %s20, 1
    %p131 = por %p129, %p130
    %p132 = scmp.ne.s32.totalorder %s121, %s122
    %p133 = scmp.eq.s32.totalorder %s20, 0
    %p134 = por %p132, %p133
    %p135 = scmp.ne.s32.totalorder %s121, %s122
    %p136 = scmp.eq.s32.totalorder %s21, 1
    %p137 = por %p135, %p136
    %p139 = scmp.ne.s32.totalorder %s122, %s138
    %p140 = scmp.eq.s32.totalorder %s21, 0
    %p141 = por %p139, %p140
    %s142 = smul.u32 %s23, 16
    %s143 = ssub.s32 %s142, 1
    %p144 = scmp.gt.s32.totalorder %s143, 0
    %s145 = scalar_select %p144, %s143, 0
    %s146 = smul.u32 %s37, 16
    %s147 = ssub.s32 %s146, 1
    %p148 = scmp.gt.s32.totalorder %s147, 0
    %s149 = scalar_select %p148, %s147, 0
    %s150 = ssub.s32 %s22, %s41
    %s151 = ssub.s32 %s145, %s149
    %s152 = sor.u32 %s150, %s151
    %p153 = scmp.eq.s32.totalorder %s152, 0
    %s155 = sadd.s32 %s154, 1
    %s156 = scalar_select %p153, %s154, %s155
    %p159 = pneg %p153
    %p160 = scmp.eq.s32.totalorder %s15, 1
    %p161 = por %p159, %p160
    %p162 = scmp.ne.s32.totalorder %s154, %s157
    %p163 = scmp.eq.s32.totalorder %s15, 0
    %p164 = por %p162, %p163
    %p165 = scmp.ne.s32.totalorder %s154, %s157
    %p166 = scmp.eq.s32.totalorder %s20, 1
    %p167 = por %p165, %p166
    %p168 = scmp.ne.s32.totalorder %s157, %s158
    %p169 = scmp.eq.s32.totalorder %s20, 0
    %p170 = por %p168, %p169
    %p171 = scmp.ne.s32.totalorder %s157, %s158
    %p172 = scmp.eq.s32.totalorder %s21, 1
    %p173 = por %p171, %p172
    %p175 = scmp.ne.s32.totalorder %s158, %s174
    %p176 = scmp.eq.s32.totalorder %s21, 0
    %p177 = por %p175, %p176
    %s178 = ssub.s32 %s22, %s41
    %s179 = ssub.s32 %s23, %s37
    %s180 = sor.u32 %s178, %s179
    %p181 = scmp.eq.s32.totalorder %s180, 0
    %s183 = sadd.s32 %s182, 1
    %s184 = scalar_select %p181, %s182, %s183
    %p187 = pneg %p181
    %p188 = scmp.eq.s32.totalorder %s15, 1
    %p189 = por %p187, %p188
    %p190 = scmp.ne.s32.totalorder %s182, %s185
    %p191 = scmp.eq.s32.totalorder %s15, 0
    %p192 = por %p190, %p191
    %p193 = scmp.ne.s32.totalorder %s182, %s185
    %p194 = scmp.eq.s32.totalorder %s20, 1
    %p195 = por %p193, %p194
    %p196 = scmp.ne.s32.totalorder %s185, %s186
    %p197 = scmp.eq.s32.totalorder %s20, 0
    %p198 = por %p196, %p197
    %p199 = scmp.ne.s32.totalorder %s185, %s186
    %p200 = scmp.eq.s32.totalorder %s21, 1
    %p201 = por %p199, %p200
    %p203 = scmp.ne.s32.totalorder %s186, %s202
    %p204 = scmp.eq.s32.totalorder %s21, 0
    %p205 = por %p203, %p204
    %s206 = sadd.s32 %s23, 1
    %s207 = smul.u32 %s206, 16
    %p208 = scmp.lt.s32.totalorder %s207, 15
    %s209 = scalar_select %p208, %s207, 15
    %s210 = sadd.s32 %s37, 1
    %s211 = smul.u32 %s210, 16
    %p212 = scmp.lt.s32.totalorder %s211, 15
    %s213 = scalar_select %p212, %s211, 15
    %s214 = ssub.s32 %s22, %s41
    %s215 = ssub.s32 %s209, %s213
    %s216 = sor.u32 %s214, %s215
    %p217 = scmp.eq.s32.totalorder %s216, 0
    %s219 = sadd.s32 %s218, 1
    %s220 = scalar_select %p217, %s218, %s219
    %p223 = pneg %p217
    %p224 = scmp.eq.s32.totalorder %s15, 1
    %p225 = por %p223, %p224
    %p226 = scmp.ne.s32.totalorder %s218, %s221
    %p227 = scmp.eq.s32.totalorder %s15, 0
    %p228 = por %p226, %p227
    %p229 = scmp.ne.s32.totalorder %s218, %s221
    %p230 = scmp.eq.s32.totalorder %s20, 1
    %p231 = por %p229, %p230
    %p232 = scmp.ne.s32.totalorder %s221, %s222
    %p233 = scmp.eq.s32.totalorder %s20, 0
    %p234 = por %p232, %p233
    %p235 = scmp.ne.s32.totalorder %s221, %s222
    %p236 = scmp.eq.s32.totalorder %s21, 1
    %p237 = por %p235, %p236
    %p239 = scmp.ne.s32.totalorder %s222, %s238
    %p240 = scmp.eq.s32.totalorder %s21, 0
    %p241 = por %p239, %p240
    %s242 = ssub.s32 %s24, %s33
    %p243 = scmp.eq.s32.totalorder %s242, 0
    %s245 = sadd.s32 %s244, 1
    %s246 = scalar_select %p243, %s244, %s245
    %p249 = pneg %p243
    %p250 = scmp.eq.s32.totalorder %s15, 1
    %p251 = por %p249, %p250
    %p252 = scmp.ne.s32.totalorder %s244, %s247
    %p253 = scmp.eq.s32.totalorder %s15, 0
    %p254 = por %p252, %p253
    %p255 = scmp.ne.s32.totalorder %s244, %s247
    %p256 = scmp.eq.s32.totalorder %s20, 1
    %p257 = por %p255, %p256
    %p258 = scmp.ne.s32.totalorder %s247, %s248
    %p259 = scmp.eq.s32.totalorder %s20, 0
    %p260 = por %p258, %p259
    %p261 = scmp.ne.s32.totalorder %s247, %s248
    %p262 = scmp.eq.s32.totalorder %s21, 1
    %p263 = por %p261, %p262
    %p265 = scmp.ne.s32.totalorder %s248, %s264
    %p266 = scmp.eq.s32.totalorder %s21, 0
    %p267 = por %p265, %p266
    %s268 = ssub.s32 %s24, %s33
    %p269 = scmp.eq.s32.totalorder %s268, 0
    %s271 = sadd.s32 %s270, 1
    %s272 = scalar_select %p269, %s270, %s271
    %p275 = pneg %p269
    %p276 = scmp.eq.s32.totalorder %s15, 1
    %p277 = por %p275, %p276
    %p278 = scmp.ne.s32.totalorder %s270, %s273
    %p279 = scmp.eq.s32.totalorder %s15, 0
    %p280 = por %p278, %p279
    %p281 = scmp.ne.s32.totalorder %s270, %s273
    %p282 = scmp.eq.s32.totalorder %s20, 1
    %p283 = por %p281, %p282
    %p284 = scmp.ne.s32.totalorder %s273, %s274
    %p285 = scmp.eq.s32.totalorder %s20, 0
    %p286 = por %p284, %p285
    %p287 = scmp.ne.s32.totalorder %s273, %s274
    %p288 = scmp.eq.s32.totalorder %s21, 1
    %p289 = por %p287, %p288
    %p291 = scmp.ne.s32.totalorder %s274, %s290
    %p292 = scmp.eq.s32.totalorder %s21, 0
    %p293 = por %p291, %p292
    %s294 = ssub.s32 %s24, %s33
    %p295 = scmp.eq.s32.totalorder %s294, 0
    %s297 = sadd.s32 %s296, 1
    %s298 = scalar_select %p295, %s296, %s297
    %p301 = pneg %p295
    %p302 = scmp.eq.s32.totalorder %s15, 1
    %p303 = por %p301, %p302
    %p304 = scmp.ne.s32.totalorder %s296, %s299
    %p305 = scmp.eq.s32.totalorder %s15, 0
    %p306 = por %p304, %p305
    %p307 = scmp.ne.s32.totalorder %s296, %s299
    %p308 = scmp.eq.s32.totalorder %s20, 1
    %p309 = por %p307, %p308
    %p310 = scmp.ne.s32.totalorder %s299, %s300
    %p311 = scmp.eq.s32.totalorder %s20, 0
    %p312 = por %p310, %p311
    %p313 = scmp.ne.s32.totalorder %s299, %s300
    %p314 = scmp.eq.s32.totalorder %s21, 1
    %p315 = por %p313, %p314
    %p317 = scmp.ne.s32.totalorder %s300, %s316
    %p318 = scmp.eq.s32.totalorder %s21, 0
    %p319 = por %p317, %p318
    %s320 = ssub.s32 %s22, %s41
    %s321 = ssub.s32 %s23, %s37
    %s322 = sor.u32 %s320, %s321
    %s323 = ssub.s32 %s24, %s33
    %s324 = sor.u32 %s322, %s323
    %p325 = scmp.eq.s32.totalorder %s324, 0
    %s327 = sadd.s32 %s326, 1
    %s328 = scalar_select %p325, %s326, %s327
    %p331 = pneg %p325
    %p332 = scmp.eq.s32.totalorder %s15, 1
    %p333 = por %p331, %p332
    %p334 = scmp.ne.s32.totalorder %s326, %s329
    %p335 = scmp.eq.s32.totalorder %s15, 0
    %p336 = por %p334, %p335
    %p337 = scmp.ne.s32.totalorder %s326, %s329
    %p338 = scmp.eq.s32.totalorder %s20, 1
    %p339 = por %p337, %p338
    %p340 = scmp.ne.s32.totalorder %s329, %s330
    %p341 = scmp.eq.s32.totalorder %s20, 0
    %p342 = por %p340, %p341
    %p343 = scmp.ne.s32.totalorder %s329, %s330
    %p344 = scmp.eq.s32.totalorder %s21, 1
    %p345 = por %p343, %p344
    %p347 = scmp.ne.s32.totalorder %s330, %s346
    %p348 = scmp.eq.s32.totalorder %s21, 0
    %p349 = por %p347, %p348
    %p350 = scmp.le.s32.totalorder 1, %s15
    %p351 = scmp.lt.s32.totalorder %s15, 3
    %p352 = pnand %p350, %p351
    %p353 = pneg %p352
    // Predicated region
    $region9: #{up_corrected_forward.2} parent=5 // pred_check
      _
    $region10: #{up_corrected_forward.2} parent=5 // pred_check_branch
      %355 = sbr.rel (%p352) target = $region12
    $region11: #{up_corrected_forward.2} parent=5 // pred_region
      %s356 = ssub.s32 %s15, 1
      // Predicated region
      $region13: #{up_corrected_forward.2} parent=11 // pred_check
        %p357 = pneg %p260
      $region14: #{up_corrected_forward.2} parent=11 // pred_check_branch
        %359 = sbr.rel (%p357) target = $region16
      $region15: #{up_corrected_forward.2} parent=11 // pred_region
        %p360 = scmp.lt.s32.totalorder %s27, 0
        %s361 = scalar_select %p360, %s27, 0
        %s362 = smul.addr %s361, 4
        %s363 = scalar_lea.vmem %s6, %s362
      $region16: #{up_corrected_forward.2} parent=11 // pred_fallthru
        _
      // Predicated region
      $region17: #{up_corrected_forward.2} parent=11 // pred_check
        %p364 = pneg %p286
      $region18: #{up_corrected_forward.2} parent=11 // pred_check_branch
        %366 = sbr.rel (%p364) target = $region20
      $region19: #{up_corrected_forward.2} parent=11 // pred_region
        %p367 = scmp.lt.s32.totalorder %s27, 0
        %s368 = scalar_select %p367, %s27, 0
        %s369 = smul.addr %s368, 4
        %s370 = scalar_lea.vmem %s7, %s369
      $region20: #{up_corrected_forward.2} parent=11 // pred_fallthru
        _
      // Predicated region
      $region21: #{up_corrected_forward.2} parent=11 // pred_check
        %p371 = pneg %p312
      $region22: #{up_corrected_forward.2} parent=11 // pred_check_branch
        %373 = sbr.rel (%p371) target = $region24
      $region23: #{up_corrected_forward.2} parent=11 // pred_region
        %p374 = scmp.lt.s32.totalorder %s27, 0
        %s375 = scalar_select %p374, %s27, 0
        %s376 = scalar_lea.vmem %s8, %s375
      $region24: #{up_corrected_forward.2} parent=11 // pred_fallthru
        _
    $region12: #{up_corrected_forward.2} parent=5 // pred_fallthru
      _
    %p377 = scmp.lt.s32.totalorder %s15, 2
    // Predicated region
    $region25: #{up_corrected_forward.2} parent=5 // pred_check
      %p378 = pneg %p377
    $region26: #{up_corrected_forward.2} parent=5 // pred_check_branch
      %380 = sbr.rel (%p378) target = $region28
    $region27: #{up_corrected_forward.2} parent=5 // pred_region
      // Predicated region
      $region29: #{up_corrected_forward.2} parent=27 // pred_check
        %p381 = pneg %p64
      $region30: #{up_corrected_forward.2} parent=27 // pred_check_branch
        %383 = sbr.rel (%p381) target = $region32
      $region31: #{up_corrected_forward.2} parent=27 // pred_region
        %s384 = smul.u32 %s23, 16
        %s385 = ssub.s32 %s384, 1
        %p386 = scmp.gt.s32.totalorder %s385, 0
        %s387 = scalar_select %p386, %s385, 0
        %p388 = scmp.lt.s32.totalorder %s22, 1
        %s389 = scalar_select %p388, %s22, 1
        %p390 = scmp.lt.s32.totalorder %s387, 15
        %s391 = scalar_select %p390, %s387, 15
        %s392 = smul.addr %s391, 2
        %s393 = smul.addr %s389, 32
        %s394 = sadd.s32 %s392, %s393
        %s395 = smul.addr %s394, 4
        %s396 = scalar_lea.vmem %s0, %s395
        %s397 = smul.u32 %s23, 16
        %s398 = ssub.s32 %s397, 1
        %p399 = scmp.gt.s32.totalorder %s398, 0
        %s400 = scalar_select %p399, %s398, 0
      $region32: #{up_corrected_forward.2} parent=27 // pred_fallthru
        _
      // Predicated region
      $region33: #{up_corrected_forward.2} parent=27 // pred_check
        %p401 = pneg %p92
      $region34: #{up_corrected_forward.2} parent=27 // pred_check_branch
        %403 = sbr.rel (%p401) target = $region36
      $region35: #{up_corrected_forward.2} parent=27 // pred_region
        %s404 = smul.u32 16, %s23
        %p405 = scmp.lt.s32.totalorder %s22, 1
        %s406 = scalar_select %p405, %s22, 1
        %p407 = scmp.lt.s32.totalorder %s404, 15
        %s408 = scalar_select %p407, %s404, 15
        %s409 = smul.addr %s408, 2
        %s410 = smul.addr %s406, 32
        %s411 = sadd.s32 %s409, %s410
        %s412 = smul.addr %s411, 4
        %s413 = scalar_lea.vmem %s1, %s412
        %s414 = smul.u32 16, %s23
      $region36: #{up_corrected_forward.2} parent=27 // pred_fallthru
        _
      // Predicated region
      $region37: #{up_corrected_forward.2} parent=27 // pred_check
        %p415 = pneg %p128
      $region38: #{up_corrected_forward.2} parent=27 // pred_check_branch
        %417 = sbr.rel (%p415) target = $region40
      $region39: #{up_corrected_forward.2} parent=27 // pred_region
        %s418 = sadd.s32 %s23, 1
        %s419 = smul.u32 %s418, 16
        %p420 = scmp.lt.s32.totalorder %s419, 15
        %s421 = scalar_select %p420, %s419, 15
        %p422 = scmp.lt.s32.totalorder %s22, 1
        %s423 = scalar_select %p422, %s22, 1
        %p424 = scmp.lt.s32.totalorder %s421, 15
        %s425 = scalar_select %p424, %s421, 15
        %s426 = smul.addr %s425, 2
        %s427 = smul.addr %s423, 32
        %s428 = sadd.s32 %s426, %s427
        %s429 = smul.addr %s428, 4
        %s430 = scalar_lea.vmem %s2, %s429
        %s431 = sadd.s32 %s23, 1
        %s432 = smul.u32 %s431, 16
        %p433 = scmp.lt.s32.totalorder %s432, 15
        %s434 = scalar_select %p433, %s432, 15
      $region40: #{up_corrected_forward.2} parent=27 // pred_fallthru
        _
      // Predicated region
      $region41: #{up_corrected_forward.2} parent=27 // pred_check
        %p435 = pneg %p164
      $region42: #{up_corrected_forward.2} parent=27 // pred_check_branch
        %437 = sbr.rel (%p435) target = $region44
      $region43: #{up_corrected_forward.2} parent=27 // pred_region
        %s438 = smul.u32 %s23, 16
        %s439 = ssub.s32 %s438, 1
        %p440 = scmp.gt.s32.totalorder %s439, 0
        %s441 = scalar_select %p440, %s439, 0
        %p442 = scmp.lt.s32.totalorder %s22, 1
        %s443 = scalar_select %p442, %s22, 1
        %p444 = scmp.lt.s32.totalorder %s441, 15
        %s445 = scalar_select %p444, %s441, 15
        %s446 = smul.addr %s445, 2
        %s447 = smul.addr %s443, 32
        %s448 = sadd.s32 %s446, %s447
        %s449 = smul.addr %s448, 4
        %s450 = scalar_lea.vmem %s3, %s449
        %s451 = smul.u32 %s23, 16
        %s452 = ssub.s32 %s451, 1
        %p453 = scmp.gt.s32.totalorder %s452, 0
        %s454 = scalar_select %p453, %s452, 0
      $region44: #{up_corrected_forward.2} parent=27 // pred_fallthru
        _
      // Predicated region
      $region45: #{up_corrected_forward.2} parent=27 // pred_check
        %p455 = pneg %p192
      $region46: #{up_corrected_forward.2} parent=27 // pred_check_branch
        %457 = sbr.rel (%p455) target = $region48
      $region47: #{up_corrected_forward.2} parent=27 // pred_region
        %s458 = smul.u32 16, %s23
        %p459 = scmp.lt.s32.totalorder %s22, 1
        %s460 = scalar_select %p459, %s22, 1
        %p461 = scmp.lt.s32.totalorder %s458, 15
        %s462 = scalar_select %p461, %s458, 15
        %s463 = smul.addr %s462, 2
        %s464 = smul.addr %s460, 32
        %s465 = sadd.s32 %s463, %s464
        %s466 = smul.addr %s465, 4
        %s467 = scalar_lea.vmem %s4, %s466
        %s468 = smul.u32 16, %s23
      $region48: #{up_corrected_forward.2} parent=27 // pred_fallthru
        _
      // Predicated region
      $region49: #{up_corrected_forward.2} parent=27 // pred_check
        %p469 = pneg %p228
      $region50: #{up_corrected_forward.2} parent=27 // pred_check_branch
        %471 = sbr.rel (%p469) target = $region52
      $region51: #{up_corrected_forward.2} parent=27 // pred_region
        %s472 = sadd.s32 %s23, 1
        %s473 = smul.u32 %s472, 16
        %p474 = scmp.lt.s32.totalorder %s473, 15
        %s475 = scalar_select %p474, %s473, 15
        %p476 = scmp.lt.s32.totalorder %s22, 1
        %s477 = scalar_select %p476, %s22, 1
        %p478 = scmp.lt.s32.totalorder %s475, 15
        %s479 = scalar_select %p478, %s475, 15
        %s480 = smul.addr %s479, 2
        %s481 = smul.addr %s477, 32
        %s482 = sadd.s32 %s480, %s481
        %s483 = smul.addr %s482, 4
        %s484 = scalar_lea.vmem %s5, %s483
        %s485 = sadd.s32 %s23, 1
        %s486 = smul.u32 %s485, 16
        %p487 = scmp.lt.s32.totalorder %s486, 15
        %s488 = scalar_select %p487, %s486, 15
      $region52: #{up_corrected_forward.2} parent=27 // pred_fallthru
        _
    $region28: #{up_corrected_forward.2} parent=5 // pred_fallthru
      _
    %p489 = scmp.le.s32.totalorder 1, %s15
    %p490 = scmp.lt.s32.totalorder %s15, 3
    %p491 = pnand %p489, %p490
    %p492 = pneg %p491
    // Predicated region
    $region53: #{up_corrected_forward.2} parent=5 // pred_check
      _
    $region54: #{up_corrected_forward.2} parent=5 // pred_check_branch
      %494 = sbr.rel (%p491) target = $region56
    $region55: #{up_corrected_forward.2} parent=5 // pred_region
      %s495 = ssub.s32 %s15, 1
      %s496 = smul.u32 %s26, 16
      %s497 = ssub.s32 %s496, 1
      %p498 = scmp.gt.s32.totalorder %s497, 0
      %s499 = scalar_select %p498, %s497, 0
      %p500 = scmp.lt.s32.totalorder %s25, 1
      %s501 = scalar_select %p500, %s25, 1
      %p502 = scmp.lt.s32.totalorder %s499, 15
      %s503 = scalar_select %p502, %s499, 15
      %s504 = smul.addr %s503, 2
      %s505 = smul.addr %s501, 32
      %s506 = sadd.s32 %s504, %s505
      %s507 = smul.addr %s506, 4
      %s508 = scalar_lea.vmem %s0, %s507
      %p509 = pneg %p70
      %p510 = pneg %p67
      %s511 = smul.u32 16, %s26
      %p512 = scmp.lt.s32.totalorder %s25, 1
      %s513 = scalar_select %p512, %s25, 1
      %p514 = scmp.lt.s32.totalorder %s511, 15
      %s515 = scalar_select %p514, %s511, 15
      %s516 = smul.addr %s515, 2
      %s517 = smul.addr %s513, 32
      %s518 = sadd.s32 %s516, %s517
      %s519 = smul.addr %s518, 4
      %s520 = scalar_lea.vmem %s1, %s519
      %p521 = pneg %p98
      %p522 = pneg %p95
      %s523 = sadd.s32 %s26, 1
      %s524 = smul.u32 %s523, 16
      %p525 = scmp.lt.s32.totalorder %s524, 15
      %s526 = scalar_select %p525, %s524, 15
      %p527 = scmp.lt.s32.totalorder %s25, 1
      %s528 = scalar_select %p527, %s25, 1
      %p529 = scmp.lt.s32.totalorder %s526, 15
      %s530 = scalar_select %p529, %s526, 15
      %s531 = smul.addr %s530, 2
      %s532 = smul.addr %s528, 32
      %s533 = sadd.s32 %s531, %s532
      %s534 = smul.addr %s533, 4
      %s535 = scalar_lea.vmem %s2, %s534
      %p536 = pneg %p134
      %p537 = pneg %p131
      %s538 = smul.u32 %s26, 16
      %s539 = ssub.s32 %s538, 1
      %p540 = scmp.gt.s32.totalorder %s539, 0
      %s541 = scalar_select %p540, %s539, 0
      %p542 = scmp.lt.s32.totalorder %s25, 1
      %s543 = scalar_select %p542, %s25, 1
      %p544 = scmp.lt.s32.totalorder %s541, 15
      %s545 = scalar_select %p544, %s541, 15
      %s546 = smul.addr %s545, 2
      %s547 = smul.addr %s543, 32
      %s548 = sadd.s32 %s546, %s547
      %s549 = smul.addr %s548, 4
      %s550 = scalar_lea.vmem %s3, %s549
      %p551 = pneg %p170
      %p552 = pneg %p167
      %s553 = smul.u32 16, %s26
      %p554 = scmp.lt.s32.totalorder %s25, 1
      %s555 = scalar_select %p554, %s25, 1
      %p556 = scmp.lt.s32.totalorder %s553, 15
      %s557 = scalar_select %p556, %s553, 15
      %s558 = smul.addr %s557, 2
      %s559 = smul.addr %s555, 32
      %s560 = sadd.s32 %s558, %s559
      %s561 = smul.addr %s560, 4
      %s562 = scalar_lea.vmem %s4, %s561
      %p563 = pneg %p198
      %p564 = pneg %p195
      %s565 = sadd.s32 %s26, 1
      %s566 = smul.u32 %s565, 16
      %p567 = scmp.lt.s32.totalorder %s566, 15
      %s568 = scalar_select %p567, %s566, 15
      %p569 = scmp.lt.s32.totalorder %s25, 1
      %s570 = scalar_select %p569, %s25, 1
      %p571 = scmp.lt.s32.totalorder %s568, 15
      %s572 = scalar_select %p571, %s568, 15
      %s573 = smul.addr %s572, 2
      %s574 = smul.addr %s570, 32
      %s575 = sadd.s32 %s573, %s574
      %s576 = smul.addr %s575, 4
      %s577 = scalar_lea.vmem %s5, %s576
      %p578 = pneg %p234
      %p579 = pneg %p231
      %p580 = scmp.lt.s32.totalorder %s27, 0
      %s581 = scalar_select %p580, %s27, 0
      %s582 = smul.addr %s581, 4
      %s583 = scalar_lea.vmem %s6, %s582
      %p584 = pneg %p260
      %p585 = pneg %p257
      %p586 = scmp.lt.s32.totalorder %s27, 0
      %s587 = scalar_select %p586, %s27, 0
      %s588 = smul.addr %s587, 4
      %s589 = scalar_lea.vmem %s7, %s588
      %p590 = pneg %p286
      %p591 = pneg %p283
      %p592 = scmp.lt.s32.totalorder %s27, 0
      %s593 = scalar_select %p592, %s27, 0
      %s594 = scalar_lea.vmem %s8, %s593
      %p595 = pneg %p312
      %p596 = pneg %p309
      %p597 = pneg %p342
      %p598 = pneg %p339
      %s599 = smul.u32 16, %s26
      %p600 = scmp.lt.s32.totalorder %s25, 1
      %s601 = scalar_select %p600, %s25, 1
      %p602 = scmp.lt.s32.totalorder %s599, 15
      %s603 = scalar_select %p602, %s599, 15
      %p604 = scmp.lt.s32.totalorder %s27, 0
      %s605 = scalar_select %p604, %s27, 0
      %s606 = smul.addr %s603, 2
      %s607 = sadd.s32 %s605, %s606
      %s608 = smul.addr %s601, 32
      %s609 = sadd.s32 %s607, %s608
      %s610 = smul.addr %s609, 4
      %s611 = scalar_lea.vmem %s9, %s610
      %s612 = smul.u32 %s26, 16
      %s613 = ssub.s32 %s612, 1
      %p614 = scmp.gt.s32.totalorder %s613, 0
      %s615 = scalar_select %p614, %s613, 0
      %p616 = scmp.lt.s32.totalorder %s25, 1
      %s617 = scalar_select %p616, %s25, 1
      %p618 = scmp.lt.s32.totalorder %s615, 15
      %s619 = scalar_select %p618, %s615, 15
      %s620 = smul.addr %s619, 2
      %s621 = smul.addr %s617, 32
      %s622 = sadd.s32 %s620, %s621
      %s623 = smul.addr %s622, 4
      %s624 = scalar_lea.vmem %s0, %s623
      %s625 = smul.u32 %s26, 16
      %s626 = ssub.s32 %s625, 1
      %p627 = scmp.gt.s32.totalorder %s626, 0
      %s628 = scalar_select %p627, %s626, 0
      %s629 = smul.u32 16, %s26
      %p630 = scmp.lt.s32.totalorder %s25, 1
      %s631 = scalar_select %p630, %s25, 1
      %p632 = scmp.lt.s32.totalorder %s629, 15
      %s633 = scalar_select %p632, %s629, 15
      %s634 = smul.addr %s633, 2
      %s635 = smul.addr %s631, 32
      %s636 = sadd.s32 %s634, %s635
      %s637 = smul.addr %s636, 4
      %s638 = scalar_lea.vmem %s1, %s637
      %s639 = smul.u32 16, %s26
      %s640 = sadd.s32 %s26, 1
      %s641 = smul.u32 %s640, 16
      %p642 = scmp.lt.s32.totalorder %s641, 15
      %s643 = scalar_select %p642, %s641, 15
      %p644 = scmp.lt.s32.totalorder %s25, 1
      %s645 = scalar_select %p644, %s25, 1
      %p646 = scmp.lt.s32.totalorder %s643, 15
      %s647 = scalar_select %p646, %s643, 15
      %s648 = smul.addr %s647, 2
      %s649 = smul.addr %s645, 32
      %s650 = sadd.s32 %s648, %s649
      %s651 = smul.addr %s650, 4
      %s652 = scalar_lea.vmem %s2, %s651
      %s653 = sadd.s32 %s26, 1
      %s654 = smul.u32 %s653, 16
      %p655 = scmp.lt.s32.totalorder %s654, 15
      %s656 = scalar_select %p655, %s654, 15
      %s657 = smul.u32 %s26, 16
      %s658 = ssub.s32 %s657, 1
      %p659 = scmp.gt.s32.totalorder %s658, 0
      %s660 = scalar_select %p659, %s658, 0
      %p661 = scmp.lt.s32.totalorder %s25, 1
      %s662 = scalar_select %p661, %s25, 1
      %p663 = scmp.lt.s32.totalorder %s660, 15
      %s664 = scalar_select %p663, %s660, 15
      %s665 = smul.addr %s664, 2
      %s666 = smul.addr %s662, 32
      %s667 = sadd.s32 %s665, %s666
      %s668 = smul.addr %s667, 4
      %s669 = scalar_lea.vmem %s3, %s668
      %s670 = smul.u32 %s26, 16
      %s671 = ssub.s32 %s670, 1
      %p672 = scmp.gt.s32.totalorder %s671, 0
      %s673 = scalar_select %p672, %s671, 0
      %s674 = smul.u32 16, %s26
      %p675 = scmp.lt.s32.totalorder %s25, 1
      %s676 = scalar_select %p675, %s25, 1
      %p677 = scmp.lt.s32.totalorder %s674, 15
      %s678 = scalar_select %p677, %s674, 15
      %s679 = smul.addr %s678, 2
      %s680 = smul.addr %s676, 32
      %s681 = sadd.s32 %s679, %s680
      %s682 = smul.addr %s681, 4
      %s683 = scalar_lea.vmem %s4, %s682
      %s684 = smul.u32 16, %s26
      %s685 = sadd.s32 %s26, 1
      %s686 = smul.u32 %s685, 16
      %p687 = scmp.lt.s32.totalorder %s686, 15
      %s688 = scalar_select %p687, %s686, 15
      %p689 = scmp.lt.s32.totalorder %s25, 1
      %s690 = scalar_select %p689, %s25, 1
      %p691 = scmp.lt.s32.totalorder %s688, 15
      %s692 = scalar_select %p691, %s688, 15
      %s693 = smul.addr %s692, 2
      %s694 = smul.addr %s690, 32
      %s695 = sadd.s32 %s693, %s694
      %s696 = smul.addr %s695, 4
      %s697 = scalar_lea.vmem %s5, %s696
      %s698 = sadd.s32 %s26, 1
      %s699 = smul.u32 %s698, 16
      %p700 = scmp.lt.s32.totalorder %s699, 15
      %s701 = scalar_select %p700, %s699, 15
      %p702 = scmp.lt.s32.totalorder %s27, 0
      %s703 = scalar_select %p702, %s27, 0
      %s704 = smul.addr %s703, 4
      %s705 = scalar_lea.vmem %s6, %s704
      %p706 = scmp.lt.s32.totalorder %s27, 0
      %s707 = scalar_select %p706, %s27, 0
      %s708 = smul.addr %s707, 4
      %s709 = scalar_lea.vmem %s7, %s708
      %p710 = scmp.lt.s32.totalorder %s27, 0
      %s711 = scalar_select %p710, %s27, 0
      %s712 = scalar_lea.vmem %s8, %s711
      %s713 = smul.u32 16, %s26
      %p714 = scmp.lt.s32.totalorder %s25, 1
      %s715 = scalar_select %p714, %s25, 1
      %p716 = scmp.lt.s32.totalorder %s713, 15
      %s717 = scalar_select %p716, %s713, 15
      %p718 = scmp.lt.s32.totalorder %s27, 0
      %s719 = scalar_select %p718, %s27, 0
      %s720 = smul.addr %s717, 2
      %s721 = sadd.s32 %s719, %s720
      %s722 = smul.addr %s715, 32
      %s723 = sadd.s32 %s721, %s722
      %s724 = smul.addr %s723, 4
      %s725 = scalar_lea.vmem %s9, %s724
      %s726 = smul.u32 16, %s26
      %s728 = smul.u32 %s26, 16
      %s729 = ssub.s32 %s728, 1
      %v730 = vstv %s729
      %v731 = vadd.s32 %v730, 1
      %v732 = vadd.s32 %v730, 2
      %v733 = vadd.s32 %v730, 3
      %v734 = vadd.s32 %v730, 4
      %v735 = vadd.s32 %v730, 5
      %v736 = vadd.s32 %v730, 6
      %v737 = vadd.s32 %v730, 7
      %v738 = vadd.s32 %v730, 8
      %v739 = vadd.s32 %v730, 9
      %v740 = vadd.s32 %v730, 10
      %v741 = vadd.s32 %v730, 11
      %v742 = vadd.s32 %v730, 12
      %v743 = vadd.s32 %v730, 13
      %v744 = vadd.s32 %v730, 14
      %v745 = vadd.s32 %v730, 15
      %v746 = vadd.s32 %v730, 16
      %v747 = vadd.s32 %v730, 17
      %vm748 = vcmp.ge.s32.totalorder %v730, 0
      %vm749 = vcmp.ge.s32.totalorder %v731, 0
      %vm750 = vcmp.ge.s32.totalorder %v732, 0
      %vm751 = vcmp.ge.s32.totalorder %v733, 0
      %vm752 = vcmp.ge.s32.totalorder %v734, 0
      %vm753 = vcmp.ge.s32.totalorder %v735, 0
      %vm754 = vcmp.ge.s32.totalorder %v736, 0
      %vm755 = vcmp.ge.s32.totalorder %v737, 0
      %vm756 = vcmp.ge.s32.totalorder %v738, 0
      %vm757 = vcmp.ge.s32.totalorder %v739, 0
      %vm758 = vcmp.ge.s32.totalorder %v740, 0
      %vm759 = vcmp.ge.s32.totalorder %v741, 0
      %vm760 = vcmp.ge.s32.totalorder %v742, 0
      %vm761 = vcmp.ge.s32.totalorder %v743, 0
      %vm762 = vcmp.ge.s32.totalorder %v744, 0
      %vm763 = vcmp.ge.s32.totalorder %v745, 0
      %vm764 = vcmp.ge.s32.totalorder %v746, 0
      %vm765 = vcmp.ge.s32.totalorder %v747, 0
      %vm766 = vcmp.lt.s32.totalorder %v730, 16
      %vm767 = vcmp.lt.s32.totalorder %v731, 16
      %vm768 = vcmp.lt.s32.totalorder %v732, 16
      %vm769 = vcmp.lt.s32.totalorder %v733, 16
      %vm770 = vcmp.lt.s32.totalorder %v734, 16
      %vm771 = vcmp.lt.s32.totalorder %v735, 16
      %vm772 = vcmp.lt.s32.totalorder %v736, 16
      %vm773 = vcmp.lt.s32.totalorder %v737, 16
      %vm774 = vcmp.lt.s32.totalorder %v738, 16
      %vm775 = vcmp.lt.s32.totalorder %v739, 16
      %vm776 = vcmp.lt.s32.totalorder %v740, 16
      %vm777 = vcmp.lt.s32.totalorder %v741, 16
      %vm778 = vcmp.lt.s32.totalorder %v742, 16
      %vm779 = vcmp.lt.s32.totalorder %v743, 16
      %vm780 = vcmp.lt.s32.totalorder %v744, 16
      %vm781 = vcmp.lt.s32.totalorder %v745, 16
      %vm782 = vcmp.lt.s32.totalorder %v746, 16
      %vm783 = vcmp.lt.s32.totalorder %v747, 16
      %vm784 = vmand %vm748, %vm766
      %vm785 = vmand %vm749, %vm767
      %vm786 = vmand %vm750, %vm768
      %vm787 = vmand %vm751, %vm769
      %vm788 = vmand %vm752, %vm770
      %vm789 = vmand %vm753, %vm771
      %vm790 = vmand %vm754, %vm772
      %vm791 = vmand %vm755, %vm773
      %vm792 = vmand %vm756, %vm774
      %vm793 = vmand %vm757, %vm775
      %vm794 = vmand %vm758, %vm776
      %vm795 = vmand %vm759, %vm777
      %vm796 = vmand %vm760, %vm778
      %vm797 = vmand %vm761, %vm779
      %vm798 = vmand %vm762, %vm780
      %vm799 = vmand %vm763, %vm781
      %vm800 = vmand %vm764, %vm782
      %vm801 = vmand %vm765, %vm783
      %v802 = vld [vmem:[%s624] sm:$0xf]
      %v803 = vld [vmem:[%s624 + $0x4] sm:$0xf]
      %v804 = vld [vmem:[%s638] sm:$0xf]
      %v805 = vld [vmem:[%s638 + $0x4] sm:$0xf]
      %v806 = vld [vmem:[%s638 + $0x8] sm:$0xf]
      %v807 = vld [vmem:[%s638 + $0xc] sm:$0xf]
      %v808 = vld [vmem:[%s638 + $0x10] sm:$0xf]
      %v809 = vld [vmem:[%s638 + $0x14] sm:$0xf]
      %v810 = vld [vmem:[%s638 + $0x18] sm:$0xf]
      %v811 = vld [vmem:[%s638 + $0x1c] sm:$0xf]
      %v812 = vld [vmem:[%s638 + $0x20] sm:$0xf]
      %v813 = vld [vmem:[%s638 + $0x24] sm:$0xf]
      %v814 = vld [vmem:[%s638 + $0x28] sm:$0xf]
      %v815 = vld [vmem:[%s638 + $0x2c] sm:$0xf]
      %v816 = vld [vmem:[%s638 + $0x30] sm:$0xf]
      %v817 = vld [vmem:[%s638 + $0x34] sm:$0xf]
      %v818 = vld [vmem:[%s638 + $0x38] sm:$0xf]
      %v819 = vld [vmem:[%s638 + $0x3c] sm:$0xf]
      %v820 = vld [vmem:[%s638 + $0x40] sm:$0xf]
      %v821 = vld [vmem:[%s638 + $0x44] sm:$0xf]
      %v822 = vld [vmem:[%s638 + $0x48] sm:$0xf]
      %v823 = vld [vmem:[%s638 + $0x4c] sm:$0xf]
      %v824 = vld [vmem:[%s638 + $0x50] sm:$0xf]
      %v825 = vld [vmem:[%s638 + $0x54] sm:$0xf]
      %v826 = vld [vmem:[%s638 + $0x58] sm:$0xf]
      %v827 = vld [vmem:[%s638 + $0x5c] sm:$0xf]
      %v828 = vld [vmem:[%s638 + $0x60] sm:$0xf]
      %v829 = vld [vmem:[%s638 + $0x64] sm:$0xf]
      %v830 = vld [vmem:[%s638 + $0x68] sm:$0xf]
      %v831 = vld [vmem:[%s638 + $0x6c] sm:$0xf]
      %v832 = vld [vmem:[%s638 + $0x70] sm:$0xf]
      %v833 = vld [vmem:[%s638 + $0x74] sm:$0xf]
      %v834 = vld [vmem:[%s638 + $0x78] sm:$0xf]
      %v835 = vld [vmem:[%s638 + $0x7c] sm:$0xf]
      %v836 = vld [vmem:[%s652] sm:$0xf]
      %v837 = vld [vmem:[%s652 + $0x4] sm:$0xf]
      %v838 = vsel %vm784, 1, 0
      %v839 = vsel %vm785, 1, 0
      %v840 = vsel %vm786, 1, 0
      %v841 = vsel %vm787, 1, 0
      %v842 = vsel %vm788, 1, 0
      %v843 = vsel %vm789, 1, 0
      %v844 = vsel %vm790, 1, 0
      %v845 = vsel %vm791, 1, 0
      %v846 = vsel %vm792, 1, 0
      %v847 = vsel %vm793, 1, 0
      %v848 = vsel %vm794, 1, 0
      %v849 = vsel %vm795, 1, 0
      %v850 = vsel %vm796, 1, 0
      %v851 = vsel %vm797, 1, 0
      %v852 = vsel %vm798, 1, 0
      %v853 = vsel %vm799, 1, 0
      %v854 = vsel %vm800, 1, 0
      %v855 = vsel %vm801, 1, 0
      %vm856 = vcmp.eq.s32.totalorder %v838, 1
      %vm857 = vcmp.eq.s32.totalorder %v839, 1
      %vm858 = vcmp.eq.s32.totalorder %v840, 1
      %vm859 = vcmp.eq.s32.totalorder %v841, 1
      %vm860 = vcmp.eq.s32.totalorder %v842, 1
      %vm861 = vcmp.eq.s32.totalorder %v843, 1
      %vm862 = vcmp.eq.s32.totalorder %v844, 1
      %vm863 = vcmp.eq.s32.totalorder %v845, 1
      %vm864 = vcmp.eq.s32.totalorder %v846, 1
      %vm865 = vcmp.eq.s32.totalorder %v847, 1
      %vm866 = vcmp.eq.s32.totalorder %v848, 1
      %vm867 = vcmp.eq.s32.totalorder %v849, 1
      %vm868 = vcmp.eq.s32.totalorder %v850, 1
      %vm869 = vcmp.eq.s32.totalorder %v851, 1
      %vm870 = vcmp.eq.s32.totalorder %v852, 1
      %vm871 = vcmp.eq.s32.totalorder %v853, 1
      %vm872 = vcmp.eq.s32.totalorder %v854, 1
      %vm873 = vcmp.eq.s32.totalorder %v855, 1
      %v874 = vsel %vm856, %v802, 0
      %v875 = vsel %vm856, %v803, 0
      %v876 = vsel %vm857, %v804, 0
      %v877 = vsel %vm857, %v805, 0
      %v878 = vsel %vm858, %v806, 0
      %v879 = vsel %vm858, %v807, 0
      %v880 = vsel %vm859, %v808, 0
      %v881 = vsel %vm859, %v809, 0
      %v882 = vsel %vm860, %v810, 0
      %v883 = vsel %vm860, %v811, 0
      %v884 = vsel %vm861, %v812, 0
      %v885 = vsel %vm861, %v813, 0
      %v886 = vsel %vm862, %v814, 0
      %v887 = vsel %vm862, %v815, 0
      %v888 = vsel %vm863, %v816, 0
      %v889 = vsel %vm863, %v817, 0
      %v890 = vsel %vm864, %v818, 0
      %v891 = vsel %vm864, %v819, 0
      %v892 = vsel %vm865, %v820, 0
      %v893 = vsel %vm865, %v821, 0
      %v894 = vsel %vm866, %v822, 0
      %v895 = vsel %vm866, %v823, 0
      %v896 = vsel %vm867, %v824, 0
      %v897 = vsel %vm867, %v825, 0
      %v898 = vsel %vm868, %v826, 0
      %v899 = vsel %vm868, %v827, 0
      %v900 = vsel %vm869, %v828, 0
      %v901 = vsel %vm869, %v829, 0
      %v902 = vsel %vm870, %v830, 0
      %v903 = vsel %vm870, %v831, 0
      %v904 = vsel %vm871, %v832, 0
      %v905 = vsel %vm871, %v833, 0
      %v906 = vsel %vm872, %v834, 0
      %v907 = vsel %vm872, %v835, 0
      %v908 = vsel %vm873, %v836, 0
      %v909 = vsel %vm873, %v837, 0
      %v946 = vunpack.c.l.b16 %v874
      %v947 = vunpack.c.l.b16 %v875
      %v948 = vunpack.c.l.b16 %v876
      %v949 = vunpack.c.l.b16 %v877
      %v950 = vunpack.c.l.b16 %v878
      %v951 = vunpack.c.l.b16 %v879
      %v952 = vunpack.c.l.b16 %v880
      %v953 = vunpack.c.l.b16 %v881
      %v954 = vunpack.c.l.b16 %v882
      %v955 = vunpack.c.l.b16 %v883
      %v956 = vunpack.c.l.b16 %v884
      %v957 = vunpack.c.l.b16 %v885
      %v958 = vunpack.c.l.b16 %v886
      %v959 = vunpack.c.l.b16 %v887
      %v960 = vunpack.c.l.b16 %v888
      %v961 = vunpack.c.l.b16 %v889
      %v962 = vunpack.c.l.b16 %v890
      %v963 = vunpack.c.l.b16 %v891
      %v964 = vunpack.c.l.b16 %v892
      %v965 = vunpack.c.l.b16 %v893
      %v966 = vunpack.c.l.b16 %v894
      %v967 = vunpack.c.l.b16 %v895
      %v968 = vunpack.c.l.b16 %v896
      %v969 = vunpack.c.l.b16 %v897
      %v970 = vunpack.c.l.b16 %v898
      %v971 = vunpack.c.l.b16 %v899
      %v972 = vunpack.c.l.b16 %v900
      %v973 = vunpack.c.l.b16 %v901
      %v974 = vunpack.c.l.b16 %v902
      %v975 = vunpack.c.l.b16 %v903
      %v976 = vunpack.c.l.b16 %v904
      %v977 = vunpack.c.l.b16 %v905
      %v978 = vunpack.c.l.b16 %v906
      %v979 = vunpack.c.l.b16 %v907
      %v980 = vunpack.c.l.b16 %v908
      %v981 = vunpack.c.l.b16 %v909
      %v982 = vpack.c.b16 %v947, %v946
      %v983 = vpack.c.b16 %v949, %v948
      %v984 = vpack.c.b16 %v951, %v950
      %v985 = vpack.c.b16 %v953, %v952
      %v986 = vpack.c.b16 %v955, %v954
      %v987 = vpack.c.b16 %v957, %v956
      %v988 = vpack.c.b16 %v959, %v958
      %v989 = vpack.c.b16 %v961, %v960
      %v990 = vpack.c.b16 %v963, %v962
      %v991 = vpack.c.b16 %v965, %v964
      %v992 = vpack.c.b16 %v967, %v966
      %v993 = vpack.c.b16 %v969, %v968
      %v994 = vpack.c.b16 %v971, %v970
      %v995 = vpack.c.b16 %v973, %v972
      %v996 = vpack.c.b16 %v975, %v974
      %v997 = vpack.c.b16 %v977, %v976
      %v998 = vpack.c.b16 %v979, %v978
      %v999 = vpack.c.b16 %v981, %v980
      %v1001 = vshrl.u32 %v982, 16
      %v1003 = vrot.slane %v1001, 7
      %v1004 = vshll.u32 %v982, 16
      %v1006 = vor.u32 %v1003, %v1004
      %v1008 = vshrl.u32 %v983, 16
      %v1010 = vrot.slane %v1008, 7
      %v1011 = vshll.u32 %v983, 16
      %v1013 = vor.u32 %v1010, %v1011
      %v1015 = vshrl.u32 %v984, 16
      %v1017 = vrot.slane %v1015, 7
      %v1018 = vshll.u32 %v984, 16
      %v1020 = vor.u32 %v1017, %v1018
      %v1022 = vshrl.u32 %v985, 16
      %v1024 = vrot.slane %v1022, 7
      %v1025 = vshll.u32 %v985, 16
      %v1027 = vor.u32 %v1024, %v1025
      %v1029 = vshrl.u32 %v986, 16
      %v1031 = vrot.slane %v1029, 7
      %v1032 = vshll.u32 %v986, 16
      %v1034 = vor.u32 %v1031, %v1032
      %v1036 = vshrl.u32 %v987, 16
      %v1038 = vrot.slane %v1036, 7
      %v1039 = vshll.u32 %v987, 16
      %v1041 = vor.u32 %v1038, %v1039
      %v1043 = vshrl.u32 %v988, 16
      %v1045 = vrot.slane %v1043, 7
      %v1046 = vshll.u32 %v988, 16
      %v1048 = vor.u32 %v1045, %v1046
      %v1050 = vshrl.u32 %v989, 16
      %v1052 = vrot.slane %v1050, 7
      %v1053 = vshll.u32 %v989, 16
      %v1055 = vor.u32 %v1052, %v1053
      %v1057 = vshrl.u32 %v990, 16
      %v1059 = vrot.slane %v1057, 7
      %v1060 = vshll.u32 %v990, 16
      %v1062 = vor.u32 %v1059, %v1060
      %v1064 = vshrl.u32 %v991, 16
      %v1066 = vrot.slane %v1064, 7
      %v1067 = vshll.u32 %v991, 16
      %v1069 = vor.u32 %v1066, %v1067
      %v1071 = vshrl.u32 %v992, 16
      %v1073 = vrot.slane %v1071, 7
      %v1074 = vshll.u32 %v992, 16
      %v1076 = vor.u32 %v1073, %v1074
      %v1078 = vshrl.u32 %v993, 16
      %v1080 = vrot.slane %v1078, 7
      %v1081 = vshll.u32 %v993, 16
      %v1083 = vor.u32 %v1080, %v1081
      %v1085 = vshrl.u32 %v994, 16
      %v1087 = vrot.slane %v1085, 7
      %v1088 = vshll.u32 %v994, 16
      %v1090 = vor.u32 %v1087, %v1088
      %v1092 = vshrl.u32 %v995, 16
      %v1094 = vrot.slane %v1092, 7
      %v1095 = vshll.u32 %v995, 16
      %v1097 = vor.u32 %v1094, %v1095
      %v1099 = vshrl.u32 %v996, 16
      %v1101 = vrot.slane %v1099, 7
      %v1102 = vshll.u32 %v996, 16
      %v1104 = vor.u32 %v1101, %v1102
      %v1106 = vshrl.u32 %v997, 16
      %v1108 = vrot.slane %v1106, 7
      %v1109 = vshll.u32 %v997, 16
      %v1111 = vor.u32 %v1108, %v1109
      %v1113 = vshrl.u32 %v998, 16
      %v1115 = vrot.slane %v1113, 7
      %v1116 = vshll.u32 %v998, 16
      %v1118 = vor.u32 %v1115, %v1116
      %v1120 = vshrl.u32 %v999, 16
      %v1122 = vrot.slane %v1120, 7
      %v1123 = vshll.u32 %v999, 16
      %v1125 = vor.u32 %v1122, %v1123
      %vm1162 = vcmask 1040384
      %vm1163 = vsmask.f32 256
      %vm1164 = vmand %vm1162, %vm1163
      %v1165 = vsel %vm1164, 0, %v1006
      %v1166 = vsel %vm1164, 0, %v1013
      %v1167 = vsel %vm1164, 0, %v1020
      %v1168 = vsel %vm1164, 0, %v1027
      %v1169 = vsel %vm1164, 0, %v1034
      %v1170 = vsel %vm1164, 0, %v1041
      %v1171 = vsel %vm1164, 0, %v1048
      %v1172 = vsel %vm1164, 0, %v1055
      %v1173 = vsel %vm1164, 0, %v1062
      %v1174 = vsel %vm1164, 0, %v1069
      %v1175 = vsel %vm1164, 0, %v1076
      %v1176 = vsel %vm1164, 0, %v1083
      %v1177 = vsel %vm1164, 0, %v1090
      %v1178 = vsel %vm1164, 0, %v1097
      %v1179 = vsel %vm1164, 0, %v1104
      %v1180 = vsel %vm1164, 0, %v1111
      %v1181 = vsel %vm1164, 0, %v1118
      %v1182 = vsel %vm1164, 0, %v1125
      %v1183 = vsel %vm1164, %v1003, 0
      %v1184 = vsel %vm1164, %v1010, 0
      %v1185 = vsel %vm1164, %v1017, 0
      %v1186 = vsel %vm1164, %v1024, 0
      %v1187 = vsel %vm1164, %v1031, 0
      %v1188 = vsel %vm1164, %v1038, 0
      %v1189 = vsel %vm1164, %v1045, 0
      %v1190 = vsel %vm1164, %v1052, 0
      %v1191 = vsel %vm1164, %v1059, 0
      %v1192 = vsel %vm1164, %v1066, 0
      %v1193 = vsel %vm1164, %v1073, 0
      %v1194 = vsel %vm1164, %v1080, 0
      %v1195 = vsel %vm1164, %v1087, 0
      %v1196 = vsel %vm1164, %v1094, 0
      %v1197 = vsel %vm1164, %v1101, 0
      %v1198 = vsel %vm1164, %v1108, 0
      %v1199 = vsel %vm1164, %v1115, 0
      %v1200 = vsel %vm1164, %v1122, 0
      %vm1201 = vsmask.f32 7424
      %v1203 = vshrl.u32 %v1165, 16
      %v1205 = vshll.u32 %v1165, 16
      %v1207 = vrot.slane %v1205, 1
      %v1208 = vor.u32 %v1203, %v1207
      %v1210 = vshll.u32 %v1183, 16
      %v1212 = vrot.slane %v1210, 1
      %v1213 = vsel %vm1201, %v1208, %v1212
      %v1215 = vshrl.u32 %v1166, 16
      %v1217 = vshll.u32 %v1166, 16
      %v1219 = vrot.slane %v1217, 1
      %v1220 = vor.u32 %v1215, %v1219
      %v1222 = vshll.u32 %v1184, 16
      %v1224 = vrot.slane %v1222, 1
      %v1225 = vsel %vm1201, %v1220, %v1224
      %v1227 = vshrl.u32 %v1167, 16
      %v1229 = vshll.u32 %v1167, 16
      %v1231 = vrot.slane %v1229, 1
      %v1232 = vor.u32 %v1227, %v1231
      %v1234 = vshll.u32 %v1185, 16
      %v1236 = vrot.slane %v1234, 1
      %v1237 = vsel %vm1201, %v1232, %v1236
      %v1239 = vshrl.u32 %v1168, 16
      %v1241 = vshll.u32 %v1168, 16
      %v1243 = vrot.slane %v1241, 1
      %v1244 = vor.u32 %v1239, %v1243
      %v1246 = vshll.u32 %v1186, 16
      %v1248 = vrot.slane %v1246, 1
      %v1249 = vsel %vm1201, %v1244, %v1248
      %v1251 = vshrl.u32 %v1169, 16
      %v1253 = vshll.u32 %v1169, 16
      %v1255 = vrot.slane %v1253, 1
      %v1256 = vor.u32 %v1251, %v1255
      %v1258 = vshll.u32 %v1187, 16
      %v1260 = vrot.slane %v1258, 1
      %v1261 = vsel %vm1201, %v1256, %v1260
      %v1263 = vshrl.u32 %v1170, 16
      %v1265 = vshll.u32 %v1170, 16
      %v1267 = vrot.slane %v1265, 1
      %v1268 = vor.u32 %v1263, %v1267
      %v1270 = vshll.u32 %v1188, 16
      %v1272 = vrot.slane %v1270, 1
      %v1273 = vsel %vm1201, %v1268, %v1272
      %v1275 = vshrl.u32 %v1171, 16
      %v1277 = vshll.u32 %v1171, 16
      %v1279 = vrot.slane %v1277, 1
      %v1280 = vor.u32 %v1275, %v1279
      %v1282 = vshll.u32 %v1189, 16
      %v1284 = vrot.slane %v1282, 1
      %v1285 = vsel %vm1201, %v1280, %v1284
      %v1287 = vshrl.u32 %v1172, 16
      %v1289 = vshll.u32 %v1172, 16
      %v1291 = vrot.slane %v1289, 1
      %v1292 = vor.u32 %v1287, %v1291
      %v1294 = vshll.u32 %v1190, 16
      %v1296 = vrot.slane %v1294, 1
      %v1297 = vsel %vm1201, %v1292, %v1296
      %v1299 = vshrl.u32 %v1173, 16
      %v1301 = vshll.u32 %v1173, 16
      %v1303 = vrot.slane %v1301, 1
      %v1304 = vor.u32 %v1299, %v1303
      %v1306 = vshll.u32 %v1191, 16
      %v1308 = vrot.slane %v1306, 1
      %v1309 = vsel %vm1201, %v1304, %v1308
      %v1311 = vshrl.u32 %v1174, 16
      %v1313 = vshll.u32 %v1174, 16
      %v1315 = vrot.slane %v1313, 1
      %v1316 = vor.u32 %v1311, %v1315
      %v1318 = vshll.u32 %v1192, 16
      %v1320 = vrot.slane %v1318, 1
      %v1321 = vsel %vm1201, %v1316, %v1320
      %v1323 = vshrl.u32 %v1175, 16
      %v1325 = vshll.u32 %v1175, 16
      %v1327 = vrot.slane %v1325, 1
      %v1328 = vor.u32 %v1323, %v1327
      %v1330 = vshll.u32 %v1193, 16
      %v1332 = vrot.slane %v1330, 1
      %v1333 = vsel %vm1201, %v1328, %v1332
      %v1335 = vshrl.u32 %v1176, 16
      %v1337 = vshll.u32 %v1176, 16
      %v1339 = vrot.slane %v1337, 1
      %v1340 = vor.u32 %v1335, %v1339
      %v1342 = vshll.u32 %v1194, 16
      %v1344 = vrot.slane %v1342, 1
      %v1345 = vsel %vm1201, %v1340, %v1344
      %v1347 = vshrl.u32 %v1177, 16
      %v1349 = vshll.u32 %v1177, 16
      %v1351 = vrot.slane %v1349, 1
      %v1352 = vor.u32 %v1347, %v1351
      %v1354 = vshll.u32 %v1195, 16
      %v1356 = vrot.slane %v1354, 1
      %v1357 = vsel %vm1201, %v1352, %v1356
      %v1359 = vshrl.u32 %v1178, 16
      %v1361 = vshll.u32 %v1178, 16
      %v1363 = vrot.slane %v1361, 1
      %v1364 = vor.u32 %v1359, %v1363
      %v1366 = vshll.u32 %v1196, 16
      %v1368 = vrot.slane %v1366, 1
      %v1369 = vsel %vm1201, %v1364, %v1368
      %v1371 = vshrl.u32 %v1179, 16
      %v1373 = vshll.u32 %v1179, 16
      %v1375 = vrot.slane %v1373, 1
      %v1376 = vor.u32 %v1371, %v1375
      %v1378 = vshll.u32 %v1197, 16
      %v1380 = vrot.slane %v1378, 1
      %v1381 = vsel %vm1201, %v1376, %v1380
      %v1383 = vshrl.u32 %v1180, 16
      %v1385 = vshll.u32 %v1180, 16
      %v1387 = vrot.slane %v1385, 1
      %v1388 = vor.u32 %v1383, %v1387
      %v1390 = vshll.u32 %v1198, 16
      %v1392 = vrot.slane %v1390, 1
      %v1393 = vsel %vm1201, %v1388, %v1392
      %1394 = vrot.lane.b32.xlu0 %v1213, 4
      %v1395 = vpop.permute.xlu0 %1394
      %1396 = vrot.lane.b32.xlu0 %v1225, 4
      %v1397 = vpop.permute.xlu0 %1396
      %1398 = vrot.lane.b32.xlu0 %v1237, 4
      %v1399 = vpop.permute.xlu0 %1398
      %1400 = vrot.lane.b32.xlu0 %v1249, 4
      %v1401 = vpop.permute.xlu0 %1400
      %1402 = vrot.lane.b32.xlu0 %v1261, 4
      %v1403 = vpop.permute.xlu0 %1402
      %1404 = vrot.lane.b32.xlu0 %v1273, 4
      %v1405 = vpop.permute.xlu0 %1404
      %1406 = vrot.lane.b32.xlu0 %v1285, 4
      %v1407 = vpop.permute.xlu0 %1406
      %1408 = vrot.lane.b32.xlu0 %v1297, 4
      %v1409 = vpop.permute.xlu0 %1408
      %1410 = vrot.lane.b32.xlu0 %v1309, 4
      %v1411 = vpop.permute.xlu0 %1410
      %1412 = vrot.lane.b32.xlu0 %v1321, 4
      %v1413 = vpop.permute.xlu0 %1412
      %1414 = vrot.lane.b32.xlu0 %v1333, 4
      %v1415 = vpop.permute.xlu0 %1414
      %1416 = vrot.lane.b32.xlu0 %v1345, 4
      %v1417 = vpop.permute.xlu0 %1416
      %1418 = vrot.lane.b32.xlu0 %v1357, 4
      %v1419 = vpop.permute.xlu0 %1418
      %1420 = vrot.lane.b32.xlu0 %v1369, 4
      %v1421 = vpop.permute.xlu0 %1420
      %1422 = vrot.lane.b32.xlu0 %v1381, 4
      %v1423 = vpop.permute.xlu0 %1422
      %1424 = vrot.lane.b32.xlu0 %v1393, 4
      %v1425 = vpop.permute.xlu0 %1424
      %vm1458 = vcmask 1046528
      %v1459 = vrot.slane %v1165, 1
      %v1460 = vrot.slane %v1183, 1
      %v1461 = vsel %vm1458, %v1459, %v1460
      %v1462 = vrot.slane %v1166, 1
      %v1463 = vrot.slane %v1184, 1
      %v1464 = vsel %vm1458, %v1462, %v1463
      %v1465 = vrot.slane %v1167, 1
      %v1466 = vrot.slane %v1185, 1
      %v1467 = vsel %vm1458, %v1465, %v1466
      %v1468 = vrot.slane %v1168, 1
      %v1469 = vrot.slane %v1186, 1
      %v1470 = vsel %vm1458, %v1468, %v1469
      %v1471 = vrot.slane %v1169, 1
      %v1472 = vrot.slane %v1187, 1
      %v1473 = vsel %vm1458, %v1471, %v1472
      %v1474 = vrot.slane %v1170, 1
      %v1475 = vrot.slane %v1188, 1
      %v1476 = vsel %vm1458, %v1474, %v1475
      %v1477 = vrot.slane %v1171, 1
      %v1478 = vrot.slane %v1189, 1
      %v1479 = vsel %vm1458, %v1477, %v1478
      %v1480 = vrot.slane %v1172, 1
      %v1481 = vrot.slane %v1190, 1
      %v1482 = vsel %vm1458, %v1480, %v1481
      %v1483 = vrot.slane %v1173, 1
      %v1484 = vrot.slane %v1191, 1
      %v1485 = vsel %vm1458, %v1483, %v1484
      %v1486 = vrot.slane %v1174, 1
      %v1487 = vrot.slane %v1192, 1
      %v1488 = vsel %vm1458, %v1486, %v1487
      %v1489 = vrot.slane %v1175, 1
      %v1490 = vrot.slane %v1193, 1
      %v1491 = vsel %vm1458, %v1489, %v1490
      %v1492 = vrot.slane %v1176, 1
      %v1493 = vrot.slane %v1194, 1
      %v1494 = vsel %vm1458, %v1492, %v1493
      %v1495 = vrot.slane %v1177, 1
      %v1496 = vrot.slane %v1195, 1
      %v1497 = vsel %vm1458, %v1495, %v1496
      %v1498 = vrot.slane %v1178, 1
      %v1499 = vrot.slane %v1196, 1
      %v1500 = vsel %vm1458, %v1498, %v1499
      %v1501 = vrot.slane %v1179, 1
      %v1502 = vrot.slane %v1197, 1
      %v1503 = vsel %vm1458, %v1501, %v1502
      %v1504 = vrot.slane %v1180, 1
      %v1505 = vrot.slane %v1198, 1
      %v1506 = vsel %vm1458, %v1504, %v1505
      %1507 = vrot.lane.b32.xlu0 %v1461, 8
      %v1508 = vpop.permute.xlu0 %1507
      %1509 = vrot.lane.b32.xlu0 %v1464, 8
      %v1510 = vpop.permute.xlu0 %1509
      %1511 = vrot.lane.b32.xlu0 %v1467, 8
      %v1512 = vpop.permute.xlu0 %1511
      %1513 = vrot.lane.b32.xlu0 %v1470, 8
      %v1514 = vpop.permute.xlu0 %1513
      %1515 = vrot.lane.b32.xlu0 %v1473, 8
      %v1516 = vpop.permute.xlu0 %1515
      %1517 = vrot.lane.b32.xlu0 %v1476, 8
      %v1518 = vpop.permute.xlu0 %1517
      %1519 = vrot.lane.b32.xlu0 %v1479, 8
      %v1520 = vpop.permute.xlu0 %1519
      %1521 = vrot.lane.b32.xlu0 %v1482, 8
      %v1522 = vpop.permute.xlu0 %1521
      %1523 = vrot.lane.b32.xlu0 %v1485, 8
      %v1524 = vpop.permute.xlu0 %1523
      %1525 = vrot.lane.b32.xlu0 %v1488, 8
      %v1526 = vpop.permute.xlu0 %1525
      %1527 = vrot.lane.b32.xlu0 %v1491, 8
      %v1528 = vpop.permute.xlu0 %1527
      %1529 = vrot.lane.b32.xlu0 %v1494, 8
      %v1530 = vpop.permute.xlu0 %1529
      %1531 = vrot.lane.b32.xlu0 %v1497, 8
      %v1532 = vpop.permute.xlu0 %1531
      %1533 = vrot.lane.b32.xlu0 %v1500, 8
      %v1534 = vpop.permute.xlu0 %1533
      %1535 = vrot.lane.b32.xlu0 %v1503, 8
      %v1536 = vpop.permute.xlu0 %1535
      %1537 = vrot.lane.b32.xlu0 %v1506, 8
      %v1538 = vpop.permute.xlu0 %1537
      %vm1539 = vcmask 31744
      %v1541 = vsel %vm1539, %v1165, %v1395
      %v1543 = vsel %vm1539, %v1166, %v1397
      %v1545 = vsel %vm1539, %v1167, %v1399
      %v1547 = vsel %vm1539, %v1168, %v1401
      %v1549 = vsel %vm1539, %v1169, %v1403
      %v1551 = vsel %vm1539, %v1170, %v1405
      %v1553 = vsel %vm1539, %v1171, %v1407
      %v1555 = vsel %vm1539, %v1172, %v1409
      %v1557 = vsel %vm1539, %v1173, %v1411
      %v1559 = vsel %vm1539, %v1174, %v1413
      %v1561 = vsel %vm1539, %v1175, %v1415
      %v1563 = vsel %vm1539, %v1176, %v1417
      %v1565 = vsel %vm1539, %v1177, %v1419
      %v1567 = vsel %vm1539, %v1178, %v1421
      %v1569 = vsel %vm1539, %v1179, %v1423
      %v1571 = vsel %vm1539, %v1180, %v1425
      %vm1572 = vcmask 64512
      %v1574 = vsel %vm1572, %v1541, %v1508
      %v1576 = vsel %vm1572, %v1543, %v1510
      %v1578 = vsel %vm1572, %v1545, %v1512
      %v1580 = vsel %vm1572, %v1547, %v1514
      %v1582 = vsel %vm1572, %v1549, %v1516
      %v1584 = vsel %vm1572, %v1551, %v1518
      %v1586 = vsel %vm1572, %v1553, %v1520
      %v1588 = vsel %vm1572, %v1555, %v1522
      %v1590 = vsel %vm1572, %v1557, %v1524
      %v1592 = vsel %vm1572, %v1559, %v1526
      %v1594 = vsel %vm1572, %v1561, %v1528
      %v1596 = vsel %vm1572, %v1563, %v1530
      %v1598 = vsel %vm1572, %v1565, %v1532
      %v1600 = vsel %vm1572, %v1567, %v1534
      %v1602 = vsel %vm1572, %v1569, %v1536
      %v1604 = vsel %vm1572, %v1571, %v1538
      %v1605 = vld [vmem:[%s705] sm:$0xf]
      %v1606 = vld [vmem:[%s705 + $0x4] sm:$0x3]
      %v1608 = vshrl.u32 %v1181, 16
      %v1610 = vshll.u32 %v1181, 16
      %v1612 = vrot.slane %v1610, 1
      %v1613 = vor.u32 %v1608, %v1612
      %v1615 = vshll.u32 %v1199, 16
      %v1617 = vrot.slane %v1615, 1
      %v1618 = vsel %vm1201, %v1613, %v1617
      %1619 = vrot.lane.b32.xlu0 %v1618, 4
      %v1620 = vpop.permute.xlu0 %1619
      %v1623 = vrot.slane %v1181, 1
      %v1624 = vrot.slane %v1199, 1
      %v1625 = vsel %vm1458, %v1623, %v1624
      %1626 = vrot.lane.b32.xlu0 %v1625, 8
      %v1627 = vpop.permute.xlu0 %1626
      %v1629 = vsel %vm1539, %v1181, %v1620
      %v1631 = vsel %vm1572, %v1629, %v1627
      %s1632 = scalar_lea.vmem %s705, 8
      %v1633 = vld [vmem:[%s1632] sm:$0xf]
      %v1634 = vld [vmem:[%s1632 + $0x4] sm:$0x3]
      %v1637 = vunpack.c.l.b16 %v1633
      %v1638 = vunpack.c.l.b16 %v1634
      %v1639 = vpack.c.b16 %v1638, %v1637
      %vm1640 = vcmask 97280
      %v1641 = vsel %vm1640, %v1576, 0
      %v1643 = vsel %vm1640, %v1578, 0
      %v1645 = vsel %vm1640, %v1580, 0
      %v1647 = vsel %vm1640, %v1582, 0
      %v1649 = vsel %vm1640, %v1584, 0
      %v1651 = vsel %vm1640, %v1586, 0
      %v1653 = vsel %vm1640, %v1588, 0
      %v1655 = vsel %vm1640, %v1590, 0
      %v1657 = vsel %vm1640, %v1592, 0
      %v1659 = vsel %vm1640, %v1594, 0
      %v1661 = vsel %vm1640, %v1596, 0
      %v1663 = vsel %vm1640, %v1598, 0
      %v1665 = vsel %vm1640, %v1600, 0
      %v1667 = vsel %vm1640, %v1602, 0
      %v1669 = vsel %vm1640, %v1604, 0
      %v1671 = vsel %vm1640, %v1631, 0
      %vm1673 = vcmask 1045504
      %v1675 = vsel %vm1673, %v1639, 0
      %1677 = vmatpush.bf16.msra.mxu0 0
      %1678 = vmatpush.bf16.msra.mxu0 0
      %1679 = vmatpush.bf16.msra.mxu0 0
      %1680 = vmatpush.bf16.msra.mxu0 0
      %1681 = vmatpush.bf16.msra.mxu0 0
      %1682 = vmatpush.bf16.msra.mxu0 0
      %1683 = vmatpush.bf16.msra.mxu0 0
      %1684 = vmatpush.bf16.msra.mxu0 %v1675
      %1685 = vmatmul.bf16.gmra.mxu0 %v1641
      %v1686 = vpop.f32.mrf.mxu0
      %v1687 = vadd.f32 0.0, %v1686
      %v1688 = vpop.f32.mrf.mxu0
      %v1689 = vadd.f32 0.0, %v1688
      %1690 = vmatmul.bf16.gmra.mxu0 %v1643
      %v1691 = vpop.f32.mrf.mxu0
      %v1692 = vadd.f32 0.0, %v1691
      %v1693 = vpop.f32.mrf.mxu0
      %v1694 = vadd.f32 0.0, %v1693
      %1695 = vmatmul.bf16.gmra.mxu0 %v1645
      %v1696 = vpop.f32.mrf.mxu0
      %v1697 = vadd.f32 0.0, %v1696
      %v1698 = vpop.f32.mrf.mxu0
      %v1699 = vadd.f32 0.0, %v1698
      %1700 = vmatmul.bf16.gmra.mxu0 %v1647
      %v1701 = vpop.f32.mrf.mxu0
      %v1702 = vadd.f32 0.0, %v1701
      %v1703 = vpop.f32.mrf.mxu0
      %v1704 = vadd.f32 0.0, %v1703
      %1705 = vmatmul.bf16.gmra.mxu0 %v1649
      %v1706 = vpop.f32.mrf.mxu0
      %v1707 = vadd.f32 0.0, %v1706
      %v1708 = vpop.f32.mrf.mxu0
      %v1709 = vadd.f32 0.0, %v1708
      %1710 = vmatmul.bf16.gmra.mxu0 %v1651
      %v1711 = vpop.f32.mrf.mxu0
      %v1712 = vadd.f32 0.0, %v1711
      %v1713 = vpop.f32.mrf.mxu0
      %v1714 = vadd.f32 0.0, %v1713
      %1715 = vmatmul.bf16.gmra.mxu0 %v1653
      %v1716 = vpop.f32.mrf.mxu0
      %v1717 = vadd.f32 0.0, %v1716
      %v1718 = vpop.f32.mrf.mxu0
      %v1719 = vadd.f32 0.0, %v1718
      %1720 = vmatmul.bf16.gmra.mxu0 %v1655
      %v1721 = vpop.f32.mrf.mxu0
      %v1722 = vadd.f32 0.0, %v1721
      %v1723 = vpop.f32.mrf.mxu0
      %v1724 = vadd.f32 0.0, %v1723
      %1725 = vmatmul.bf16.gmra.mxu0 %v1657
      %v1726 = vpop.f32.mrf.mxu0
      %v1727 = vadd.f32 0.0, %v1726
      %v1728 = vpop.f32.mrf.mxu0
      %v1729 = vadd.f32 0.0, %v1728
      %1730 = vmatmul.bf16.gmra.mxu0 %v1659
      %v1731 = vpop.f32.mrf.mxu0
      %v1732 = vadd.f32 0.0, %v1731
      %v1733 = vpop.f32.mrf.mxu0
      %v1734 = vadd.f32 0.0, %v1733
      %1735 = vmatmul.bf16.gmra.mxu0 %v1661
      %v1736 = vpop.f32.mrf.mxu0
      %v1737 = vadd.f32 0.0, %v1736
      %v1738 = vpop.f32.mrf.mxu0
      %v1739 = vadd.f32 0.0, %v1738
      %1740 = vmatmul.bf16.gmra.mxu0 %v1663
      %v1741 = vpop.f32.mrf.mxu0
      %v1742 = vadd.f32 0.0, %v1741
      %v1743 = vpop.f32.mrf.mxu0
      %v1744 = vadd.f32 0.0, %v1743
      %1745 = vmatmul.bf16.gmra.mxu0 %v1665
      %v1746 = vpop.f32.mrf.mxu0
      %v1747 = vadd.f32 0.0, %v1746
      %v1748 = vpop.f32.mrf.mxu0
      %v1749 = vadd.f32 0.0, %v1748
      %1750 = vmatmul.bf16.gmra.mxu0 %v1667
      %v1751 = vpop.f32.mrf.mxu0
      %v1752 = vadd.f32 0.0, %v1751
      %v1753 = vpop.f32.mrf.mxu0
      %v1754 = vadd.f32 0.0, %v1753
      %1755 = vmatmul.bf16.gmra.mxu0 %v1669
      %v1756 = vpop.f32.mrf.mxu0
      %v1757 = vadd.f32 0.0, %v1756
      %v1758 = vpop.f32.mrf.mxu0
      %v1759 = vadd.f32 0.0, %v1758
      %1760 = vmatmul.bf16.gmra.mxu0 %v1671
      %v1761 = vpop.f32.mrf.mxu0
      %v1762 = vadd.f32 0.0, %v1761
      %v1763 = vpop.f32.mrf.mxu0
      %v1764 = vadd.f32 0.0, %v1763
      %1765 = vdwg.mxu0
      %v1768 = vunpack.c.l.b16 %v1605
      %v1769 = vunpack.c.l.b16 %v1606
      %v1770 = vpack.c.b16 %v1769, %v1768
      %v1771 = vsel %vm1640, %v1574, 0
      %v1774 = vsel %vm1673, %v1770, 0
      %1776 = vmatpush.bf16.msra.mxu0 0
      %1777 = vmatpush.bf16.msra.mxu0 0
      %1778 = vmatpush.bf16.msra.mxu0 0
      %1779 = vmatpush.bf16.msra.mxu0 0
      %1780 = vmatpush.bf16.msra.mxu0 0
      %1781 = vmatpush.bf16.msra.mxu0 0
      %1782 = vmatpush.bf16.msra.mxu0 0
      %1783 = vmatpush.bf16.msra.mxu0 %v1774
      %1784 = vmatmul.bf16.gmra.mxu0 %v1771
      %v1785 = vpop.f32.mrf.mxu0
      %v1786 = vadd.f32 %v1687, %v1785
      %v1787 = vpop.f32.mrf.mxu0
      %v1788 = vadd.f32 %v1689, %v1787
      %1789 = vmatmul.bf16.gmra.mxu0 %v1641
      %v1790 = vpop.f32.mrf.mxu0
      %v1791 = vadd.f32 %v1692, %v1790
      %v1792 = vpop.f32.mrf.mxu0
      %v1793 = vadd.f32 %v1694, %v1792
      %1794 = vmatmul.bf16.gmra.mxu0 %v1643
      %v1795 = vpop.f32.mrf.mxu0
      %v1796 = vadd.f32 %v1697, %v1795
      %v1797 = vpop.f32.mrf.mxu0
      %v1798 = vadd.f32 %v1699, %v1797
      %1799 = vmatmul.bf16.gmra.mxu0 %v1645
      %v1800 = vpop.f32.mrf.mxu0
      %v1801 = vadd.f32 %v1702, %v1800
      %v1802 = vpop.f32.mrf.mxu0
      %v1803 = vadd.f32 %v1704, %v1802
      %1804 = vmatmul.bf16.gmra.mxu0 %v1647
      %v1805 = vpop.f32.mrf.mxu0
      %v1806 = vadd.f32 %v1707, %v1805
      %v1807 = vpop.f32.mrf.mxu0
      %v1808 = vadd.f32 %v1709, %v1807
      %1809 = vmatmul.bf16.gmra.mxu0 %v1649
      %v1810 = vpop.f32.mrf.mxu0
      %v1811 = vadd.f32 %v1712, %v1810
      %v1812 = vpop.f32.mrf.mxu0
      %v1813 = vadd.f32 %v1714, %v1812
      %1814 = vmatmul.bf16.gmra.mxu0 %v1651
      %v1815 = vpop.f32.mrf.mxu0
      %v1816 = vadd.f32 %v1717, %v1815
      %v1817 = vpop.f32.mrf.mxu0
      %v1818 = vadd.f32 %v1719, %v1817
      %1819 = vmatmul.bf16.gmra.mxu0 %v1653
      %v1820 = vpop.f32.mrf.mxu0
      %v1821 = vadd.f32 %v1722, %v1820
      %v1822 = vpop.f32.mrf.mxu0
      %v1823 = vadd.f32 %v1724, %v1822
      %1824 = vmatmul.bf16.gmra.mxu0 %v1655
      %v1825 = vpop.f32.mrf.mxu0
      %v1826 = vadd.f32 %v1727, %v1825
      %v1827 = vpop.f32.mrf.mxu0
      %v1828 = vadd.f32 %v1729, %v1827
      %1829 = vmatmul.bf16.gmra.mxu0 %v1657
      %v1830 = vpop.f32.mrf.mxu0
      %v1831 = vadd.f32 %v1732, %v1830
      %v1832 = vpop.f32.mrf.mxu0
      %v1833 = vadd.f32 %v1734, %v1832
      %1834 = vmatmul.bf16.gmra.mxu0 %v1659
      %v1835 = vpop.f32.mrf.mxu0
      %v1836 = vadd.f32 %v1737, %v1835
      %v1837 = vpop.f32.mrf.mxu0
      %v1838 = vadd.f32 %v1739, %v1837
      %1839 = vmatmul.bf16.gmra.mxu0 %v1661
      %v1840 = vpop.f32.mrf.mxu0
      %v1841 = vadd.f32 %v1742, %v1840
      %v1842 = vpop.f32.mrf.mxu0
      %v1843 = vadd.f32 %v1744, %v1842
      %1844 = vmatmul.bf16.gmra.mxu0 %v1663
      %v1845 = vpop.f32.mrf.mxu0
      %v1846 = vadd.f32 %v1747, %v1845
      %v1847 = vpop.f32.mrf.mxu0
      %v1848 = vadd.f32 %v1749, %v1847
      %1849 = vmatmul.bf16.gmra.mxu0 %v1665
      %v1850 = vpop.f32.mrf.mxu0
      %v1851 = vadd.f32 %v1752, %v1850
      %v1852 = vpop.f32.mrf.mxu0
      %v1853 = vadd.f32 %v1754, %v1852
      %1854 = vmatmul.bf16.gmra.mxu0 %v1667
      %v1855 = vpop.f32.mrf.mxu0
      %v1856 = vadd.f32 %v1757, %v1855
      %v1857 = vpop.f32.mrf.mxu0
      %v1858 = vadd.f32 %v1759, %v1857
      %1859 = vmatmul.bf16.gmra.mxu0 %v1669
      %v1860 = vpop.f32.mrf.mxu0
      %v1861 = vadd.f32 %v1762, %v1860
      %v1862 = vpop.f32.mrf.mxu0
      %v1863 = vadd.f32 %v1764, %v1862
      %1864 = vdwg.mxu0
      %v1866 = vshrl.u32 %v1182, 16
      %v1868 = vshll.u32 %v1182, 16
      %v1870 = vrot.slane %v1868, 1
      %v1871 = vor.u32 %v1866, %v1870
      %v1873 = vshll.u32 %v1200, 16
      %v1875 = vrot.slane %v1873, 1
      %v1876 = vsel %vm1201, %v1871, %v1875
      %1877 = vrot.lane.b32.xlu0 %v1876, 4
      %v1878 = vpop.permute.xlu0 %1877
      %v1881 = vrot.slane %v1182, 1
      %v1882 = vrot.slane %v1200, 1
      %v1883 = vsel %vm1458, %v1881, %v1882
      %1884 = vrot.lane.b32.xlu0 %v1883, 8
      %v1885 = vpop.permute.xlu0 %1884
      %v1887 = vsel %vm1539, %v1182, %v1878
      %v1889 = vsel %vm1572, %v1887, %v1885
      %s1890 = scalar_lea.vmem %s705, 16
      %v1891 = vld [vmem:[%s1890] sm:$0xf]
      %v1892 = vld [vmem:[%s1890 + $0x4] sm:$0x3]
      %v1895 = vunpack.c.l.b16 %v1891
      %v1896 = vunpack.c.l.b16 %v1892
      %v1897 = vpack.c.b16 %v1896, %v1895
      %v1898 = vsel %vm1640, %v1889, 0
      %v1901 = vsel %vm1673, %v1897, 0
      %1903 = vmatpush.bf16.msra.mxu0 0
      %1904 = vmatpush.bf16.msra.mxu0 0
      %1905 = vmatpush.bf16.msra.mxu0 0
      %1906 = vmatpush.bf16.msra.mxu0 0
      %1907 = vmatpush.bf16.msra.mxu0 0
      %1908 = vmatpush.bf16.msra.mxu0 0
      %1909 = vmatpush.bf16.msra.mxu0 0
      %1910 = vmatpush.bf16.msra.mxu0 %v1901
      %1911 = vmatmul.bf16.gmra.mxu0 %v1643
      %v1912 = vpop.f32.mrf.mxu0
      %v1913 = vadd.f32 0.0, %v1912
      %v1914 = vpop.f32.mrf.mxu0
      %v1915 = vadd.f32 0.0, %v1914
      %1916 = vmatmul.bf16.gmra.mxu0 %v1645
      %v1917 = vpop.f32.mrf.mxu0
      %v1918 = vadd.f32 0.0, %v1917
      %v1919 = vpop.f32.mrf.mxu0
      %v1920 = vadd.f32 0.0, %v1919
      %1921 = vmatmul.bf16.gmra.mxu0 %v1647
      %v1922 = vpop.f32.mrf.mxu0
      %v1923 = vadd.f32 0.0, %v1922
      %v1924 = vpop.f32.mrf.mxu0
      %v1925 = vadd.f32 0.0, %v1924
      %1926 = vmatmul.bf16.gmra.mxu0 %v1649
      %v1927 = vpop.f32.mrf.mxu0
      %v1928 = vadd.f32 0.0, %v1927
      %v1929 = vpop.f32.mrf.mxu0
      %v1930 = vadd.f32 0.0, %v1929
      %1931 = vmatmul.bf16.gmra.mxu0 %v1651
      %v1932 = vpop.f32.mrf.mxu0
      %v1933 = vadd.f32 0.0, %v1932
      %v1934 = vpop.f32.mrf.mxu0
      %v1935 = vadd.f32 0.0, %v1934
      %1936 = vmatmul.bf16.gmra.mxu0 %v1653
      %v1937 = vpop.f32.mrf.mxu0
      %v1938 = vadd.f32 0.0, %v1937
      %v1939 = vpop.f32.mrf.mxu0
      %v1940 = vadd.f32 0.0, %v1939
      %1941 = vmatmul.bf16.gmra.mxu0 %v1655
      %v1942 = vpop.f32.mrf.mxu0
      %v1943 = vadd.f32 0.0, %v1942
      %v1944 = vpop.f32.mrf.mxu0
      %v1945 = vadd.f32 0.0, %v1944
      %1946 = vmatmul.bf16.gmra.mxu0 %v1657
      %v1947 = vpop.f32.mrf.mxu0
      %v1948 = vadd.f32 0.0, %v1947
      %v1949 = vpop.f32.mrf.mxu0
      %v1950 = vadd.f32 0.0, %v1949
      %1951 = vmatmul.bf16.gmra.mxu0 %v1659
      %v1952 = vpop.f32.mrf.mxu0
      %v1953 = vadd.f32 0.0, %v1952
      %v1954 = vpop.f32.mrf.mxu0
      %v1955 = vadd.f32 0.0, %v1954
      %1956 = vmatmul.bf16.gmra.mxu0 %v1661
      %v1957 = vpop.f32.mrf.mxu0
      %v1958 = vadd.f32 0.0, %v1957
      %v1959 = vpop.f32.mrf.mxu0
      %v1960 = vadd.f32 0.0, %v1959
      %1961 = vmatmul.bf16.gmra.mxu0 %v1663
      %v1962 = vpop.f32.mrf.mxu0
      %v1963 = vadd.f32 0.0, %v1962
      %v1964 = vpop.f32.mrf.mxu0
      %v1965 = vadd.f32 0.0, %v1964
      %1966 = vmatmul.bf16.gmra.mxu0 %v1665
      %v1967 = vpop.f32.mrf.mxu0
      %v1968 = vadd.f32 0.0, %v1967
      %v1969 = vpop.f32.mrf.mxu0
      %v1970 = vadd.f32 0.0, %v1969
      %1971 = vmatmul.bf16.gmra.mxu0 %v1667
      %v1972 = vpop.f32.mrf.mxu0
      %v1973 = vadd.f32 0.0, %v1972
      %v1974 = vpop.f32.mrf.mxu0
      %v1975 = vadd.f32 0.0, %v1974
      %1976 = vmatmul.bf16.gmra.mxu0 %v1669
      %v1977 = vpop.f32.mrf.mxu0
      %v1978 = vadd.f32 0.0, %v1977
      %v1979 = vpop.f32.mrf.mxu0
      %v1980 = vadd.f32 0.0, %v1979
      %1981 = vmatmul.bf16.gmra.mxu0 %v1671
      %v1982 = vpop.f32.mrf.mxu0
      %v1983 = vadd.f32 0.0, %v1982
      %v1984 = vpop.f32.mrf.mxu0
      %v1985 = vadd.f32 0.0, %v1984
      %1986 = vmatmul.bf16.gmra.mxu0 %v1898
      %v1987 = vpop.f32.mrf.mxu0
      %v1988 = vadd.f32 0.0, %v1987
      %v1989 = vpop.f32.mrf.mxu0
      %v1990 = vadd.f32 0.0, %v1989
      %1991 = vdwg.mxu0
      %v1992 = vadd.f32 %v1786, %v1913
      %v1993 = vadd.f32 %v1788, %v1915
      %v1994 = vadd.f32 %v1791, %v1918
      %v1995 = vadd.f32 %v1793, %v1920
      %v1996 = vadd.f32 %v1796, %v1923
      %v1997 = vadd.f32 %v1798, %v1925
      %v1998 = vadd.f32 %v1801, %v1928
      %v1999 = vadd.f32 %v1803, %v1930
      %v2000 = vadd.f32 %v1806, %v1933
      %v2001 = vadd.f32 %v1808, %v1935
      %v2002 = vadd.f32 %v1811, %v1938
      %v2003 = vadd.f32 %v1813, %v1940
      %v2004 = vadd.f32 %v1816, %v1943
      %v2005 = vadd.f32 %v1818, %v1945
      %v2006 = vadd.f32 %v1821, %v1948
      %v2007 = vadd.f32 %v1823, %v1950
      %v2008 = vadd.f32 %v1826, %v1953
      %v2009 = vadd.f32 %v1828, %v1955
      %v2010 = vadd.f32 %v1831, %v1958
      %v2011 = vadd.f32 %v1833, %v1960
      %v2012 = vadd.f32 %v1836, %v1963
      %v2013 = vadd.f32 %v1838, %v1965
      %v2014 = vadd.f32 %v1841, %v1968
      %v2015 = vadd.f32 %v1843, %v1970
      %v2016 = vadd.f32 %v1846, %v1973
      %v2017 = vadd.f32 %v1848, %v1975
      %v2018 = vadd.f32 %v1851, %v1978
      %v2019 = vadd.f32 %v1853, %v1980
      %v2020 = vadd.f32 %v1856, %v1983
      %v2021 = vadd.f32 %v1858, %v1985
      %v2022 = vadd.f32 %v1861, %v1988
      %v2023 = vadd.f32 %v1863, %v1990
      %v2024 = vld [vmem:[%s669] sm:$0xf]
      %v2025 = vld [vmem:[%s669 + $0x4] sm:$0xf]
      %v2026 = vld [vmem:[%s683] sm:$0xf]
      %v2027 = vld [vmem:[%s683 + $0x4] sm:$0xf]
      %v2028 = vld [vmem:[%s683 + $0x8] sm:$0xf]
      %v2029 = vld [vmem:[%s683 + $0xc] sm:$0xf]
      %v2030 = vld [vmem:[%s683 + $0x10] sm:$0xf]
      %v2031 = vld [vmem:[%s683 + $0x14] sm:$0xf]
      %v2032 = vld [vmem:[%s683 + $0x18] sm:$0xf]
      %v2033 = vld [vmem:[%s683 + $0x1c] sm:$0xf]
      %v2034 = vld [vmem:[%s683 + $0x20] sm:$0xf]
      %v2035 = vld [vmem:[%s683 + $0x24] sm:$0xf]
      %v2036 = vld [vmem:[%s683 + $0x28] sm:$0xf]
      %v2037 = vld [vmem:[%s683 + $0x2c] sm:$0xf]
      %v2038 = vld [vmem:[%s683 + $0x30] sm:$0xf]
      %v2039 = vld [vmem:[%s683 + $0x34] sm:$0xf]
      %v2040 = vld [vmem:[%s683 + $0x38] sm:$0xf]
      %v2041 = vld [vmem:[%s683 + $0x3c] sm:$0xf]
      %v2042 = vld [vmem:[%s683 + $0x40] sm:$0xf]
      %v2043 = vld [vmem:[%s683 + $0x44] sm:$0xf]
      %v2044 = vld [vmem:[%s683 + $0x48] sm:$0xf]
      %v2045 = vld [vmem:[%s683 + $0x4c] sm:$0xf]
      %v2046 = vld [vmem:[%s683 + $0x50] sm:$0xf]
      %v2047 = vld [vmem:[%s683 + $0x54] sm:$0xf]
      %v2048 = vld [vmem:[%s683 + $0x58] sm:$0xf]
      %v2049 = vld [vmem:[%s683 + $0x5c] sm:$0xf]
      %v2050 = vld [vmem:[%s683 + $0x60] sm:$0xf]
      %v2051 = vld [vmem:[%s683 + $0x64] sm:$0xf]
      %v2052 = vld [vmem:[%s683 + $0x68] sm:$0xf]
      %v2053 = vld [vmem:[%s683 + $0x6c] sm:$0xf]
      %v2054 = vld [vmem:[%s683 + $0x70] sm:$0xf]
      %v2055 = vld [vmem:[%s683 + $0x74] sm:$0xf]
      %v2056 = vld [vmem:[%s683 + $0x78] sm:$0xf]
      %v2057 = vld [vmem:[%s683 + $0x7c] sm:$0xf]
      %v2058 = vld [vmem:[%s697] sm:$0xf]
      %v2059 = vld [vmem:[%s697 + $0x4] sm:$0xf]
      %v2060 = vsel %vm856, %v2024, 0
      %v2061 = vsel %vm856, %v2025, 0
      %v2062 = vsel %vm857, %v2026, 0
      %v2063 = vsel %vm857, %v2027, 0
      %v2064 = vsel %vm858, %v2028, 0
      %v2065 = vsel %vm858, %v2029, 0
      %v2066 = vsel %vm859, %v2030, 0
      %v2067 = vsel %vm859, %v2031, 0
      %v2068 = vsel %vm860, %v2032, 0
      %v2069 = vsel %vm860, %v2033, 0
      %v2070 = vsel %vm861, %v2034, 0
      %v2071 = vsel %vm861, %v2035, 0
      %v2072 = vsel %vm862, %v2036, 0
      %v2073 = vsel %vm862, %v2037, 0
      %v2074 = vsel %vm863, %v2038, 0
      %v2075 = vsel %vm863, %v2039, 0
      %v2076 = vsel %vm864, %v2040, 0
      %v2077 = vsel %vm864, %v2041, 0
      %v2078 = vsel %vm865, %v2042, 0
      %v2079 = vsel %vm865, %v2043, 0
      %v2080 = vsel %vm866, %v2044, 0
      %v2081 = vsel %vm866, %v2045, 0
      %v2082 = vsel %vm867, %v2046, 0
      %v2083 = vsel %vm867, %v2047, 0
      %v2084 = vsel %vm868, %v2048, 0
      %v2085 = vsel %vm868, %v2049, 0
      %v2086 = vsel %vm869, %v2050, 0
      %v2087 = vsel %vm869, %v2051, 0
      %v2088 = vsel %vm870, %v2052, 0
      %v2089 = vsel %vm870, %v2053, 0
      %v2090 = vsel %vm871, %v2054, 0
      %v2091 = vsel %vm871, %v2055, 0
      %v2092 = vsel %vm872, %v2056, 0
      %v2093 = vsel %vm872, %v2057, 0
      %v2094 = vsel %vm873, %v2058, 0
      %v2095 = vsel %vm873, %v2059, 0
      %v2132 = vunpack.c.l.b16 %v2060
      %v2133 = vunpack.c.l.b16 %v2061
      %v2134 = vunpack.c.l.b16 %v2062
      %v2135 = vunpack.c.l.b16 %v2063
      %v2136 = vunpack.c.l.b16 %v2064
      %v2137 = vunpack.c.l.b16 %v2065
      %v2138 = vunpack.c.l.b16 %v2066
      %v2139 = vunpack.c.l.b16 %v2067
      %v2140 = vunpack.c.l.b16 %v2068
      %v2141 = vunpack.c.l.b16 %v2069
      %v2142 = vunpack.c.l.b16 %v2070
      %v2143 = vunpack.c.l.b16 %v2071
      %v2144 = vunpack.c.l.b16 %v2072
      %v2145 = vunpack.c.l.b16 %v2073
      %v2146 = vunpack.c.l.b16 %v2074
      %v2147 = vunpack.c.l.b16 %v2075
      %v2148 = vunpack.c.l.b16 %v2076
      %v2149 = vunpack.c.l.b16 %v2077
      %v2150 = vunpack.c.l.b16 %v2078
      %v2151 = vunpack.c.l.b16 %v2079
      %v2152 = vunpack.c.l.b16 %v2080
      %v2153 = vunpack.c.l.b16 %v2081
      %v2154 = vunpack.c.l.b16 %v2082
      %v2155 = vunpack.c.l.b16 %v2083
      %v2156 = vunpack.c.l.b16 %v2084
      %v2157 = vunpack.c.l.b16 %v2085
      %v2158 = vunpack.c.l.b16 %v2086
      %v2159 = vunpack.c.l.b16 %v2087
      %v2160 = vunpack.c.l.b16 %v2088
      %v2161 = vunpack.c.l.b16 %v2089
      %v2162 = vunpack.c.l.b16 %v2090
      %v2163 = vunpack.c.l.b16 %v2091
      %v2164 = vunpack.c.l.b16 %v2092
      %v2165 = vunpack.c.l.b16 %v2093
      %v2166 = vunpack.c.l.b16 %v2094
      %v2167 = vunpack.c.l.b16 %v2095
      %v2168 = vpack.c.b16 %v2133, %v2132
      %v2169 = vpack.c.b16 %v2135, %v2134
      %v2170 = vpack.c.b16 %v2137, %v2136
      %v2171 = vpack.c.b16 %v2139, %v2138
      %v2172 = vpack.c.b16 %v2141, %v2140
      %v2173 = vpack.c.b16 %v2143, %v2142
      %v2174 = vpack.c.b16 %v2145, %v2144
      %v2175 = vpack.c.b16 %v2147, %v2146
      %v2176 = vpack.c.b16 %v2149, %v2148
      %v2177 = vpack.c.b16 %v2151, %v2150
      %v2178 = vpack.c.b16 %v2153, %v2152
      %v2179 = vpack.c.b16 %v2155, %v2154
      %v2180 = vpack.c.b16 %v2157, %v2156
      %v2181 = vpack.c.b16 %v2159, %v2158
      %v2182 = vpack.c.b16 %v2161, %v2160
      %v2183 = vpack.c.b16 %v2163, %v2162
      %v2184 = vpack.c.b16 %v2165, %v2164
      %v2185 = vpack.c.b16 %v2167, %v2166
      %v2187 = vshrl.u32 %v2168, 16
      %v2189 = vrot.slane %v2187, 7
      %v2190 = vshll.u32 %v2168, 16
      %v2192 = vor.u32 %v2189, %v2190
      %v2194 = vshrl.u32 %v2169, 16
      %v2196 = vrot.slane %v2194, 7
      %v2197 = vshll.u32 %v2169, 16
      %v2199 = vor.u32 %v2196, %v2197
      %v2201 = vshrl.u32 %v2170, 16
      %v2203 = vrot.slane %v2201, 7
      %v2204 = vshll.u32 %v2170, 16
      %v2206 = vor.u32 %v2203, %v2204
      %v2208 = vshrl.u32 %v2171, 16
      %v2210 = vrot.slane %v2208, 7
      %v2211 = vshll.u32 %v2171, 16
      %v2213 = vor.u32 %v2210, %v2211
      %v2215 = vshrl.u32 %v2172, 16
      %v2217 = vrot.slane %v2215, 7
      %v2218 = vshll.u32 %v2172, 16
      %v2220 = vor.u32 %v2217, %v2218
      %v2222 = vshrl.u32 %v2173, 16
      %v2224 = vrot.slane %v2222, 7
      %v2225 = vshll.u32 %v2173, 16
      %v2227 = vor.u32 %v2224, %v2225
      %v2229 = vshrl.u32 %v2174, 16
      %v2231 = vrot.slane %v2229, 7
      %v2232 = vshll.u32 %v2174, 16
      %v2234 = vor.u32 %v2231, %v2232
      %v2236 = vshrl.u32 %v2175, 16
      %v2238 = vrot.slane %v2236, 7
      %v2239 = vshll.u32 %v2175, 16
      %v2241 = vor.u32 %v2238, %v2239
      %v2243 = vshrl.u32 %v2176, 16
      %v2245 = vrot.slane %v2243, 7
      %v2246 = vshll.u32 %v2176, 16
      %v2248 = vor.u32 %v2245, %v2246
      %v2250 = vshrl.u32 %v2177, 16
      %v2252 = vrot.slane %v2250, 7
      %v2253 = vshll.u32 %v2177, 16
      %v2255 = vor.u32 %v2252, %v2253
      %v2257 = vshrl.u32 %v2178, 16
      %v2259 = vrot.slane %v2257, 7
      %v2260 = vshll.u32 %v2178, 16
      %v2262 = vor.u32 %v2259, %v2260
      %v2264 = vshrl.u32 %v2179, 16
      %v2266 = vrot.slane %v2264, 7
      %v2267 = vshll.u32 %v2179, 16
      %v2269 = vor.u32 %v2266, %v2267
      %v2271 = vshrl.u32 %v2180, 16
      %v2273 = vrot.slane %v2271, 7
      %v2274 = vshll.u32 %v2180, 16
      %v2276 = vor.u32 %v2273, %v2274
      %v2278 = vshrl.u32 %v2181, 16
      %v2280 = vrot.slane %v2278, 7
      %v2281 = vshll.u32 %v2181, 16
      %v2283 = vor.u32 %v2280, %v2281
      %v2285 = vshrl.u32 %v2182, 16
      %v2287 = vrot.slane %v2285, 7
      %v2288 = vshll.u32 %v2182, 16
      %v2290 = vor.u32 %v2287, %v2288
      %v2292 = vshrl.u32 %v2183, 16
      %v2294 = vrot.slane %v2292, 7
      %v2295 = vshll.u32 %v2183, 16
      %v2297 = vor.u32 %v2294, %v2295
      %v2299 = vshrl.u32 %v2184, 16
      %v2301 = vrot.slane %v2299, 7
      %v2302 = vshll.u32 %v2184, 16
      %v2304 = vor.u32 %v2301, %v2302
      %v2306 = vshrl.u32 %v2185, 16
      %v2308 = vrot.slane %v2306, 7
      %v2309 = vshll.u32 %v2185, 16
      %v2311 = vor.u32 %v2308, %v2309
      %v2348 = vsel %vm1164, 0, %v2192
      %v2349 = vsel %vm1164, 0, %v2199
      %v2350 = vsel %vm1164, 0, %v2206
      %v2351 = vsel %vm1164, 0, %v2213
      %v2352 = vsel %vm1164, 0, %v2220
      %v2353 = vsel %vm1164, 0, %v2227
      %v2354 = vsel %vm1164, 0, %v2234
      %v2355 = vsel %vm1164, 0, %v2241
      %v2356 = vsel %vm1164, 0, %v2248
      %v2357 = vsel %vm1164, 0, %v2255
      %v2358 = vsel %vm1164, 0, %v2262
      %v2359 = vsel %vm1164, 0, %v2269
      %v2360 = vsel %vm1164, 0, %v2276
      %v2361 = vsel %vm1164, 0, %v2283
      %v2362 = vsel %vm1164, 0, %v2290
      %v2363 = vsel %vm1164, 0, %v2297
      %v2364 = vsel %vm1164, 0, %v2304
      %v2365 = vsel %vm1164, 0, %v2311
      %v2366 = vsel %vm1164, %v2189, 0
      %v2367 = vsel %vm1164, %v2196, 0
      %v2368 = vsel %vm1164, %v2203, 0
      %v2369 = vsel %vm1164, %v2210, 0
      %v2370 = vsel %vm1164, %v2217, 0
      %v2371 = vsel %vm1164, %v2224, 0
      %v2372 = vsel %vm1164, %v2231, 0
      %v2373 = vsel %vm1164, %v2238, 0
      %v2374 = vsel %vm1164, %v2245, 0
      %v2375 = vsel %vm1164, %v2252, 0
      %v2376 = vsel %vm1164, %v2259, 0
      %v2377 = vsel %vm1164, %v2266, 0
      %v2378 = vsel %vm1164, %v2273, 0
      %v2379 = vsel %vm1164, %v2280, 0
      %v2380 = vsel %vm1164, %v2287, 0
      %v2381 = vsel %vm1164, %v2294, 0
      %v2382 = vsel %vm1164, %v2301, 0
      %v2383 = vsel %vm1164, %v2308, 0
      %v2385 = vshrl.u32 %v2348, 16
      %v2387 = vshll.u32 %v2348, 16
      %v2389 = vrot.slane %v2387, 1
      %v2390 = vor.u32 %v2385, %v2389
      %v2392 = vshll.u32 %v2366, 16
      %v2394 = vrot.slane %v2392, 1
      %v2395 = vsel %vm1201, %v2390, %v2394
      %v2397 = vshrl.u32 %v2349, 16
      %v2399 = vshll.u32 %v2349, 16
      %v2401 = vrot.slane %v2399, 1
      %v2402 = vor.u32 %v2397, %v2401
      %v2404 = vshll.u32 %v2367, 16
      %v2406 = vrot.slane %v2404, 1
      %v2407 = vsel %vm1201, %v2402, %v2406
      %v2409 = vshrl.u32 %v2350, 16
      %v2411 = vshll.u32 %v2350, 16
      %v2413 = vrot.slane %v2411, 1
      %v2414 = vor.u32 %v2409, %v2413
      %v2416 = vshll.u32 %v2368, 16
      %v2418 = vrot.slane %v2416, 1
      %v2419 = vsel %vm1201, %v2414, %v2418
      %v2421 = vshrl.u32 %v2351, 16
      %v2423 = vshll.u32 %v2351, 16
      %v2425 = vrot.slane %v2423, 1
      %v2426 = vor.u32 %v2421, %v2425
      %v2428 = vshll.u32 %v2369, 16
      %v2430 = vrot.slane %v2428, 1
      %v2431 = vsel %vm1201, %v2426, %v2430
      %v2433 = vshrl.u32 %v2352, 16
      %v2435 = vshll.u32 %v2352, 16
      %v2437 = vrot.slane %v2435, 1
      %v2438 = vor.u32 %v2433, %v2437
      %v2440 = vshll.u32 %v2370, 16
      %v2442 = vrot.slane %v2440, 1
      %v2443 = vsel %vm1201, %v2438, %v2442
      %v2445 = vshrl.u32 %v2353, 16
      %v2447 = vshll.u32 %v2353, 16
      %v2449 = vrot.slane %v2447, 1
      %v2450 = vor.u32 %v2445, %v2449
      %v2452 = vshll.u32 %v2371, 16
      %v2454 = vrot.slane %v2452, 1
      %v2455 = vsel %vm1201, %v2450, %v2454
      %v2457 = vshrl.u32 %v2354, 16
      %v2459 = vshll.u32 %v2354, 16
      %v2461 = vrot.slane %v2459, 1
      %v2462 = vor.u32 %v2457, %v2461
      %v2464 = vshll.u32 %v2372, 16
      %v2466 = vrot.slane %v2464, 1
      %v2467 = vsel %vm1201, %v2462, %v2466
      %v2469 = vshrl.u32 %v2355, 16
      %v2471 = vshll.u32 %v2355, 16
      %v2473 = vrot.slane %v2471, 1
      %v2474 = vor.u32 %v2469, %v2473
      %v2476 = vshll.u32 %v2373, 16
      %v2478 = vrot.slane %v2476, 1
      %v2479 = vsel %vm1201, %v2474, %v2478
      %v2481 = vshrl.u32 %v2356, 16
      %v2483 = vshll.u32 %v2356, 16
      %v2485 = vrot.slane %v2483, 1
      %v2486 = vor.u32 %v2481, %v2485
      %v2488 = vshll.u32 %v2374, 16
      %v2490 = vrot.slane %v2488, 1
      %v2491 = vsel %vm1201, %v2486, %v2490
      %v2493 = vshrl.u32 %v2357, 16
      %v2495 = vshll.u32 %v2357, 16
      %v2497 = vrot.slane %v2495, 1
      %v2498 = vor.u32 %v2493, %v2497
      %v2500 = vshll.u32 %v2375, 16
      %v2502 = vrot.slane %v2500, 1
      %v2503 = vsel %vm1201, %v2498, %v2502
      %v2505 = vshrl.u32 %v2358, 16
      %v2507 = vshll.u32 %v2358, 16
      %v2509 = vrot.slane %v2507, 1
      %v2510 = vor.u32 %v2505, %v2509
      %v2512 = vshll.u32 %v2376, 16
      %v2514 = vrot.slane %v2512, 1
      %v2515 = vsel %vm1201, %v2510, %v2514
      %v2517 = vshrl.u32 %v2359, 16
      %v2519 = vshll.u32 %v2359, 16
      %v2521 = vrot.slane %v2519, 1
      %v2522 = vor.u32 %v2517, %v2521
      %v2524 = vshll.u32 %v2377, 16
      %v2526 = vrot.slane %v2524, 1
      %v2527 = vsel %vm1201, %v2522, %v2526
      %v2529 = vshrl.u32 %v2360, 16
      %v2531 = vshll.u32 %v2360, 16
      %v2533 = vrot.slane %v2531, 1
      %v2534 = vor.u32 %v2529, %v2533
      %v2536 = vshll.u32 %v2378, 16
      %v2538 = vrot.slane %v2536, 1
      %v2539 = vsel %vm1201, %v2534, %v2538
      %v2541 = vshrl.u32 %v2361, 16
      %v2543 = vshll.u32 %v2361, 16
      %v2545 = vrot.slane %v2543, 1
      %v2546 = vor.u32 %v2541, %v2545
      %v2548 = vshll.u32 %v2379, 16
      %v2550 = vrot.slane %v2548, 1
      %v2551 = vsel %vm1201, %v2546, %v2550
      %v2553 = vshrl.u32 %v2362, 16
      %v2555 = vshll.u32 %v2362, 16
      %v2557 = vrot.slane %v2555, 1
      %v2558 = vor.u32 %v2553, %v2557
      %v2560 = vshll.u32 %v2380, 16
      %v2562 = vrot.slane %v2560, 1
      %v2563 = vsel %vm1201, %v2558, %v2562
      %v2565 = vshrl.u32 %v2363, 16
      %v2567 = vshll.u32 %v2363, 16
      %v2569 = vrot.slane %v2567, 1
      %v2570 = vor.u32 %v2565, %v2569
      %v2572 = vshll.u32 %v2381, 16
      %v2574 = vrot.slane %v2572, 1
      %v2575 = vsel %vm1201, %v2570, %v2574
      %2576 = vrot.lane.b32.xlu0 %v2395, 4
      %v2577 = vpop.permute.xlu0 %2576
      %2578 = vrot.lane.b32.xlu0 %v2407, 4
      %v2579 = vpop.permute.xlu0 %2578
      %2580 = vrot.lane.b32.xlu0 %v2419, 4
      %v2581 = vpop.permute.xlu0 %2580
      %2582 = vrot.lane.b32.xlu0 %v2431, 4
      %v2583 = vpop.permute.xlu0 %2582
      %2584 = vrot.lane.b32.xlu0 %v2443, 4
      %v2585 = vpop.permute.xlu0 %2584
      %2586 = vrot.lane.b32.xlu0 %v2455, 4
      %v2587 = vpop.permute.xlu0 %2586
      %2588 = vrot.lane.b32.xlu0 %v2467, 4
      %v2589 = vpop.permute.xlu0 %2588
      %2590 = vrot.lane.b32.xlu0 %v2479, 4
      %v2591 = vpop.permute.xlu0 %2590
      %2592 = vrot.lane.b32.xlu0 %v2491, 4
      %v2593 = vpop.permute.xlu0 %2592
      %2594 = vrot.lane.b32.xlu0 %v2503, 4
      %v2595 = vpop.permute.xlu0 %2594
      %2596 = vrot.lane.b32.xlu0 %v2515, 4
      %v2597 = vpop.permute.xlu0 %2596
      %2598 = vrot.lane.b32.xlu0 %v2527, 4
      %v2599 = vpop.permute.xlu0 %2598
      %2600 = vrot.lane.b32.xlu0 %v2539, 4
      %v2601 = vpop.permute.xlu0 %2600
      %2602 = vrot.lane.b32.xlu0 %v2551, 4
      %v2603 = vpop.permute.xlu0 %2602
      %2604 = vrot.lane.b32.xlu0 %v2563, 4
      %v2605 = vpop.permute.xlu0 %2604
      %2606 = vrot.lane.b32.xlu0 %v2575, 4
      %v2607 = vpop.permute.xlu0 %2606
      %v2640 = vrot.slane %v2348, 1
      %v2641 = vrot.slane %v2366, 1
      %v2642 = vsel %vm1458, %v2640, %v2641
      %v2643 = vrot.slane %v2349, 1
      %v2644 = vrot.slane %v2367, 1
      %v2645 = vsel %vm1458, %v2643, %v2644
      %v2646 = vrot.slane %v2350, 1
      %v2647 = vrot.slane %v2368, 1
      %v2648 = vsel %vm1458, %v2646, %v2647
      %v2649 = vrot.slane %v2351, 1
      %v2650 = vrot.slane %v2369, 1
      %v2651 = vsel %vm1458, %v2649, %v2650
      %v2652 = vrot.slane %v2352, 1
      %v2653 = vrot.slane %v2370, 1
      %v2654 = vsel %vm1458, %v2652, %v2653
      %v2655 = vrot.slane %v2353, 1
      %v2656 = vrot.slane %v2371, 1
      %v2657 = vsel %vm1458, %v2655, %v2656
      %v2658 = vrot.slane %v2354, 1
      %v2659 = vrot.slane %v2372, 1
      %v2660 = vsel %vm1458, %v2658, %v2659
      %v2661 = vrot.slane %v2355, 1
      %v2662 = vrot.slane %v2373, 1
      %v2663 = vsel %vm1458, %v2661, %v2662
      %v2664 = vrot.slane %v2356, 1
      %v2665 = vrot.slane %v2374, 1
      %v2666 = vsel %vm1458, %v2664, %v2665
      %v2667 = vrot.slane %v2357, 1
      %v2668 = vrot.slane %v2375, 1
      %v2669 = vsel %vm1458, %v2667, %v2668
      %v2670 = vrot.slane %v2358, 1
      %v2671 = vrot.slane %v2376, 1
      %v2672 = vsel %vm1458, %v2670, %v2671
      %v2673 = vrot.slane %v2359, 1
      %v2674 = vrot.slane %v2377, 1
      %v2675 = vsel %vm1458, %v2673, %v2674
      %v2676 = vrot.slane %v2360, 1
      %v2677 = vrot.slane %v2378, 1
      %v2678 = vsel %vm1458, %v2676, %v2677
      %v2679 = vrot.slane %v2361, 1
      %v2680 = vrot.slane %v2379, 1
      %v2681 = vsel %vm1458, %v2679, %v2680
      %v2682 = vrot.slane %v2362, 1
      %v2683 = vrot.slane %v2380, 1
      %v2684 = vsel %vm1458, %v2682, %v2683
      %v2685 = vrot.slane %v2363, 1
      %v2686 = vrot.slane %v2381, 1
      %v2687 = vsel %vm1458, %v2685, %v2686
      %2688 = vrot.lane.b32.xlu0 %v2642, 8
      %v2689 = vpop.permute.xlu0 %2688
      %2690 = vrot.lane.b32.xlu0 %v2645, 8
      %v2691 = vpop.permute.xlu0 %2690
      %2692 = vrot.lane.b32.xlu0 %v2648, 8
      %v2693 = vpop.permute.xlu0 %2692
      %2694 = vrot.lane.b32.xlu0 %v2651, 8
      %v2695 = vpop.permute.xlu0 %2694
      %2696 = vrot.lane.b32.xlu0 %v2654, 8
      %v2697 = vpop.permute.xlu0 %2696
      %2698 = vrot.lane.b32.xlu0 %v2657, 8
      %v2699 = vpop.permute.xlu0 %2698
      %2700 = vrot.lane.b32.xlu0 %v2660, 8
      %v2701 = vpop.permute.xlu0 %2700
      %2702 = vrot.lane.b32.xlu0 %v2663, 8
      %v2703 = vpop.permute.xlu0 %2702
      %2704 = vrot.lane.b32.xlu0 %v2666, 8
      %v2705 = vpop.permute.xlu0 %2704
      %2706 = vrot.lane.b32.xlu0 %v2669, 8
      %v2707 = vpop.permute.xlu0 %2706
      %2708 = vrot.lane.b32.xlu0 %v2672, 8
      %v2709 = vpop.permute.xlu0 %2708
      %2710 = vrot.lane.b32.xlu0 %v2675, 8
      %v2711 = vpop.permute.xlu0 %2710
      %2712 = vrot.lane.b32.xlu0 %v2678, 8
      %v2713 = vpop.permute.xlu0 %2712
      %2714 = vrot.lane.b32.xlu0 %v2681, 8
      %v2715 = vpop.permute.xlu0 %2714
      %2716 = vrot.lane.b32.xlu0 %v2684, 8
      %v2717 = vpop.permute.xlu0 %2716
      %2718 = vrot.lane.b32.xlu0 %v2687, 8
      %v2719 = vpop.permute.xlu0 %2718
      %v2721 = vsel %vm1539, %v2348, %v2577
      %v2723 = vsel %vm1539, %v2349, %v2579
      %v2725 = vsel %vm1539, %v2350, %v2581
      %v2727 = vsel %vm1539, %v2351, %v2583
      %v2729 = vsel %vm1539, %v2352, %v2585
      %v2731 = vsel %vm1539, %v2353, %v2587
      %v2733 = vsel %vm1539, %v2354, %v2589
      %v2735 = vsel %vm1539, %v2355, %v2591
      %v2737 = vsel %vm1539, %v2356, %v2593
      %v2739 = vsel %vm1539, %v2357, %v2595
      %v2741 = vsel %vm1539, %v2358, %v2597
      %v2743 = vsel %vm1539, %v2359, %v2599
      %v2745 = vsel %vm1539, %v2360, %v2601
      %v2747 = vsel %vm1539, %v2361, %v2603
      %v2749 = vsel %vm1539, %v2362, %v2605
      %v2751 = vsel %vm1539, %v2363, %v2607
      %v2753 = vsel %vm1572, %v2721, %v2689
      %v2755 = vsel %vm1572, %v2723, %v2691
      %v2757 = vsel %vm1572, %v2725, %v2693
      %v2759 = vsel %vm1572, %v2727, %v2695
      %v2761 = vsel %vm1572, %v2729, %v2697
      %v2763 = vsel %vm1572, %v2731, %v2699
      %v2765 = vsel %vm1572, %v2733, %v2701
      %v2767 = vsel %vm1572, %v2735, %v2703
      %v2769 = vsel %vm1572, %v2737, %v2705
      %v2771 = vsel %vm1572, %v2739, %v2707
      %v2773 = vsel %vm1572, %v2741, %v2709
      %v2775 = vsel %vm1572, %v2743, %v2711
      %v2777 = vsel %vm1572, %v2745, %v2713
      %v2779 = vsel %vm1572, %v2747, %v2715
      %v2781 = vsel %vm1572, %v2749, %v2717
      %v2783 = vsel %vm1572, %v2751, %v2719
      %v2784 = vld [vmem:[%s709] sm:$0xf]
      %v2785 = vld [vmem:[%s709 + $0x4] sm:$0x3]
      %v2788 = vunpack.c.l.b16 %v2784
      %v2789 = vunpack.c.l.b16 %v2785
      %v2790 = vpack.c.b16 %v2789, %v2788
      %v2791 = vsel %vm1640, %v2753, 0
      %v2793 = vsel %vm1640, %v2755, 0
      %v2795 = vsel %vm1640, %v2757, 0
      %v2797 = vsel %vm1640, %v2759, 0
      %v2799 = vsel %vm1640, %v2761, 0
      %v2801 = vsel %vm1640, %v2763, 0
      %v2803 = vsel %vm1640, %v2765, 0
      %v2805 = vsel %vm1640, %v2767, 0
      %v2807 = vsel %vm1640, %v2769, 0
      %v2809 = vsel %vm1640, %v2771, 0
      %v2811 = vsel %vm1640, %v2773, 0
      %v2813 = vsel %vm1640, %v2775, 0
      %v2815 = vsel %vm1640, %v2777, 0
      %v2817 = vsel %vm1640, %v2779, 0
      %v2819 = vsel %vm1640, %v2781, 0
      %v2821 = vsel %vm1640, %v2783, 0
      %v2824 = vsel %vm1673, %v2790, 0
      %2826 = vmatpush.bf16.msra.mxu0 0
      %2827 = vmatpush.bf16.msra.mxu0 0
      %2828 = vmatpush.bf16.msra.mxu0 0
      %2829 = vmatpush.bf16.msra.mxu0 0
      %2830 = vmatpush.bf16.msra.mxu0 0
      %2831 = vmatpush.bf16.msra.mxu0 0
      %2832 = vmatpush.bf16.msra.mxu0 0
      %2833 = vmatpush.bf16.msra.mxu0 %v2824
      %2834 = vmatmul.bf16.gmra.mxu0 %v2791
      %v2835 = vpop.f32.mrf.mxu0
      %v2836 = vadd.f32 0.0, %v2835
      %v2837 = vpop.f32.mrf.mxu0
      %v2838 = vadd.f32 0.0, %v2837
      %2839 = vmatmul.bf16.gmra.mxu0 %v2793
      %v2840 = vpop.f32.mrf.mxu0
      %v2841 = vadd.f32 0.0, %v2840
      %v2842 = vpop.f32.mrf.mxu0
      %v2843 = vadd.f32 0.0, %v2842
      %2844 = vmatmul.bf16.gmra.mxu0 %v2795
      %v2845 = vpop.f32.mrf.mxu0
      %v2846 = vadd.f32 0.0, %v2845
      %v2847 = vpop.f32.mrf.mxu0
      %v2848 = vadd.f32 0.0, %v2847
      %2849 = vmatmul.bf16.gmra.mxu0 %v2797
      %v2850 = vpop.f32.mrf.mxu0
      %v2851 = vadd.f32 0.0, %v2850
      %v2852 = vpop.f32.mrf.mxu0
      %v2853 = vadd.f32 0.0, %v2852
      %2854 = vmatmul.bf16.gmra.mxu0 %v2799
      %v2855 = vpop.f32.mrf.mxu0
      %v2856 = vadd.f32 0.0, %v2855
      %v2857 = vpop.f32.mrf.mxu0
      %v2858 = vadd.f32 0.0, %v2857
      %2859 = vmatmul.bf16.gmra.mxu0 %v2801
      %v2860 = vpop.f32.mrf.mxu0
      %v2861 = vadd.f32 0.0, %v2860
      %v2862 = vpop.f32.mrf.mxu0
      %v2863 = vadd.f32 0.0, %v2862
      %2864 = vmatmul.bf16.gmra.mxu0 %v2803
      %v2865 = vpop.f32.mrf.mxu0
      %v2866 = vadd.f32 0.0, %v2865
      %v2867 = vpop.f32.mrf.mxu0
      %v2868 = vadd.f32 0.0, %v2867
      %2869 = vmatmul.bf16.gmra.mxu0 %v2805
      %v2870 = vpop.f32.mrf.mxu0
      %v2871 = vadd.f32 0.0, %v2870
      %v2872 = vpop.f32.mrf.mxu0
      %v2873 = vadd.f32 0.0, %v2872
      %2874 = vmatmul.bf16.gmra.mxu0 %v2807
      %v2875 = vpop.f32.mrf.mxu0
      %v2876 = vadd.f32 0.0, %v2875
      %v2877 = vpop.f32.mrf.mxu0
      %v2878 = vadd.f32 0.0, %v2877
      %2879 = vmatmul.bf16.gmra.mxu0 %v2809
      %v2880 = vpop.f32.mrf.mxu0
      %v2881 = vadd.f32 0.0, %v2880
      %v2882 = vpop.f32.mrf.mxu0
      %v2883 = vadd.f32 0.0, %v2882
      %2884 = vmatmul.bf16.gmra.mxu0 %v2811
      %v2885 = vpop.f32.mrf.mxu0
      %v2886 = vadd.f32 0.0, %v2885
      %v2887 = vpop.f32.mrf.mxu0
      %v2888 = vadd.f32 0.0, %v2887
      %2889 = vmatmul.bf16.gmra.mxu0 %v2813
      %v2890 = vpop.f32.mrf.mxu0
      %v2891 = vadd.f32 0.0, %v2890
      %v2892 = vpop.f32.mrf.mxu0
      %v2893 = vadd.f32 0.0, %v2892
      %2894 = vmatmul.bf16.gmra.mxu0 %v2815
      %v2895 = vpop.f32.mrf.mxu0
      %v2896 = vadd.f32 0.0, %v2895
      %v2897 = vpop.f32.mrf.mxu0
      %v2898 = vadd.f32 0.0, %v2897
      %2899 = vmatmul.bf16.gmra.mxu0 %v2817
      %v2900 = vpop.f32.mrf.mxu0
      %v2901 = vadd.f32 0.0, %v2900
      %v2902 = vpop.f32.mrf.mxu0
      %v2903 = vadd.f32 0.0, %v2902
      %2904 = vmatmul.bf16.gmra.mxu0 %v2819
      %v2905 = vpop.f32.mrf.mxu0
      %v2906 = vadd.f32 0.0, %v2905
      %v2907 = vpop.f32.mrf.mxu0
      %v2908 = vadd.f32 0.0, %v2907
      %2909 = vmatmul.bf16.gmra.mxu0 %v2821
      %v2910 = vpop.f32.mrf.mxu0
      %v2911 = vadd.f32 0.0, %v2910
      %v2912 = vpop.f32.mrf.mxu0
      %v2913 = vadd.f32 0.0, %v2912
      %2914 = vdwg.mxu0
      %v2915 = vadd.f32 %v1992, %v2836
      %v2916 = vadd.f32 %v1993, %v2838
      %v2917 = vadd.f32 %v1994, %v2841
      %v2918 = vadd.f32 %v1995, %v2843
      %v2919 = vadd.f32 %v1996, %v2846
      %v2920 = vadd.f32 %v1997, %v2848
      %v2921 = vadd.f32 %v1998, %v2851
      %v2922 = vadd.f32 %v1999, %v2853
      %v2923 = vadd.f32 %v2000, %v2856
      %v2924 = vadd.f32 %v2001, %v2858
      %v2925 = vadd.f32 %v2002, %v2861
      %v2926 = vadd.f32 %v2003, %v2863
      %v2927 = vadd.f32 %v2004, %v2866
      %v2928 = vadd.f32 %v2005, %v2868
      %v2929 = vadd.f32 %v2006, %v2871
      %v2930 = vadd.f32 %v2007, %v2873
      %v2931 = vadd.f32 %v2008, %v2876
      %v2932 = vadd.f32 %v2009, %v2878
      %v2933 = vadd.f32 %v2010, %v2881
      %v2934 = vadd.f32 %v2011, %v2883
      %v2935 = vadd.f32 %v2012, %v2886
      %v2936 = vadd.f32 %v2013, %v2888
      %v2937 = vadd.f32 %v2014, %v2891
      %v2938 = vadd.f32 %v2015, %v2893
      %v2939 = vadd.f32 %v2016, %v2896
      %v2940 = vadd.f32 %v2017, %v2898
      %v2941 = vadd.f32 %v2018, %v2901
      %v2942 = vadd.f32 %v2019, %v2903
      %v2943 = vadd.f32 %v2020, %v2906
      %v2944 = vadd.f32 %v2021, %v2908
      %v2945 = vadd.f32 %v2022, %v2911
      %v2946 = vadd.f32 %v2023, %v2913
      %v2948 = vshrl.u32 %v2364, 16
      %v2950 = vshll.u32 %v2364, 16
      %v2952 = vrot.slane %v2950, 1
      %v2953 = vor.u32 %v2948, %v2952
      %v2955 = vshll.u32 %v2382, 16
      %v2957 = vrot.slane %v2955, 1
      %v2958 = vsel %vm1201, %v2953, %v2957
      %2959 = vrot.lane.b32.xlu0 %v2958, 4
      %v2960 = vpop.permute.xlu0 %2959
      %v2963 = vrot.slane %v2364, 1
      %v2964 = vrot.slane %v2382, 1
      %v2965 = vsel %vm1458, %v2963, %v2964
      %2966 = vrot.lane.b32.xlu0 %v2965, 8
      %v2967 = vpop.permute.xlu0 %2966
      %v2969 = vsel %vm1539, %v2364, %v2960
      %v2971 = vsel %vm1572, %v2969, %v2967
      %s2972 = scalar_lea.vmem %s709, 8
      %v2973 = vld [vmem:[%s2972] sm:$0xf]
      %v2974 = vld [vmem:[%s2972 + $0x4] sm:$0x3]
      %v2977 = vunpack.c.l.b16 %v2973
      %v2978 = vunpack.c.l.b16 %v2974
      %v2979 = vpack.c.b16 %v2978, %v2977
      %v2980 = vsel %vm1640, %v2971, 0
      %v2983 = vsel %vm1673, %v2979, 0
      %2985 = vmatpush.bf16.msra.mxu0 0
      %2986 = vmatpush.bf16.msra.mxu0 0
      %2987 = vmatpush.bf16.msra.mxu0 0
      %2988 = vmatpush.bf16.msra.mxu0 0
      %2989 = vmatpush.bf16.msra.mxu0 0
      %2990 = vmatpush.bf16.msra.mxu0 0
      %2991 = vmatpush.bf16.msra.mxu0 0
      %2992 = vmatpush.bf16.msra.mxu0 %v2983
      %2993 = vmatmul.bf16.gmra.mxu0 %v2793
      %v2994 = vpop.f32.mrf.mxu0
      %v2995 = vadd.f32 0.0, %v2994
      %v2996 = vpop.f32.mrf.mxu0
      %v2997 = vadd.f32 0.0, %v2996
      %2998 = vmatmul.bf16.gmra.mxu0 %v2795
      %v2999 = vpop.f32.mrf.mxu0
      %v3000 = vadd.f32 0.0, %v2999
      %v3001 = vpop.f32.mrf.mxu0
      %v3002 = vadd.f32 0.0, %v3001
      %3003 = vmatmul.bf16.gmra.mxu0 %v2797
      %v3004 = vpop.f32.mrf.mxu0
      %v3005 = vadd.f32 0.0, %v3004
      %v3006 = vpop.f32.mrf.mxu0
      %v3007 = vadd.f32 0.0, %v3006
      %3008 = vmatmul.bf16.gmra.mxu0 %v2799
      %v3009 = vpop.f32.mrf.mxu0
      %v3010 = vadd.f32 0.0, %v3009
      %v3011 = vpop.f32.mrf.mxu0
      %v3012 = vadd.f32 0.0, %v3011
      %3013 = vmatmul.bf16.gmra.mxu0 %v2801
      %v3014 = vpop.f32.mrf.mxu0
      %v3015 = vadd.f32 0.0, %v3014
      %v3016 = vpop.f32.mrf.mxu0
      %v3017 = vadd.f32 0.0, %v3016
      %3018 = vmatmul.bf16.gmra.mxu0 %v2803
      %v3019 = vpop.f32.mrf.mxu0
      %v3020 = vadd.f32 0.0, %v3019
      %v3021 = vpop.f32.mrf.mxu0
      %v3022 = vadd.f32 0.0, %v3021
      %3023 = vmatmul.bf16.gmra.mxu0 %v2805
      %v3024 = vpop.f32.mrf.mxu0
      %v3025 = vadd.f32 0.0, %v3024
      %v3026 = vpop.f32.mrf.mxu0
      %v3027 = vadd.f32 0.0, %v3026
      %3028 = vmatmul.bf16.gmra.mxu0 %v2807
      %v3029 = vpop.f32.mrf.mxu0
      %v3030 = vadd.f32 0.0, %v3029
      %v3031 = vpop.f32.mrf.mxu0
      %v3032 = vadd.f32 0.0, %v3031
      %3033 = vmatmul.bf16.gmra.mxu0 %v2809
      %v3034 = vpop.f32.mrf.mxu0
      %v3035 = vadd.f32 0.0, %v3034
      %v3036 = vpop.f32.mrf.mxu0
      %v3037 = vadd.f32 0.0, %v3036
      %3038 = vmatmul.bf16.gmra.mxu0 %v2811
      %v3039 = vpop.f32.mrf.mxu0
      %v3040 = vadd.f32 0.0, %v3039
      %v3041 = vpop.f32.mrf.mxu0
      %v3042 = vadd.f32 0.0, %v3041
      %3043 = vmatmul.bf16.gmra.mxu0 %v2813
      %v3044 = vpop.f32.mrf.mxu0
      %v3045 = vadd.f32 0.0, %v3044
      %v3046 = vpop.f32.mrf.mxu0
      %v3047 = vadd.f32 0.0, %v3046
      %3048 = vmatmul.bf16.gmra.mxu0 %v2815
      %v3049 = vpop.f32.mrf.mxu0
      %v3050 = vadd.f32 0.0, %v3049
      %v3051 = vpop.f32.mrf.mxu0
      %v3052 = vadd.f32 0.0, %v3051
      %3053 = vmatmul.bf16.gmra.mxu0 %v2817
      %v3054 = vpop.f32.mrf.mxu0
      %v3055 = vadd.f32 0.0, %v3054
      %v3056 = vpop.f32.mrf.mxu0
      %v3057 = vadd.f32 0.0, %v3056
      %3058 = vmatmul.bf16.gmra.mxu0 %v2819
      %v3059 = vpop.f32.mrf.mxu0
      %v3060 = vadd.f32 0.0, %v3059
      %v3061 = vpop.f32.mrf.mxu0
      %v3062 = vadd.f32 0.0, %v3061
      %3063 = vmatmul.bf16.gmra.mxu0 %v2821
      %v3064 = vpop.f32.mrf.mxu0
      %v3065 = vadd.f32 0.0, %v3064
      %v3066 = vpop.f32.mrf.mxu0
      %v3067 = vadd.f32 0.0, %v3066
      %3068 = vmatmul.bf16.gmra.mxu0 %v2980
      %v3069 = vpop.f32.mrf.mxu0
      %v3070 = vadd.f32 0.0, %v3069
      %v3071 = vpop.f32.mrf.mxu0
      %v3072 = vadd.f32 0.0, %v3071
      %3073 = vdwg.mxu0
      %v3074 = vadd.f32 %v2915, %v2995
      %v3075 = vadd.f32 %v2916, %v2997
      %v3076 = vadd.f32 %v2917, %v3000
      %v3077 = vadd.f32 %v2918, %v3002
      %v3078 = vadd.f32 %v2919, %v3005
      %v3079 = vadd.f32 %v2920, %v3007
      %v3080 = vadd.f32 %v2921, %v3010
      %v3081 = vadd.f32 %v2922, %v3012
      %v3082 = vadd.f32 %v2923, %v3015
      %v3083 = vadd.f32 %v2924, %v3017
      %v3084 = vadd.f32 %v2925, %v3020
      %v3085 = vadd.f32 %v2926, %v3022
      %v3086 = vadd.f32 %v2927, %v3025
      %v3087 = vadd.f32 %v2928, %v3027
      %v3088 = vadd.f32 %v2929, %v3030
      %v3089 = vadd.f32 %v2930, %v3032
      %v3090 = vadd.f32 %v2931, %v3035
      %v3091 = vadd.f32 %v2932, %v3037
      %v3092 = vadd.f32 %v2933, %v3040
      %v3093 = vadd.f32 %v2934, %v3042
      %v3094 = vadd.f32 %v2935, %v3045
      %v3095 = vadd.f32 %v2936, %v3047
      %v3096 = vadd.f32 %v2937, %v3050
      %v3097 = vadd.f32 %v2938, %v3052
      %v3098 = vadd.f32 %v2939, %v3055
      %v3099 = vadd.f32 %v2940, %v3057
      %v3100 = vadd.f32 %v2941, %v3060
      %v3101 = vadd.f32 %v2942, %v3062
      %v3102 = vadd.f32 %v2943, %v3065
      %v3103 = vadd.f32 %v2944, %v3067
      %v3104 = vadd.f32 %v2945, %v3070
      %v3105 = vadd.f32 %v2946, %v3072
      %v3107 = vshrl.u32 %v2365, 16
      %v3109 = vshll.u32 %v2365, 16
      %v3111 = vrot.slane %v3109, 1
      %v3112 = vor.u32 %v3107, %v3111
      %v3114 = vshll.u32 %v2383, 16
      %v3116 = vrot.slane %v3114, 1
      %v3117 = vsel %vm1201, %v3112, %v3116
      %3118 = vrot.lane.b32.xlu0 %v3117, 4
      %v3119 = vpop.permute.xlu0 %3118
      %v3122 = vrot.slane %v2365, 1
      %v3123 = vrot.slane %v2383, 1
      %v3124 = vsel %vm1458, %v3122, %v3123
      %3125 = vrot.lane.b32.xlu0 %v3124, 8
      %v3126 = vpop.permute.xlu0 %3125
      %v3128 = vsel %vm1539, %v2365, %v3119
      %v3130 = vsel %vm1572, %v3128, %v3126
      %s3131 = scalar_lea.vmem %s709, 16
      %v3132 = vld [vmem:[%s3131] sm:$0xf]
      %v3133 = vld [vmem:[%s3131 + $0x4] sm:$0x3]
      %v3136 = vunpack.c.l.b16 %v3132
      %v3137 = vunpack.c.l.b16 %v3133
      %v3138 = vpack.c.b16 %v3137, %v3136
      %v3139 = vsel %vm1640, %v3130, 0
      %v3142 = vsel %vm1673, %v3138, 0
      %3144 = vmatpush.bf16.msra.mxu0 0
      %3145 = vmatpush.bf16.msra.mxu0 0
      %3146 = vmatpush.bf16.msra.mxu0 0
      %3147 = vmatpush.bf16.msra.mxu0 0
      %3148 = vmatpush.bf16.msra.mxu0 0
      %3149 = vmatpush.bf16.msra.mxu0 0
      %3150 = vmatpush.bf16.msra.mxu0 0
      %3151 = vmatpush.bf16.msra.mxu0 %v3142
      %3152 = vmatmul.bf16.gmra.mxu0 %v2795
      %v3153 = vpop.f32.mrf.mxu0
      %v3154 = vadd.f32 0.0, %v3153
      %v3155 = vpop.f32.mrf.mxu0
      %v3156 = vadd.f32 0.0, %v3155
      %3157 = vmatmul.bf16.gmra.mxu0 %v2797
      %v3158 = vpop.f32.mrf.mxu0
      %v3159 = vadd.f32 0.0, %v3158
      %v3160 = vpop.f32.mrf.mxu0
      %v3161 = vadd.f32 0.0, %v3160
      %3162 = vmatmul.bf16.gmra.mxu0 %v2799
      %v3163 = vpop.f32.mrf.mxu0
      %v3164 = vadd.f32 0.0, %v3163
      %v3165 = vpop.f32.mrf.mxu0
      %v3166 = vadd.f32 0.0, %v3165
      %3167 = vmatmul.bf16.gmra.mxu0 %v2801
      %v3168 = vpop.f32.mrf.mxu0
      %v3169 = vadd.f32 0.0, %v3168
      %v3170 = vpop.f32.mrf.mxu0
      %v3171 = vadd.f32 0.0, %v3170
      %3172 = vmatmul.bf16.gmra.mxu0 %v2803
      %v3173 = vpop.f32.mrf.mxu0
      %v3174 = vadd.f32 0.0, %v3173
      %v3175 = vpop.f32.mrf.mxu0
      %v3176 = vadd.f32 0.0, %v3175
      %3177 = vmatmul.bf16.gmra.mxu0 %v2805
      %v3178 = vpop.f32.mrf.mxu0
      %v3179 = vadd.f32 0.0, %v3178
      %v3180 = vpop.f32.mrf.mxu0
      %v3181 = vadd.f32 0.0, %v3180
      %3182 = vmatmul.bf16.gmra.mxu0 %v2807
      %v3183 = vpop.f32.mrf.mxu0
      %v3184 = vadd.f32 0.0, %v3183
      %v3185 = vpop.f32.mrf.mxu0
      %v3186 = vadd.f32 0.0, %v3185
      %3187 = vmatmul.bf16.gmra.mxu0 %v2809
      %v3188 = vpop.f32.mrf.mxu0
      %v3189 = vadd.f32 0.0, %v3188
      %v3190 = vpop.f32.mrf.mxu0
      %v3191 = vadd.f32 0.0, %v3190
      %3192 = vmatmul.bf16.gmra.mxu0 %v2811
      %v3193 = vpop.f32.mrf.mxu0
      %v3194 = vadd.f32 0.0, %v3193
      %v3195 = vpop.f32.mrf.mxu0
      %v3196 = vadd.f32 0.0, %v3195
      %3197 = vmatmul.bf16.gmra.mxu0 %v2813
      %v3198 = vpop.f32.mrf.mxu0
      %v3199 = vadd.f32 0.0, %v3198
      %v3200 = vpop.f32.mrf.mxu0
      %v3201 = vadd.f32 0.0, %v3200
      %3202 = vmatmul.bf16.gmra.mxu0 %v2815
      %v3203 = vpop.f32.mrf.mxu0
      %v3204 = vadd.f32 0.0, %v3203
      %v3205 = vpop.f32.mrf.mxu0
      %v3206 = vadd.f32 0.0, %v3205
      %3207 = vmatmul.bf16.gmra.mxu0 %v2817
      %v3208 = vpop.f32.mrf.mxu0
      %v3209 = vadd.f32 0.0, %v3208
      %v3210 = vpop.f32.mrf.mxu0
      %v3211 = vadd.f32 0.0, %v3210
      %3212 = vmatmul.bf16.gmra.mxu0 %v2819
      %v3213 = vpop.f32.mrf.mxu0
      %v3214 = vadd.f32 0.0, %v3213
      %v3215 = vpop.f32.mrf.mxu0
      %v3216 = vadd.f32 0.0, %v3215
      %3217 = vmatmul.bf16.gmra.mxu0 %v2821
      %v3218 = vpop.f32.mrf.mxu0
      %v3219 = vadd.f32 0.0, %v3218
      %v3220 = vpop.f32.mrf.mxu0
      %v3221 = vadd.f32 0.0, %v3220
      %3222 = vmatmul.bf16.gmra.mxu0 %v2980
      %v3223 = vpop.f32.mrf.mxu0
      %v3224 = vadd.f32 0.0, %v3223
      %v3225 = vpop.f32.mrf.mxu0
      %v3226 = vadd.f32 0.0, %v3225
      %3227 = vmatmul.bf16.gmra.mxu0 %v3139
      %v3228 = vpop.f32.mrf.mxu0
      %v3229 = vadd.f32 0.0, %v3228
      %v3230 = vpop.f32.mrf.mxu0
      %v3231 = vadd.f32 0.0, %v3230
      %3232 = vdwg.mxu0
      %v3233 = vadd.f32 %v3074, %v3154
      %v3234 = vadd.f32 %v3075, %v3156
      %v3235 = vadd.f32 %v3076, %v3159
      %v3236 = vadd.f32 %v3077, %v3161
      %v3237 = vadd.f32 %v3078, %v3164
      %v3238 = vadd.f32 %v3079, %v3166
      %v3239 = vadd.f32 %v3080, %v3169
      %v3240 = vadd.f32 %v3081, %v3171
      %v3241 = vadd.f32 %v3082, %v3174
      %v3242 = vadd.f32 %v3083, %v3176
      %v3243 = vadd.f32 %v3084, %v3179
      %v3244 = vadd.f32 %v3085, %v3181
      %v3245 = vadd.f32 %v3086, %v3184
      %v3246 = vadd.f32 %v3087, %v3186
      %v3247 = vadd.f32 %v3088, %v3189
      %v3248 = vadd.f32 %v3089, %v3191
      %v3249 = vadd.f32 %v3090, %v3194
      %v3250 = vadd.f32 %v3091, %v3196
      %v3251 = vadd.f32 %v3092, %v3199
      %v3252 = vadd.f32 %v3093, %v3201
      %v3253 = vadd.f32 %v3094, %v3204
      %v3254 = vadd.f32 %v3095, %v3206
      %v3255 = vadd.f32 %v3096, %v3209
      %v3256 = vadd.f32 %v3097, %v3211
      %v3257 = vadd.f32 %v3098, %v3214
      %v3258 = vadd.f32 %v3099, %v3216
      %v3259 = vadd.f32 %v3100, %v3219
      %v3260 = vadd.f32 %v3101, %v3221
      %v3261 = vadd.f32 %v3102, %v3224
      %v3262 = vadd.f32 %v3103, %v3226
      %v3263 = vadd.f32 %v3104, %v3229
      %v3264 = vadd.f32 %v3105, %v3231
      %v3265 = vld [vmem:[%s712] sm:$0x1]
      %v3267 = vperm.slane %v3265, 0
      %v3269 = vadd.f32 %v3233, %v3267
      %v3270 = vadd.f32 %v3234, %v3267
      %v3271 = vadd.f32 %v3235, %v3267
      %v3272 = vadd.f32 %v3236, %v3267
      %v3273 = vadd.f32 %v3237, %v3267
      %v3274 = vadd.f32 %v3238, %v3267
      %v3275 = vadd.f32 %v3239, %v3267
      %v3276 = vadd.f32 %v3240, %v3267
      %v3277 = vadd.f32 %v3241, %v3267
      %v3278 = vadd.f32 %v3242, %v3267
      %v3279 = vadd.f32 %v3243, %v3267
      %v3280 = vadd.f32 %v3244, %v3267
      %v3281 = vadd.f32 %v3245, %v3267
      %v3282 = vadd.f32 %v3246, %v3267
      %v3283 = vadd.f32 %v3247, %v3267
      %v3284 = vadd.f32 %v3248, %v3267
      %v3285 = vadd.f32 %v3249, %v3267
      %v3286 = vadd.f32 %v3250, %v3267
      %v3287 = vadd.f32 %v3251, %v3267
      %v3288 = vadd.f32 %v3252, %v3267
      %v3289 = vadd.f32 %v3253, %v3267
      %v3290 = vadd.f32 %v3254, %v3267
      %v3291 = vadd.f32 %v3255, %v3267
      %v3292 = vadd.f32 %v3256, %v3267
      %v3293 = vadd.f32 %v3257, %v3267
      %v3294 = vadd.f32 %v3258, %v3267
      %v3295 = vadd.f32 %v3259, %v3267
      %v3296 = vadd.f32 %v3260, %v3267
      %v3297 = vadd.f32 %v3261, %v3267
      %v3298 = vadd.f32 %v3262, %v3267
      %v3299 = vadd.f32 %v3263, %v3267
      %v3300 = vadd.f32 %v3264, %v3267
      %v3301 = vmax.f32 %v3269, 0.0
      %v3302 = vmax.f32 %v3270, 0.0
      %v3303 = vmax.f32 %v3271, 0.0
      %v3304 = vmax.f32 %v3272, 0.0
      %v3305 = vmax.f32 %v3273, 0.0
      %v3306 = vmax.f32 %v3274, 0.0
      %v3307 = vmax.f32 %v3275, 0.0
      %v3308 = vmax.f32 %v3276, 0.0
      %v3309 = vmax.f32 %v3277, 0.0
      %v3310 = vmax.f32 %v3278, 0.0
      %v3311 = vmax.f32 %v3279, 0.0
      %v3312 = vmax.f32 %v3280, 0.0
      %v3313 = vmax.f32 %v3281, 0.0
      %v3314 = vmax.f32 %v3282, 0.0
      %v3315 = vmax.f32 %v3283, 0.0
      %v3316 = vmax.f32 %v3284, 0.0
      %v3317 = vmax.f32 %v3285, 0.0
      %v3318 = vmax.f32 %v3286, 0.0
      %v3319 = vmax.f32 %v3287, 0.0
      %v3320 = vmax.f32 %v3288, 0.0
      %v3321 = vmax.f32 %v3289, 0.0
      %v3322 = vmax.f32 %v3290, 0.0
      %v3323 = vmax.f32 %v3291, 0.0
      %v3324 = vmax.f32 %v3292, 0.0
      %v3325 = vmax.f32 %v3293, 0.0
      %v3326 = vmax.f32 %v3294, 0.0
      %v3327 = vmax.f32 %v3295, 0.0
      %v3328 = vmax.f32 %v3296, 0.0
      %v3329 = vmax.f32 %v3297, 0.0
      %v3330 = vmax.f32 %v3298, 0.0
      %v3331 = vmax.f32 %v3299, 0.0
      %v3332 = vmax.f32 %v3300, 0.0
      %v3333 = vpack.c.bf16 %v3301, %v3301
      %v3334 = vpack.c.bf16 %v3302, %v3302
      %v3335 = vpack.c.bf16 %v3303, %v3303
      %v3336 = vpack.c.bf16 %v3304, %v3304
      %v3337 = vpack.c.bf16 %v3305, %v3305
      %v3338 = vpack.c.bf16 %v3306, %v3306
      %v3339 = vpack.c.bf16 %v3307, %v3307
      %v3340 = vpack.c.bf16 %v3308, %v3308
      %v3341 = vpack.c.bf16 %v3309, %v3309
      %v3342 = vpack.c.bf16 %v3310, %v3310
      %v3343 = vpack.c.bf16 %v3311, %v3311
      %v3344 = vpack.c.bf16 %v3312, %v3312
      %v3345 = vpack.c.bf16 %v3313, %v3313
      %v3346 = vpack.c.bf16 %v3314, %v3314
      %v3347 = vpack.c.bf16 %v3315, %v3315
      %v3348 = vpack.c.bf16 %v3316, %v3316
      %v3349 = vpack.c.bf16 %v3317, %v3317
      %v3350 = vpack.c.bf16 %v3318, %v3318
      %v3351 = vpack.c.bf16 %v3319, %v3319
      %v3352 = vpack.c.bf16 %v3320, %v3320
      %v3353 = vpack.c.bf16 %v3321, %v3321
      %v3354 = vpack.c.bf16 %v3322, %v3322
      %v3355 = vpack.c.bf16 %v3323, %v3323
      %v3356 = vpack.c.bf16 %v3324, %v3324
      %v3357 = vpack.c.bf16 %v3325, %v3325
      %v3358 = vpack.c.bf16 %v3326, %v3326
      %v3359 = vpack.c.bf16 %v3327, %v3327
      %v3360 = vpack.c.bf16 %v3328, %v3328
      %v3361 = vpack.c.bf16 %v3329, %v3329
      %v3362 = vpack.c.bf16 %v3330, %v3330
      %v3363 = vpack.c.bf16 %v3331, %v3331
      %v3364 = vpack.c.bf16 %v3332, %v3332
      %3365 = vst [vmem:[%s725] sm:$0xf] %v3333
      %3366 = vst [vmem:[%s725 + $0x4] sm:$0xf] %v3334
      %3367 = vst [vmem:[%s725 + $0x8] sm:$0xf] %v3335
      %3368 = vst [vmem:[%s725 + $0xc] sm:$0xf] %v3336
      %3369 = vst [vmem:[%s725 + $0x10] sm:$0xf] %v3337
      %3370 = vst [vmem:[%s725 + $0x14] sm:$0xf] %v3338
      %3371 = vst [vmem:[%s725 + $0x18] sm:$0xf] %v3339
      %3372 = vst [vmem:[%s725 + $0x1c] sm:$0xf] %v3340
      %3373 = vst [vmem:[%s725 + $0x20] sm:$0xf] %v3341
      %3374 = vst [vmem:[%s725 + $0x24] sm:$0xf] %v3342
      %3375 = vst [vmem:[%s725 + $0x28] sm:$0xf] %v3343
      %3376 = vst [vmem:[%s725 + $0x2c] sm:$0xf] %v3344
      %3377 = vst [vmem:[%s725 + $0x30] sm:$0xf] %v3345
      %3378 = vst [vmem:[%s725 + $0x34] sm:$0xf] %v3346
      %3379 = vst [vmem:[%s725 + $0x38] sm:$0xf] %v3347
      %3380 = vst [vmem:[%s725 + $0x3c] sm:$0xf] %v3348
      %3381 = vst [vmem:[%s725 + $0x40] sm:$0xf] %v3349
      %3382 = vst [vmem:[%s725 + $0x44] sm:$0xf] %v3350
      %3383 = vst [vmem:[%s725 + $0x48] sm:$0xf] %v3351
      %3384 = vst [vmem:[%s725 + $0x4c] sm:$0xf] %v3352
      %3385 = vst [vmem:[%s725 + $0x50] sm:$0xf] %v3353
      %3386 = vst [vmem:[%s725 + $0x54] sm:$0xf] %v3354
      %3387 = vst [vmem:[%s725 + $0x58] sm:$0xf] %v3355
      %3388 = vst [vmem:[%s725 + $0x5c] sm:$0xf] %v3356
      %3389 = vst [vmem:[%s725 + $0x60] sm:$0xf] %v3357
      %3390 = vst [vmem:[%s725 + $0x64] sm:$0xf] %v3358
      %3391 = vst [vmem:[%s725 + $0x68] sm:$0xf] %v3359
      %3392 = vst [vmem:[%s725 + $0x6c] sm:$0xf] %v3360
      %3393 = vst [vmem:[%s725 + $0x70] sm:$0xf] %v3361
      %3394 = vst [vmem:[%s725 + $0x74] sm:$0xf] %v3362
      %3395 = vst [vmem:[%s725 + $0x78] sm:$0xf] %v3363
      %3396 = vst [vmem:[%s725 + $0x7c] sm:$0xf] %v3364
      %s3397 = smul.u32 16, %s26
      %p3398 = scmp.lt.s32.totalorder %s25, 1
      %s3399 = scalar_select %p3398, %s25, 1
      %p3400 = scmp.lt.s32.totalorder %s3397, 15
      %s3401 = scalar_select %p3400, %s3397, 15
      %p3402 = scmp.lt.s32.totalorder %s27, 0
      %s3403 = scalar_select %p3402, %s27, 0
      %s3404 = smul.addr %s3401, 2
      %s3405 = sadd.s32 %s3403, %s3404
      %s3406 = smul.addr %s3399, 32
      %s3407 = sadd.s32 %s3405, %s3406
      %s3408 = smul.addr %s3407, 4
      %s3409 = scalar_lea.vmem %s9, %s3408
      // Predicated region
      $region57: #{up_corrected_forward.2} parent=55 // pred_check
        %p3410 = pneg %p339
      $region58: #{up_corrected_forward.2} parent=55 // pred_check_branch
        %3412 = sbr.rel (%p3410) target = $region60
      $region59: #{up_corrected_forward.2} parent=55 // pred_region
        %s3413 = smul.u32 16, %s26
      $region60: #{up_corrected_forward.2} parent=55 // pred_fallthru
        _
    $region56: #{up_corrected_forward.2} parent=5 // pred_fallthru
      _
    %p3414 = scmp.le.s32.totalorder 2, %s15
    // Predicated region
    $region61: #{up_corrected_forward.2} parent=5 // pred_check
      %p3415 = pneg %p3414
    $region62: #{up_corrected_forward.2} parent=5 // pred_check_branch
      %3417 = sbr.rel (%p3415) target = $region64
    $region63: #{up_corrected_forward.2} parent=5 // pred_region
      %s3418 = ssub.s32 %s15, 2
      // Predicated region
      $region65: #{up_corrected_forward.2} parent=63 // pred_check
        %p3419 = pneg %p345
      $region66: #{up_corrected_forward.2} parent=63 // pred_check_branch
        %3421 = sbr.rel (%p3419) target = $region68
      $region67: #{up_corrected_forward.2} parent=63 // pred_region
        %s3422 = smul.u32 16, %s29
        %p3423 = scmp.lt.s32.totalorder %s28, 1
        %s3424 = scalar_select %p3423, %s28, 1
        %p3425 = scmp.lt.s32.totalorder %s3422, 15
        %s3426 = scalar_select %p3425, %s3422, 15
        %p3427 = scmp.lt.s32.totalorder %s30, 0
        %s3428 = scalar_select %p3427, %s30, 0
        %s3429 = smul.addr %s3426, 2
        %s3430 = sadd.s32 %s3428, %s3429
        %s3431 = smul.addr %s3424, 32
        %s3432 = sadd.s32 %s3430, %s3431
        %s3433 = smul.addr %s3432, 4
        %s3434 = scalar_lea.vmem %s9, %s3433
      $region68: #{up_corrected_forward.2} parent=63 // pred_fallthru
        _
    $region64: #{up_corrected_forward.2} parent=5 // pred_fallthru
      _
  $region6: #{up_corrected_forward.2} parent=0 // loop_footer
    %s19 = sadd.s32 1, %s15
  $region7: #{up_corrected_forward.2} parent=0 // loop_footer_branch
    %14 = sbr.rel target = $region3
  $region8: #{up_corrected_forward.2} parent=0 // loop_exit
    _

</llo_original>
